<compile_context>
chip_gen: v7x
topology: tpu7x:2x2x1
jax: 0.10.0
libtpu: 0.0.40
codegen_flags: <defaults>
</compile_context>

<pallas_src>
import jax
import jax.numpy as jnp
from jax.experimental import pallas as pl
from jax.experimental.pallas import tpu as pltpu


def _round_up(x, m):
    return ((x + m - 1) // m) * m


# ------------------------------ fused kernel --------------------------------


def _make_fused_kernel(S, B, Dh, n_layers, compute_dtype):
    """Builds the fused (emb-folded) wavefront GRU + z_pi + softmax kernel."""

    def kernel(*refs):
        i = 0
        x_ref = refs[i]; i += 1                    # (S*B, L)           f32
        h0_ref = refs[i]; i += 1                   # (n_layers, B, Dh)  f32
        layers = []
        for _ in range(n_layers):                  # w_in, b_in, w_hh_rz, w_hh_n, b_hh_n
            layers.append(tuple(refs[i:i + 5]))
            i += 5
        zw_ref = refs[i]; zb_ref = refs[i + 1]; i += 2
        logits_ref, hn_ref, probs_ref = refs[i], refs[i + 1], refs[i + 2]
        i += 3
        gi0_scr = refs[i]                          # (S*B, 3*Dh) f32 scratch

        f32 = jnp.float32

        # Hoisted layer-0 input projection over the whole sequence (one MXU
        # matmul; emb Linear already folded into w_in0 / b_in0 by the wrapper).
        w_in0_ref, b_in0_ref = layers[0][0], layers[0][1]
        gi0_scr[...] = (
            jnp.dot(x_ref[...].astype(compute_dtype), w_in0_ref[...],
                    preferred_element_type=f32)
            + b_in0_ref[...]
        )

        # Hoist the sublane broadcasts of the per-layer biases out of the
        # unrolled time loop (broadcast_in_dim is not CSE'd by JAX).
        b_in_b = [None] * n_layers
        b_hh_n_b = [None] * n_layers
        for l in range(n_layers):
            _, b_in_ref, _, _, b_hh_n_ref = layers[l]
            if l > 0:
                b_in_b[l] = jnp.broadcast_to(b_in_ref[...], (B, 3 * Dh))
            b_hh_n_b[l] = jnp.broadcast_to(b_hh_n_ref[...], (B, Dh))

        # Hidden-state carries and per-layer per-timestep outputs are held as
        # traced values; each (B, Dh) block is a single vreg at B=8, Dh=128.
        h_state = [h0_ref[l] for l in range(n_layers)]
        outs = [[None] * S for _ in range(n_layers)]

        # Wavefront interleave: layer l at timestep t = w - l only depends on
        # layer l-1 at the same t (previous wavefront step) and on its own
        # previous step, so all active layers inside one wavefront step are
        # independent and the scheduler can overlap their MXU/EUP/VPU work.
        for w in range(S + n_layers - 1):
            for l in range(n_layers):
                t = w - l
                if t < 0 or t >= S:
                    continue
                w_in_ref, _, w_hh_rz_ref, w_hh_n_ref, _ = layers[l]

                if l == 0:
                    gi = gi0_scr[pl.ds(t * B, B), :]          # (B, 3*Dh)
                else:
                    gi = (jnp.dot(outs[l - 1][t], w_in_ref[...],
                                  preferred_element_type=f32)
                          + b_in_b[l])

                h = h_state[l]
                # Split recurrent matmul: r/z columns first so the sigmoids
                # start while the n-gate columns are still in flight.
                gh_rz = jnp.dot(h, w_hh_rz_ref[...],
                                preferred_element_type=f32)   # (B, 2*Dh)
                gh_n = jnp.dot(h, w_hh_n_ref[...],
                               preferred_element_type=f32)    # (B, Dh)

                # PyTorch GRU gate order: r, z, n (b_hh_n stays inside r*(.)).
                r = jax.nn.sigmoid(gi[:, :Dh] + gh_rz[:, :Dh])
                z = jax.nn.sigmoid(gi[:, Dh:2 * Dh] + gh_rz[:, Dh:])
                n = jnp.tanh(gi[:, 2 * Dh:] + r * (gh_n + b_hh_n_b[l]))
                h = n + z * (h - n)                # == (1 - z) * n + z * h
                h_state[l] = h
                outs[l][t] = h

        for l in range(n_layers):
            hn_ref[l] = h_state[l]

        # z_pi linear (lane-dense padded to a multiple of 128) + softmax via a
        # single exp and a reciprocal (no log / second exp pass on the EUP).
        y = jnp.concatenate(outs[n_layers - 1], axis=0)       # (S*B, Dh)
        logits = (
            jnp.dot(y.astype(compute_dtype), zw_ref[...],
                    preferred_element_type=f32)
            + zb_ref[...]
        )
        logits_ref[...] = logits
        m = jnp.max(logits, axis=-1, keepdims=True)
        e = jnp.exp(logits - m)
        probs_ref[...] = e * pl.reciprocal(
            jnp.sum(e, axis=-1, keepdims=True), approx=False)

    return kernel


# --------------------------------- wrapper ----------------------------------


def bcrnn_forward(params, latents, h0, *, compute_dtype=jnp.float32):
    """latents: (S, B, L) f32, h0: (n_layers, B, 2*hiddens) f32.

    Returns (logits (S*B, n_bins), hn (n_layers, B, 2*hiddens), probs).
    compute_dtype=jnp.bfloat16 only affects the hoisted layer-0 input
    projection and the z_pi matmul (MXU throughput on v6e/v7x); the serial
    recurrence stays float32 so no per-step cast sits on the critical path
    (also the right choice on v5e).
    """
    S, B, L = latents.shape
    H = params["hiddens"]
    Dh = 2 * H
    n_layers = params["n_layers"]
    n_bins = params["zpi_w"].shape[1]
    NBP = _round_up(max(n_bins, 128), 128)       # lane-dense padded out width
    f32 = jnp.float32
    cdt = compute_dtype

    x2d = latents.reshape(S * B, L).astype(f32)

    inputs = [x2d, h0.astype(f32)]
    for l in range(n_layers):
        w_ih = params["gru_wih"][l]
        b_ih = params["gru_bih"][l]
        w_hh = params["gru_whh"][l]
        b_hh = params["gru_bhh"][l]
        if l == 0:
            # Fold the emb Linear into layer 0's (hoisted) input projection.
            w_in = (params["emb_w"] @ w_ih).astype(cdt)
            b_in = params["emb_b"] @ w_ih + b_ih
        else:
            # Per-step projection inside the wavefront stays f32 (no cast of
            # the previous layer's output on the serial chain).
            w_in = w_ih.astype(f32)
            b_in = b_ih
        # Pre-add the r/z parts of b_hh (the n-gate part must stay inside
        # r * (.) per PyTorch GRU semantics).
        b_in = (b_in + jnp.concatenate(
            [b_hh[:, :2 * Dh], jnp.zeros((1, Dh), f32)], axis=1)).astype(f32)
        inputs += [
            w_in, b_in,
            w_hh[:, :2 * Dh].astype(f32),        # recurrent r/z weights
            w_hh[:, 2 * Dh:].astype(f32),        # recurrent n-gate weights
            b_hh[:, 2 * Dh:].astype(f32),        # n-gate hidden bias
        ]

    # Lane-padded z_pi weights; padded bias columns get -1e9 so the in-kernel
    # softmax ignores them; the wrapper slices back to n_bins.
    zw = jnp.zeros((Dh, NBP), f32).at[:, :n_bins].set(params["zpi_w"]).astype(cdt)
    zb = jnp.full((1, NBP), -1e9, f32).at[:, :n_bins].set(params["zpi_b"])
    inputs += [zw, zb]

    kernel = _make_fused_kernel(S, B, Dh, n_layers, cdt)

    logits_p, hn, probs_p = pl.pallas_call(
        kernel,
        out_shape=(
            jax.ShapeDtypeStruct((S * B, NBP), f32),       # lane-dense logits
            jax.ShapeDtypeStruct((n_layers, B, Dh), f32),  # final hidden
            jax.ShapeDtypeStruct((S * B, NBP), f32),       # lane-dense probs
        ),
        scratch_shapes=[
            pltpu.VMEM((S * B, 3 * Dh), f32),   # hoisted layer-0 gi slab
        ],
    )(*inputs)

    return logits_p[:, :n_bins], hn, probs_p[:, :n_bins]


# ------------------------- parameters / reference ---------------------------


def init_params(key, latents, hiddens, actions, n_layers, n_bins):
    """Deterministic init mimicking PyTorch default uniform(-1/sqrt(fan), +)."""
    del actions  # self.mlp (and self.dropout) are unused in forward()
    Dh = 2 * hiddens

    def u(k, shape, fan):
        bound = 1.0 / jnp.sqrt(jnp.float32(fan))
        return jax.random.uniform(k, shape, jnp.float32, -bound, bound)

    keys = jax.random.split(key, 4 + 4 * n_layers)
    params = {
        "hiddens": hiddens,
        "n_layers": n_layers,
        "emb_w": u(keys[0], (latents, hiddens), latents),
        "emb_b": u(keys[1], (1, hiddens), latents),
        "zpi_w": u(keys[2], (Dh, n_bins), Dh),
        "zpi_b": u(keys[3], (1, n_bins), Dh),
        "gru_wih": [], "gru_whh": [], "gru_bih": [], "gru_bhh": [],
    }
    for l in range(n_layers):
        din = hiddens if l == 0 else Dh
        k0, k1, k2, k3 = keys[4 + 4 * l: 8 + 4 * l]
        params["gru_wih"].append(u(k0, (din, 3 * Dh), Dh))
        params["gru_whh"].append(u(k1, (Dh, 3 * Dh), Dh))
        params["gru_bih"].append(u(k2, (1, 3 * Dh), Dh))
        params["gru_bhh"].append(u(k3, (1, 3 * Dh), Dh))
    return params


def ref_forward(params, latents, h0):
    """Pure-JAX reference mirroring the PyTorch module exactly (no folding)."""
    S, B, L = latents.shape
    H = params["hiddens"]
    Dh = 2 * H
    x = latents @ params["emb_w"] + params["emb_b"][0]
    hs = []
    inp = x
    for l in range(params["n_layers"]):
        h = h0[l]
        outs = []
        for t in range(S):
            gi = inp[t] @ params["gru_wih"][l] + params["gru_bih"][l][0]
            gh = h @ params["gru_whh"][l] + params["gru_bhh"][l][0]
            r = jax.nn.sigmoid(gi[:, :Dh] + gh[:, :Dh])
            z = jax.nn.sigmoid(gi[:, Dh:2 * Dh] + gh[:, Dh:2 * Dh])
            n = jnp.tanh(gi[:, 2 * Dh:] + r * gh[:, 2 * Dh:])
            h = (1.0 - z) * n + z * h
            outs.append(h)
        inp = jnp.stack(outs, axis=0)
        hs.append(h)
    hn = jnp.stack(hs, axis=0)
    logits = inp.reshape(S * B, Dh) @ params["zpi_w"] + params["zpi_b"][0]
    probs = jax.nn.softmax(logits, axis=-1)
    return logits, hn, probs


# ----------------------------------- main -----------------------------------


if __name__ == "__main__":
    latents_dim = 16
    hiddens = 64            # GRU hidden = 2 * hiddens = 128 (lane-aligned)
    actions = 4             # unused in forward (self.mlp is dead code)
    n_layers = 2
    n_bins = 8
    seq = 6
    batch = 8

    key = jax.random.PRNGKey(0)
    kp, kx, kh = jax.random.split(key, 3)

    params = init_params(kp, latents_dim, hiddens, actions, n_layers, n_bins)
    latents_in = jax.random.normal(kx, (seq, batch, latents_dim), jnp.float32)
    h0 = jax.random.normal(kh, (n_layers, batch, 2 * hiddens), jnp.float32)

    # f32 path: matches the PyTorch math up to benign fold re-association.
    logits, hn, probs = bcrnn_forward(params, latents_in, h0)
    jax.block_until_ready((logits, hn, probs))

    r_logits, r_hn, r_probs = ref_forward(params, latents_in, h0)
    assert logits.shape == (seq * batch, n_bins)
    assert hn.shape == (n_layers, batch, 2 * hiddens)
    assert probs.shape == (seq * batch, n_bins)
    assert jnp.allclose(logits, r_logits, rtol=1e-4, atol=1e-4)
    assert jnp.allclose(hn, r_hn, rtol=1e-4, atol=1e-4)
    assert jnp.allclose(probs, r_probs, rtol=1e-4, atol=1e-4)

    # bf16-operand path (hoisted gi / z_pi matmuls only); looser tolerance.
    logits_bf, hn_bf, probs_bf = bcrnn_forward(
        params, latents_in, h0, compute_dtype=jnp.bfloat16)
    jax.block_until_ready((logits_bf, hn_bf, probs_bf))
    assert jnp.allclose(logits_bf, r_logits, rtol=5e-2, atol=5e-2)
    assert jnp.allclose(hn_bf, r_hn, rtol=5e-2, atol=5e-2)
    assert jnp.allclose(probs_bf, r_probs, rtol=5e-2, atol=5e-2)

    print("KERNEL_OK")
</pallas_src>

<mosaic_0001>
module attributes {stable_mosaic.version = 11 : i64} {
  func.func @kernel(%arg0: memref<48x16xf32, #tpu.memory_space<vmem>>, %arg1: memref<2x8x128xf32, #tpu.memory_space<vmem>>, %arg2: memref<16x384xf32, #tpu.memory_space<vmem>>, %arg3: memref<1x384xf32, #tpu.memory_space<vmem>>, %arg4: memref<128x256xf32, #tpu.memory_space<vmem>>, %arg5: memref<128x128xf32, #tpu.memory_space<vmem>>, %arg6: memref<1x128xf32, #tpu.memory_space<vmem>>, %arg7: memref<128x384xf32, #tpu.memory_space<vmem>>, %arg8: memref<1x384xf32, #tpu.memory_space<vmem>>, %arg9: memref<128x256xf32, #tpu.memory_space<vmem>>, %arg10: memref<128x128xf32, #tpu.memory_space<vmem>>, %arg11: memref<1x128xf32, #tpu.memory_space<vmem>>, %arg12: memref<128x128xf32, #tpu.memory_space<vmem>>, %arg13: memref<1x128xf32, #tpu.memory_space<vmem>>, %arg14: memref<48x128xf32, #tpu.memory_space<vmem>>, %arg15: memref<2x8x128xf32, #tpu.memory_space<vmem>>, %arg16: memref<48x128xf32, #tpu.memory_space<vmem>>, %arg17: memref<48x384xf32, #tpu.memory_space<vmem>>) attributes {dimension_semantics = [], scalar_prefetch = 0 : i64, scratch_operands = 1 : i64, tpu.core_type = #tpu.core_type<tc>} {
    %c0 = arith.constant 0 : index
    %c0_0 = arith.constant 0 : index
    %0 = vector.load %arg0[%c0, %c0_0] : memref<48x16xf32, #tpu.memory_space<vmem>>, vector<48x16xf32>
    %c0_1 = arith.constant 0 : index
    %c0_2 = arith.constant 0 : index
    %1 = vector.load %arg2[%c0_1, %c0_2] : memref<16x384xf32, #tpu.memory_space<vmem>>, vector<16x384xf32>
    %cst = arith.constant dense<0.000000e+00> : vector<48x384xf32>
    %2 = tpu.matmul %0, %1, %cst {dimension_numbers = #tpu.dot_dimension_numbers<[1], [0], [0], [1], [0, 0, 1, 1], [], []>} : vector<48x16xf32>, vector<16x384xf32>, vector<48x384xf32> -> vector<48x384xf32>
    %c0_3 = arith.constant 0 : index
    %c0_4 = arith.constant 0 : index
    %3 = vector.load %arg3[%c0_3, %c0_4] : memref<1x384xf32, #tpu.memory_space<vmem>>, vector<1x384xf32>
    %4 = vector.broadcast %3 : vector<1x384xf32> to vector<48x384xf32>
    %5 = arith.addf %2, %4 : vector<48x384xf32>
    %c0_5 = arith.constant 0 : index
    %c0_6 = arith.constant 0 : index
    %6 = vector.load %arg17[%c0_5, %c0_6] : memref<48x384xf32, #tpu.memory_space<vmem>>, vector<48x384xf32>
    tpu.vector_store %arg17[%c0_5, %c0_6], %5 {strides = array<i32>} : memref<48x384xf32, #tpu.memory_space<vmem>>, vector<48x384xf32>,
    %c0_7 = arith.constant 0 : index
    %c0_8 = arith.constant 0 : index
    %7 = vector.load %arg6[%c0_7, %c0_8] : memref<1x128xf32, #tpu.memory_space<vmem>>, vector<1x128xf32>
    %8 = vector.shape_cast %7 : vector<1x128xf32> to vector<1x128xf32>
    %9 = vector.broadcast %8 : vector<1x128xf32> to vector<8x128xf32>
    %c0_9 = arith.constant 0 : index
    %c0_10 = arith.constant 0 : index
    %10 = vector.load %arg8[%c0_9, %c0_10] : memref<1x384xf32, #tpu.memory_space<vmem>>, vector<1x384xf32>
    %11 = vector.shape_cast %10 : vector<1x384xf32> to vector<1x384xf32>
    %12 = vector.broadcast %11 : vector<1x384xf32> to vector<8x384xf32>
    %c0_11 = arith.constant 0 : index
    %c0_12 = arith.constant 0 : index
    %13 = vector.load %arg11[%c0_11, %c0_12] : memref<1x128xf32, #tpu.memory_space<vmem>>, vector<1x128xf32>
    %14 = vector.shape_cast %13 : vector<1x128xf32> to vector<1x128xf32>
    %15 = vector.broadcast %14 : vector<1x128xf32> to vector<8x128xf32>
    %c0_13 = arith.constant 0 : index
    %c0_14 = arith.constant 0 : index
    %c0_15 = arith.constant 0 : index
    %16 = vector.load %arg1[%c0_13, %c0_14, %c0_15] : memref<2x8x128xf32, #tpu.memory_space<vmem>>, vector<1x8x128xf32>
    %17 = vector.shape_cast %16 : vector<1x8x128xf32> to vector<8x128xf32>
    %c1 = arith.constant 1 : index
    %c0_16 = arith.constant 0 : index
    %c0_17 = arith.constant 0 : index
    %18 = vector.load %arg1[%c1, %c0_16, %c0_17] : memref<2x8x128xf32, #tpu.memory_space<vmem>>, vector<1x8x128xf32>
    %19 = vector.shape_cast %18 : vector<1x8x128xf32> to vector<8x128xf32>
    %c0_18 = arith.constant 0 : index
    %c0_19 = arith.constant 0 : index
    %20 = vector.load %arg17[%c0_18, %c0_19] : memref<48x384xf32, #tpu.memory_space<vmem>>, vector<8x384xf32>
    %c0_20 = arith.constant 0 : index
    %c0_21 = arith.constant 0 : index
    %21 = vector.load %arg4[%c0_20, %c0_21] : memref<128x256xf32, #tpu.memory_space<vmem>>, vector<128x256xf32>
    %cst_22 = arith.constant dense<0.000000e+00> : vector<8x256xf32>
    %22 = tpu.matmul %17, %21, %cst_22 {dimension_numbers = #tpu.dot_dimension_numbers<[1], [0], [0], [1], [0, 0, 1, 1], [], []>} : vector<8x128xf32>, vector<128x256xf32>, vector<8x256xf32> -> vector<8x256xf32>
    %c0_23 = arith.constant 0 : index
    %c0_24 = arith.constant 0 : index
    %23 = vector.load %arg5[%c0_23, %c0_24] : memref<128x128xf32, #tpu.memory_space<vmem>>, vector<128x128xf32>
    %cst_25 = arith.constant dense<0.000000e+00> : vector<8x128xf32>
    %24 = tpu.matmul %17, %23, %cst_25 {dimension_numbers = #tpu.dot_dimension_numbers<[1], [0], [0], [1], [0, 0, 1, 1], [], []>} : vector<8x128xf32>, vector<128x128xf32>, vector<8x128xf32> -> vector<8x128xf32>
    %25 = vector.extract_strided_slice %20 {offsets = [0, 0], sizes = [8, 128], strides = [1, 1]} : vector<8x384xf32> to vector<8x128xf32>
    %26 = vector.extract_strided_slice %22 {offsets = [0, 0], sizes = [8, 128], strides = [1, 1]} : vector<8x256xf32> to vector<8x128xf32>
    %27 = arith.addf %25, %26 : vector<8x128xf32>
    %28 = arith.negf %27 : vector<8x128xf32>
    %29 = math.exp %28 : vector<8x128xf32>
    %cst_26 = arith.constant 1.000000e+00 : f32
    %30 = vector.broadcast %cst_26 : f32 to vector<8x128xf32>
    %31 = arith.addf %30, %29 : vector<8x128xf32>
    %32 = arith.divf %30, %31 : vector<8x128xf32>
    %33 = vector.extract_strided_slice %20 {offsets = [0, 128], sizes = [8, 128], strides = [1, 1]} : vector<8x384xf32> to vector<8x128xf32>
    %34 = vector.extract_strided_slice %22 {offsets = [0, 128], sizes = [8, 128], strides = [1, 1]} : vector<8x256xf32> to vector<8x128xf32>
    %35 = arith.addf %33, %34 : vector<8x128xf32>
    %36 = arith.negf %35 : vector<8x128xf32>
    %37 = math.exp %36 : vector<8x128xf32>
    %cst_27 = arith.constant 1.000000e+00 : f32
    %38 = vector.broadcast %cst_27 : f32 to vector<8x128xf32>
    %39 = arith.addf %38, %37 : vector<8x128xf32>
    %40 = arith.divf %38, %39 : vector<8x128xf32>
    %41 = vector.extract_strided_slice %20 {offsets = [0, 256], sizes = [8, 128], strides = [1, 1]} : vector<8x384xf32> to vector<8x128xf32>
    %42 = arith.addf %24, %9 : vector<8x128xf32>
    %43 = arith.mulf %32, %42 : vector<8x128xf32>
    %44 = arith.addf %41, %43 : vector<8x128xf32>
    %45 = math.tanh %44 : vector<8x128xf32>
    %46 = arith.subf %17, %45 : vector<8x128xf32>
    %47 = arith.mulf %40, %46 : vector<8x128xf32>
    %48 = arith.addf %45, %47 : vector<8x128xf32>
    %c8 = arith.constant 8 : index
    %c0_28 = arith.constant 0 : index
    %49 = vector.load %arg17[%c8, %c0_28] : memref<48x384xf32, #tpu.memory_space<vmem>>, vector<8x384xf32>
    %c0_29 = arith.constant 0 : index
    %c0_30 = arith.constant 0 : index
    %50 = vector.load %arg4[%c0_29, %c0_30] : memref<128x256xf32, #tpu.memory_space<vmem>>, vector<128x256xf32>
    %cst_31 = arith.constant dense<0.000000e+00> : vector<8x256xf32>
    %51 = tpu.matmul %48, %50, %cst_31 {dimension_numbers = #tpu.dot_dimension_numbers<[1], [0], [0], [1], [0, 0, 1, 1], [], []>} : vector<8x128xf32>, vector<128x256xf32>, vector<8x256xf32> -> vector<8x256xf32>
    %c0_32 = arith.constant 0 : index
    %c0_33 = arith.constant 0 : index
    %52 = vector.load %arg5[%c0_32, %c0_33] : memref<128x128xf32, #tpu.memory_space<vmem>>, vector<128x128xf32>
    %cst_34 = arith.constant dense<0.000000e+00> : vector<8x128xf32>
    %53 = tpu.matmul %48, %52, %cst_34 {dimension_numbers = #tpu.dot_dimension_numbers<[1], [0], [0], [1], [0, 0, 1, 1], [], []>} : vector<8x128xf32>, vector<128x128xf32>, vector<8x128xf32> -> vector<8x128xf32>
    %54 = vector.extract_strided_slice %49 {offsets = [0, 0], sizes = [8, 128], strides = [1, 1]} : vector<8x384xf32> to vector<8x128xf32>
    %55 = vector.extract_strided_slice %51 {offsets = [0, 0], sizes = [8, 128], strides = [1, 1]} : vector<8x256xf32> to vector<8x128xf32>
    %56 = arith.addf %54, %55 : vector<8x128xf32>
    %57 = arith.negf %56 : vector<8x128xf32>
    %58 = math.exp %57 : vector<8x128xf32>
    %cst_35 = arith.constant 1.000000e+00 : f32
    %59 = vector.broadcast %cst_35 : f32 to vector<8x128xf32>
    %60 = arith.addf %59, %58 : vector<8x128xf32>
    %61 = arith.divf %59, %60 : vector<8x128xf32>
    %62 = vector.extract_strided_slice %49 {offsets = [0, 128], sizes = [8, 128], strides = [1, 1]} : vector<8x384xf32> to vector<8x128xf32>
    %63 = vector.extract_strided_slice %51 {offsets = [0, 128], sizes = [8, 128], strides = [1, 1]} : vector<8x256xf32> to vector<8x128xf32>
    %64 = arith.addf %62, %63 : vector<8x128xf32>
    %65 = arith.negf %64 : vector<8x128xf32>
    %66 = math.exp %65 : vector<8x128xf32>
    %cst_36 = arith.constant 1.000000e+00 : f32
    %67 = vector.broadcast %cst_36 : f32 to vector<8x128xf32>
    %68 = arith.addf %67, %66 : vector<8x128xf32>
    %69 = arith.divf %67, %68 : vector<8x128xf32>
    %70 = vector.extract_strided_slice %49 {offsets = [0, 256], sizes = [8, 128], strides = [1, 1]} : vector<8x384xf32> to vector<8x128xf32>
    %71 = arith.addf %53, %9 : vector<8x128xf32>
    %72 = arith.mulf %61, %71 : vector<8x128xf32>
    %73 = arith.addf %70, %72 : vector<8x128xf32>
    %74 = math.tanh %73 : vector<8x128xf32>
    %75 = arith.subf %48, %74 : vector<8x128xf32>
    %76 = arith.mulf %69, %75 : vector<8x128xf32>
    %77 = arith.addf %74, %76 : vector<8x128xf32>
    %c0_37 = arith.constant 0 : index
    %c0_38 = arith.constant 0 : index
    %78 = vector.load %arg7[%c0_37, %c0_38] : memref<128x384xf32, #tpu.memory_space<vmem>>, vector<128x384xf32>
    %cst_39 = arith.constant dense<0.000000e+00> : vector<8x384xf32>
    %79 = tpu.matmul %48, %78, %cst_39 {dimension_numbers = #tpu.dot_dimension_numbers<[1], [0], [0], [1], [0, 0, 1, 1], [], []>} : vector<8x128xf32>, vector<128x384xf32>, vector<8x384xf32> -> vector<8x384xf32>
    %80 = arith.addf %79, %12 : vector<8x384xf32>
    %c0_40 = arith.constant 0 : index
    %c0_41 = arith.constant 0 : index
    %81 = vector.load %arg9[%c0_40, %c0_41] : memref<128x256xf32, #tpu.memory_space<vmem>>, vector<128x256xf32>
    %cst_42 = arith.constant dense<0.000000e+00> : vector<8x256xf32>
    %82 = tpu.matmul %19, %81, %cst_42 {dimension_numbers = #tpu.dot_dimension_numbers<[1], [0], [0], [1], [0, 0, 1, 1], [], []>} : vector<8x128xf32>, vector<128x256xf32>, vector<8x256xf32> -> vector<8x256xf32>
    %c0_43 = arith.constant 0 : index
    %c0_44 = arith.constant 0 : index
    %83 = vector.load %arg10[%c0_43, %c0_44] : memref<128x128xf32, #tpu.memory_space<vmem>>, vector<128x128xf32>
    %cst_45 = arith.constant dense<0.000000e+00> : vector<8x128xf32>
    %84 = tpu.matmul %19, %83, %cst_45 {dimension_numbers = #tpu.dot_dimension_numbers<[1], [0], [0], [1], [0, 0, 1, 1], [], []>} : vector<8x128xf32>, vector<128x128xf32>, vector<8x128xf32> -> vector<8x128xf32>
    %85 = vector.extract_strided_slice %80 {offsets = [0, 0], sizes = [8, 128], strides = [1, 1]} : vector<8x384xf32> to vector<8x128xf32>
    %86 = vector.extract_strided_slice %82 {offsets = [0, 0], sizes = [8, 128], strides = [1, 1]} : vector<8x256xf32> to vector<8x128xf32>
    %87 = arith.addf %85, %86 : vector<8x128xf32>
    %88 = arith.negf %87 : vector<8x128xf32>
    %89 = math.exp %88 : vector<8x128xf32>
    %cst_46 = arith.constant 1.000000e+00 : f32
    %90 = vector.broadcast %cst_46 : f32 to vector<8x128xf32>
    %91 = arith.addf %90, %89 : vector<8x128xf32>
    %92 = arith.divf %90, %91 : vector<8x128xf32>
    %93 = vector.extract_strided_slice %80 {offsets = [0, 128], sizes = [8, 128], strides = [1, 1]} : vector<8x384xf32> to vector<8x128xf32>
    %94 = vector.extract_strided_slice %82 {offsets = [0, 128], sizes = [8, 128], strides = [1, 1]} : vector<8x256xf32> to vector<8x128xf32>
    %95 = arith.addf %93, %94 : vector<8x128xf32>
    %96 = arith.negf %95 : vector<8x128xf32>
    %97 = math.exp %96 : vector<8x128xf32>
    %cst_47 = arith.constant 1.000000e+00 : f32
    %98 = vector.broadcast %cst_47 : f32 to vector<8x128xf32>
    %99 = arith.addf %98, %97 : vector<8x128xf32>
    %100 = arith.divf %98, %99 : vector<8x128xf32>
    %101 = vector.extract_strided_slice %80 {offsets = [0, 256], sizes = [8, 128], strides = [1, 1]} : vector<8x384xf32> to vector<8x128xf32>
    %102 = arith.addf %84, %15 : vector<8x128xf32>
    %103 = arith.mulf %92, %102 : vector<8x128xf32>
    %104 = arith.addf %101, %103 : vector<8x128xf32>
    %105 = math.tanh %104 : vector<8x128xf32>
    %106 = arith.subf %19, %105 : vector<8x128xf32>
    %107 = arith.mulf %100, %106 : vector<8x128xf32>
    %108 = arith.addf %105, %107 : vector<8x128xf32>
    %c16 = arith.constant 16 : index
    %c0_48 = arith.constant 0 : index
    %109 = vector.load %arg17[%c16, %c0_48] : memref<48x384xf32, #tpu.memory_space<vmem>>, vector<8x384xf32>
    %c0_49 = arith.constant 0 : index
    %c0_50 = arith.constant 0 : index
    %110 = vector.load %arg4[%c0_49, %c0_50] : memref<128x256xf32, #tpu.memory_space<vmem>>, vector<128x256xf32>
    %cst_51 = arith.constant dense<0.000000e+00> : vector<8x256xf32>
    %111 = tpu.matmul %77, %110, %cst_51 {dimension_numbers = #tpu.dot_dimension_numbers<[1], [0], [0], [1], [0, 0, 1, 1], [], []>} : vector<8x128xf32>, vector<128x256xf32>, vector<8x256xf32> -> vector<8x256xf32>
    %c0_52 = arith.constant 0 : index
    %c0_53 = arith.constant 0 : index
    %112 = vector.load %arg5[%c0_52, %c0_53] : memref<128x128xf32, #tpu.memory_space<vmem>>, vector<128x128xf32>
    %cst_54 = arith.constant dense<0.000000e+00> : vector<8x128xf32>
    %113 = tpu.matmul %77, %112, %cst_54 {dimension_numbers = #tpu.dot_dimension_numbers<[1], [0], [0], [1], [0, 0, 1, 1], [], []>} : vector<8x128xf32>, vector<128x128xf32>, vector<8x128xf32> -> vector<8x128xf32>
    %114 = vector.extract_strided_slice %109 {offsets = [0, 0], sizes = [8, 128], strides = [1, 1]} : vector<8x384xf32> to vector<8x128xf32>
    %115 = vector.extract_strided_slice %111 {offsets = [0, 0], sizes = [8, 128], strides = [1, 1]} : vector<8x256xf32> to vector<8x128xf32>
    %116 = arith.addf %114, %115 : vector<8x128xf32>
    %117 = arith.negf %116 : vector<8x128xf32>
    %118 = math.exp %117 : vector<8x128xf32>
    %cst_55 = arith.constant 1.000000e+00 : f32
    %119 = vector.broadcast %cst_55 : f32 to vector<8x128xf32>
    %120 = arith.addf %119, %118 : vector<8x128xf32>
    %121 = arith.divf %119, %120 : vector<8x128xf32>
    %122 = vector.extract_strided_slice %109 {offsets = [0, 128], sizes = [8, 128], strides = [1, 1]} : vector<8x384xf32> to vector<8x128xf32>
    %123 = vector.extract_strided_slice %111 {offsets = [0, 128], sizes = [8, 128], strides = [1, 1]} : vector<8x256xf32> to vector<8x128xf32>
    %124 = arith.addf %122, %123 : vector<8x128xf32>
    %125 = arith.negf %124 : vector<8x128xf32>
    %126 = math.exp %125 : vector<8x128xf32>
    %cst_56 = arith.constant 1.000000e+00 : f32
    %127 = vector.broadcast %cst_56 : f32 to vector<8x128xf32>
    %128 = arith.addf %127, %126 : vector<8x128xf32>
    %129 = arith.divf %127, %128 : vector<8x128xf32>
    %130 = vector.extract_strided_slice %109 {offsets = [0, 256], sizes = [8, 128], strides = [1, 1]} : vector<8x384xf32> to vector<8x128xf32>
    %131 = arith.addf %113, %9 : vector<8x128xf32>
    %132 = arith.mulf %121, %131 : vector<8x128xf32>
    %133 = arith.addf %130, %132 : vector<8x128xf32>
    %134 = math.tanh %133 : vector<8x128xf32>
    %135 = arith.subf %77, %134 : vector<8x128xf32>
    %136 = arith.mulf %129, %135 : vector<8x128xf32>
    %137 = arith.addf %134, %136 : vector<8x128xf32>
    %c0_57 = arith.constant 0 : index
    %c0_58 = arith.constant 0 : index
    %138 = vector.load %arg7[%c0_57, %c0_58] : memref<128x384xf32, #tpu.memory_space<vmem>>, vector<128x384xf32>
    %cst_59 = arith.constant dense<0.000000e+00> : vector<8x384xf32>
    %139 = tpu.matmul %77, %138, %cst_59 {dimension_numbers = #tpu.dot_dimension_numbers<[1], [0], [0], [1], [0, 0, 1, 1], [], []>} : vector<8x128xf32>, vector<128x384xf32>, vector<8x384xf32> -> vector<8x384xf32>
    %140 = arith.addf %139, %12 : vector<8x384xf32>
    %c0_60 = arith.constant 0 : index
    %c0_61 = arith.constant 0 : index
    %141 = vector.load %arg9[%c0_60, %c0_61] : memref<128x256xf32, #tpu.memory_space<vmem>>, vector<128x256xf32>
    %cst_62 = arith.constant dense<0.000000e+00> : vector<8x256xf32>
    %142 = tpu.matmul %108, %141, %cst_62 {dimension_numbers = #tpu.dot_dimension_numbers<[1], [0], [0], [1], [0, 0, 1, 1], [], []>} : vector<8x128xf32>, vector<128x256xf32>, vector<8x256xf32> -> vector<8x256xf32>
    %c0_63 = arith.constant 0 : index
    %c0_64 = arith.constant 0 : index
    %143 = vector.load %arg10[%c0_63, %c0_64] : memref<128x128xf32, #tpu.memory_space<vmem>>, vector<128x128xf32>
    %cst_65 = arith.constant dense<0.000000e+00> : vector<8x128xf32>
    %144 = tpu.matmul %108, %143, %cst_65 {dimension_numbers = #tpu.dot_dimension_numbers<[1], [0], [0], [1], [0, 0, 1, 1], [], []>} : vector<8x128xf32>, vector<128x128xf32>, vector<8x128xf32> -> vector<8x128xf32>
    %145 = vector.extract_strided_slice %140 {offsets = [0, 0], sizes = [8, 128], strides = [1, 1]} : vector<8x384xf32> to vector<8x128xf32>
    %146 = vector.extract_strided_slice %142 {offsets = [0, 0], sizes = [8, 128], strides = [1, 1]} : vector<8x256xf32> to vector<8x128xf32>
    %147 = arith.addf %145, %146 : vector<8x128xf32>
    %148 = arith.negf %147 : vector<8x128xf32>
    %149 = math.exp %148 : vector<8x128xf32>
    %cst_66 = arith.constant 1.000000e+00 : f32
    %150 = vector.broadcast %cst_66 : f32 to vector<8x128xf32>
    %151 = arith.addf %150, %149 : vector<8x128xf32>
    %152 = arith.divf %150, %151 : vector<8x128xf32>
    %153 = vector.extract_strided_slice %140 {offsets = [0, 128], sizes = [8, 128], strides = [1, 1]} : vector<8x384xf32> to vector<8x128xf32>
    %154 = vector.extract_strided_slice %142 {offsets = [0, 128], sizes = [8, 128], strides = [1, 1]} : vector<8x256xf32> to vector<8x128xf32>
    %155 = arith.addf %153, %154 : vector<8x128xf32>
    %156 = arith.negf %155 : vector<8x128xf32>
    %157 = math.exp %156 : vector<8x128xf32>
    %cst_67 = arith.constant 1.000000e+00 : f32
    %158 = vector.broadcast %cst_67 : f32 to vector<8x128xf32>
    %159 = arith.addf %158, %157 : vector<8x128xf32>
    %160 = arith.divf %158, %159 : vector<8x128xf32>
    %161 = vector.extract_strided_slice %140 {offsets = [0, 256], sizes = [8, 128], strides = [1, 1]} : vector<8x384xf32> to vector<8x128xf32>
    %162 = arith.addf %144, %15 : vector<8x128xf32>
    %163 = arith.mulf %152, %162 : vector<8x128xf32>
    %164 = arith.addf %161, %163 : vector<8x128xf32>
    %165 = math.tanh %164 : vector<8x128xf32>
    %166 = arith.subf %108, %165 : vector<8x128xf32>
    %167 = arith.mulf %160, %166 : vector<8x128xf32>
    %168 = arith.addf %165, %167 : vector<8x128xf32>
    %c24 = arith.constant 24 : index
    %c0_68 = arith.constant 0 : index
    %169 = vector.load %arg17[%c24, %c0_68] : memref<48x384xf32, #tpu.memory_space<vmem>>, vector<8x384xf32>
    %c0_69 = arith.constant 0 : index
    %c0_70 = arith.constant 0 : index
    %170 = vector.load %arg4[%c0_69, %c0_70] : memref<128x256xf32, #tpu.memory_space<vmem>>, vector<128x256xf32>
    %cst_71 = arith.constant dense<0.000000e+00> : vector<8x256xf32>
    %171 = tpu.matmul %137, %170, %cst_71 {dimension_numbers = #tpu.dot_dimension_numbers<[1], [0], [0], [1], [0, 0, 1, 1], [], []>} : vector<8x128xf32>, vector<128x256xf32>, vector<8x256xf32> -> vector<8x256xf32>
    %c0_72 = arith.constant 0 : index
    %c0_73 = arith.constant 0 : index
    %172 = vector.load %arg5[%c0_72, %c0_73] : memref<128x128xf32, #tpu.memory_space<vmem>>, vector<128x128xf32>
    %cst_74 = arith.constant dense<0.000000e+00> : vector<8x128xf32>
    %173 = tpu.matmul %137, %172, %cst_74 {dimension_numbers = #tpu.dot_dimension_numbers<[1], [0], [0], [1], [0, 0, 1, 1], [], []>} : vector<8x128xf32>, vector<128x128xf32>, vector<8x128xf32> -> vector<8x128xf32>
    %174 = vector.extract_strided_slice %169 {offsets = [0, 0], sizes = [8, 128], strides = [1, 1]} : vector<8x384xf32> to vector<8x128xf32>
    %175 = vector.extract_strided_slice %171 {offsets = [0, 0], sizes = [8, 128], strides = [1, 1]} : vector<8x256xf32> to vector<8x128xf32>
    %176 = arith.addf %174, %175 : vector<8x128xf32>
    %177 = arith.negf %176 : vector<8x128xf32>
    %178 = math.exp %177 : vector<8x128xf32>
    %cst_75 = arith.constant 1.000000e+00 : f32
    %179 = vector.broadcast %cst_75 : f32 to vector<8x128xf32>
    %180 = arith.addf %179, %178 : vector<8x128xf32>
    %181 = arith.divf %179, %180 : vector<8x128xf32>
    %182 = vector.extract_strided_slice %169 {offsets = [0, 128], sizes = [8, 128], strides = [1, 1]} : vector<8x384xf32> to vector<8x128xf32>
    %183 = vector.extract_strided_slice %171 {offsets = [0, 128], sizes = [8, 128], strides = [1, 1]} : vector<8x256xf32> to vector<8x128xf32>
    %184 = arith.addf %182, %183 : vector<8x128xf32>
    %185 = arith.negf %184 : vector<8x128xf32>
    %186 = math.exp %185 : vector<8x128xf32>
    %cst_76 = arith.constant 1.000000e+00 : f32
    %187 = vector.broadcast %cst_76 : f32 to vector<8x128xf32>
    %188 = arith.addf %187, %186 : vector<8x128xf32>
    %189 = arith.divf %187, %188 : vector<8x128xf32>
    %190 = vector.extract_strided_slice %169 {offsets = [0, 256], sizes = [8, 128], strides = [1, 1]} : vector<8x384xf32> to vector<8x128xf32>
    %191 = arith.addf %173, %9 : vector<8x128xf32>
    %192 = arith.mulf %181, %191 : vector<8x128xf32>
    %193 = arith.addf %190, %192 : vector<8x128xf32>
    %194 = math.tanh %193 : vector<8x128xf32>
    %195 = arith.subf %137, %194 : vector<8x128xf32>
    %196 = arith.mulf %189, %195 : vector<8x128xf32>
    %197 = arith.addf %194, %196 : vector<8x128xf32>
    %c0_77 = arith.constant 0 : index
    %c0_78 = arith.constant 0 : index
    %198 = vector.load %arg7[%c0_77, %c0_78] : memref<128x384xf32, #tpu.memory_space<vmem>>, vector<128x384xf32>
    %cst_79 = arith.constant dense<0.000000e+00> : vector<8x384xf32>
    %199 = tpu.matmul %137, %198, %cst_79 {dimension_numbers = #tpu.dot_dimension_numbers<[1], [0], [0], [1], [0, 0, 1, 1], [], []>} : vector<8x128xf32>, vector<128x384xf32>, vector<8x384xf32> -> vector<8x384xf32>
    %200 = arith.addf %199, %12 : vector<8x384xf32>
    %c0_80 = arith.constant 0 : index
    %c0_81 = arith.constant 0 : index
    %201 = vector.load %arg9[%c0_80, %c0_81] : memref<128x256xf32, #tpu.memory_space<vmem>>, vector<128x256xf32>
    %cst_82 = arith.constant dense<0.000000e+00> : vector<8x256xf32>
    %202 = tpu.matmul %168, %201, %cst_82 {dimension_numbers = #tpu.dot_dimension_numbers<[1], [0], [0], [1], [0, 0, 1, 1], [], []>} : vector<8x128xf32>, vector<128x256xf32>, vector<8x256xf32> -> vector<8x256xf32>
    %c0_83 = arith.constant 0 : index
    %c0_84 = arith.constant 0 : index
    %203 = vector.load %arg10[%c0_83, %c0_84] : memref<128x128xf32, #tpu.memory_space<vmem>>, vector<128x128xf32>
    %cst_85 = arith.constant dense<0.000000e+00> : vector<8x128xf32>
    %204 = tpu.matmul %168, %203, %cst_85 {dimension_numbers = #tpu.dot_dimension_numbers<[1], [0], [0], [1], [0, 0, 1, 1], [], []>} : vector<8x128xf32>, vector<128x128xf32>, vector<8x128xf32> -> vector<8x128xf32>
    %205 = vector.extract_strided_slice %200 {offsets = [0, 0], sizes = [8, 128], strides = [1, 1]} : vector<8x384xf32> to vector<8x128xf32>
    %206 = vector.extract_strided_slice %202 {offsets = [0, 0], sizes = [8, 128], strides = [1, 1]} : vector<8x256xf32> to vector<8x128xf32>
    %207 = arith.addf %205, %206 : vector<8x128xf32>
    %208 = arith.negf %207 : vector<8x128xf32>
    %209 = math.exp %208 : vector<8x128xf32>
    %cst_86 = arith.constant 1.000000e+00 : f32
    %210 = vector.broadcast %cst_86 : f32 to vector<8x128xf32>
    %211 = arith.addf %210, %209 : vector<8x128xf32>
    %212 = arith.divf %210, %211 : vector<8x128xf32>
    %213 = vector.extract_strided_slice %200 {offsets = [0, 128], sizes = [8, 128], strides = [1, 1]} : vector<8x384xf32> to vector<8x128xf32>
    %214 = vector.extract_strided_slice %202 {offsets = [0, 128], sizes = [8, 128], strides = [1, 1]} : vector<8x256xf32> to vector<8x128xf32>
    %215 = arith.addf %213, %214 : vector<8x128xf32>
    %216 = arith.negf %215 : vector<8x128xf32>
    %217 = math.exp %216 : vector<8x128xf32>
    %cst_87 = arith.constant 1.000000e+00 : f32
    %218 = vector.broadcast %cst_87 : f32 to vector<8x128xf32>
    %219 = arith.addf %218, %217 : vector<8x128xf32>
    %220 = arith.divf %218, %219 : vector<8x128xf32>
    %221 = vector.extract_strided_slice %200 {offsets = [0, 256], sizes = [8, 128], strides = [1, 1]} : vector<8x384xf32> to vector<8x128xf32>
    %222 = arith.addf %204, %15 : vector<8x128xf32>
    %223 = arith.mulf %212, %222 : vector<8x128xf32>
    %224 = arith.addf %221, %223 : vector<8x128xf32>
    %225 = math.tanh %224 : vector<8x128xf32>
    %226 = arith.subf %168, %225 : vector<8x128xf32>
    %227 = arith.mulf %220, %226 : vector<8x128xf32>
    %228 = arith.addf %225, %227 : vector<8x128xf32>
    %c32 = arith.constant 32 : index
    %c0_88 = arith.constant 0 : index
    %229 = vector.load %arg17[%c32, %c0_88] : memref<48x384xf32, #tpu.memory_space<vmem>>, vector<8x384xf32>
    %c0_89 = arith.constant 0 : index
    %c0_90 = arith.constant 0 : index
    %230 = vector.load %arg4[%c0_89, %c0_90] : memref<128x256xf32, #tpu.memory_space<vmem>>, vector<128x256xf32>
    %cst_91 = arith.constant dense<0.000000e+00> : vector<8x256xf32>
    %231 = tpu.matmul %197, %230, %cst_91 {dimension_numbers = #tpu.dot_dimension_numbers<[1], [0], [0], [1], [0, 0, 1, 1], [], []>} : vector<8x128xf32>, vector<128x256xf32>, vector<8x256xf32> -> vector<8x256xf32>
    %c0_92 = arith.constant 0 : index
    %c0_93 = arith.constant 0 : index
    %232 = vector.load %arg5[%c0_92, %c0_93] : memref<128x128xf32, #tpu.memory_space<vmem>>, vector<128x128xf32>
    %cst_94 = arith.constant dense<0.000000e+00> : vector<8x128xf32>
    %233 = tpu.matmul %197, %232, %cst_94 {dimension_numbers = #tpu.dot_dimension_numbers<[1], [0], [0], [1], [0, 0, 1, 1], [], []>} : vector<8x128xf32>, vector<128x128xf32>, vector<8x128xf32> -> vector<8x128xf32>
    %234 = vector.extract_strided_slice %229 {offsets = [0, 0], sizes = [8, 128], strides = [1, 1]} : vector<8x384xf32> to vector<8x128xf32>
    %235 = vector.extract_strided_slice %231 {offsets = [0, 0], sizes = [8, 128], strides = [1, 1]} : vector<8x256xf32> to vector<8x128xf32>
    %236 = arith.addf %234, %235 : vector<8x128xf32>
    %237 = arith.negf %236 : vector<8x128xf32>
    %238 = math.exp %237 : vector<8x128xf32>
    %cst_95 = arith.constant 1.000000e+00 : f32
    %239 = vector.broadcast %cst_95 : f32 to vector<8x128xf32>
    %240 = arith.addf %239, %238 : vector<8x128xf32>
    %241 = arith.divf %239, %240 : vector<8x128xf32>
    %242 = vector.extract_strided_slice %229 {offsets = [0, 128], sizes = [8, 128], strides = [1, 1]} : vector<8x384xf32> to vector<8x128xf32>
    %243 = vector.extract_strided_slice %231 {offsets = [0, 128], sizes = [8, 128], strides = [1, 1]} : vector<8x256xf32> to vector<8x128xf32>
    %244 = arith.addf %242, %243 : vector<8x128xf32>
    %245 = arith.negf %244 : vector<8x128xf32>
    %246 = math.exp %245 : vector<8x128xf32>
    %cst_96 = arith.constant 1.000000e+00 : f32
    %247 = vector.broadcast %cst_96 : f32 to vector<8x128xf32>
    %248 = arith.addf %247, %246 : vector<8x128xf32>
    %249 = arith.divf %247, %248 : vector<8x128xf32>
    %250 = vector.extract_strided_slice %229 {offsets = [0, 256], sizes = [8, 128], strides = [1, 1]} : vector<8x384xf32> to vector<8x128xf32>
    %251 = arith.addf %233, %9 : vector<8x128xf32>
    %252 = arith.mulf %241, %251 : vector<8x128xf32>
    %253 = arith.addf %250, %252 : vector<8x128xf32>
    %254 = math.tanh %253 : vector<8x128xf32>
    %255 = arith.subf %197, %254 : vector<8x128xf32>
    %256 = arith.mulf %249, %255 : vector<8x128xf32>
    %257 = arith.addf %254, %256 : vector<8x128xf32>
    %c0_97 = arith.constant 0 : index
    %c0_98 = arith.constant 0 : index
    %258 = vector.load %arg7[%c0_97, %c0_98] : memref<128x384xf32, #tpu.memory_space<vmem>>, vector<128x384xf32>
    %cst_99 = arith.constant dense<0.000000e+00> : vector<8x384xf32>
    %259 = tpu.matmul %197, %258, %cst_99 {dimension_numbers = #tpu.dot_dimension_numbers<[1], [0], [0], [1], [0, 0, 1, 1], [], []>} : vector<8x128xf32>, vector<128x384xf32>, vector<8x384xf32> -> vector<8x384xf32>
    %260 = arith.addf %259, %12 : vector<8x384xf32>
    %c0_100 = arith.constant 0 : index
    %c0_101 = arith.constant 0 : index
    %261 = vector.load %arg9[%c0_100, %c0_101] : memref<128x256xf32, #tpu.memory_space<vmem>>, vector<128x256xf32>
    %cst_102 = arith.constant dense<0.000000e+00> : vector<8x256xf32>
    %262 = tpu.matmul %228, %261, %cst_102 {dimension_numbers = #tpu.dot_dimension_numbers<[1], [0], [0], [1], [0, 0, 1, 1], [], []>} : vector<8x128xf32>, vector<128x256xf32>, vector<8x256xf32> -> vector<8x256xf32>
    %c0_103 = arith.constant 0 : index
    %c0_104 = arith.constant 0 : index
    %263 = vector.load %arg10[%c0_103, %c0_104] : memref<128x128xf32, #tpu.memory_space<vmem>>, vector<128x128xf32>
    %cst_105 = arith.constant dense<0.000000e+00> : vector<8x128xf32>
    %264 = tpu.matmul %228, %263, %cst_105 {dimension_numbers = #tpu.dot_dimension_numbers<[1], [0], [0], [1], [0, 0, 1, 1], [], []>} : vector<8x128xf32>, vector<128x128xf32>, vector<8x128xf32> -> vector<8x128xf32>
    %265 = vector.extract_strided_slice %260 {offsets = [0, 0], sizes = [8, 128], strides = [1, 1]} : vector<8x384xf32> to vector<8x128xf32>
    %266 = vector.extract_strided_slice %262 {offsets = [0, 0], sizes = [8, 128], strides = [1, 1]} : vector<8x256xf32> to vector<8x128xf32>
    %267 = arith.addf %265, %266 : vector<8x128xf32>
    %268 = arith.negf %267 : vector<8x128xf32>
    %269 = math.exp %268 : vector<8x128xf32>
    %cst_106 = arith.constant 1.000000e+00 : f32
    %270 = vector.broadcast %cst_106 : f32 to vector<8x128xf32>
    %271 = arith.addf %270, %269 : vector<8x128xf32>
    %272 = arith.divf %270, %271 : vector<8x128xf32>
    %273 = vector.extract_strided_slice %260 {offsets = [0, 128], sizes = [8, 128], strides = [1, 1]} : vector<8x384xf32> to vector<8x128xf32>
    %274 = vector.extract_strided_slice %262 {offsets = [0, 128], sizes = [8, 128], strides = [1, 1]} : vector<8x256xf32> to vector<8x128xf32>
    %275 = arith.addf %273, %274 : vector<8x128xf32>
    %276 = arith.negf %275 : vector<8x128xf32>
    %277 = math.exp %276 : vector<8x128xf32>
    %cst_107 = arith.constant 1.000000e+00 : f32
    %278 = vector.broadcast %cst_107 : f32 to vector<8x128xf32>
    %279 = arith.addf %278, %277 : vector<8x128xf32>
    %280 = arith.divf %278, %279 : vector<8x128xf32>
    %281 = vector.extract_strided_slice %260 {offsets = [0, 256], sizes = [8, 128], strides = [1, 1]} : vector<8x384xf32> to vector<8x128xf32>
    %282 = arith.addf %264, %15 : vector<8x128xf32>
    %283 = arith.mulf %272, %282 : vector<8x128xf32>
    %284 = arith.addf %281, %283 : vector<8x128xf32>
    %285 = math.tanh %284 : vector<8x128xf32>
    %286 = arith.subf %228, %285 : vector<8x128xf32>
    %287 = arith.mulf %280, %286 : vector<8x128xf32>
    %288 = arith.addf %285, %287 : vector<8x128xf32>
    %c40 = arith.constant 40 : index
    %c0_108 = arith.constant 0 : index
    %289 = vector.load %arg17[%c40, %c0_108] : memref<48x384xf32, #tpu.memory_space<vmem>>, vector<8x384xf32>
    %c0_109 = arith.constant 0 : index
    %c0_110 = arith.constant 0 : index
    %290 = vector.load %arg4[%c0_109, %c0_110] : memref<128x256xf32, #tpu.memory_space<vmem>>, vector<128x256xf32>
    %cst_111 = arith.constant dense<0.000000e+00> : vector<8x256xf32>
    %291 = tpu.matmul %257, %290, %cst_111 {dimension_numbers = #tpu.dot_dimension_numbers<[1], [0], [0], [1], [0, 0, 1, 1], [], []>} : vector<8x128xf32>, vector<128x256xf32>, vector<8x256xf32> -> vector<8x256xf32>
    %c0_112 = arith.constant 0 : index
    %c0_113 = arith.constant 0 : index
    %292 = vector.load %arg5[%c0_112, %c0_113] : memref<128x128xf32, #tpu.memory_space<vmem>>, vector<128x128xf32>
    %cst_114 = arith.constant dense<0.000000e+00> : vector<8x128xf32>
    %293 = tpu.matmul %257, %292, %cst_114 {dimension_numbers = #tpu.dot_dimension_numbers<[1], [0], [0], [1], [0, 0, 1, 1], [], []>} : vector<8x128xf32>, vector<128x128xf32>, vector<8x128xf32> -> vector<8x128xf32>
    %294 = vector.extract_strided_slice %289 {offsets = [0, 0], sizes = [8, 128], strides = [1, 1]} : vector<8x384xf32> to vector<8x128xf32>
    %295 = vector.extract_strided_slice %291 {offsets = [0, 0], sizes = [8, 128], strides = [1, 1]} : vector<8x256xf32> to vector<8x128xf32>
    %296 = arith.addf %294, %295 : vector<8x128xf32>
    %297 = arith.negf %296 : vector<8x128xf32>
    %298 = math.exp %297 : vector<8x128xf32>
    %cst_115 = arith.constant 1.000000e+00 : f32
    %299 = vector.broadcast %cst_115 : f32 to vector<8x128xf32>
    %300 = arith.addf %299, %298 : vector<8x128xf32>
    %301 = arith.divf %299, %300 : vector<8x128xf32>
    %302 = vector.extract_strided_slice %289 {offsets = [0, 128], sizes = [8, 128], strides = [1, 1]} : vector<8x384xf32> to vector<8x128xf32>
    %303 = vector.extract_strided_slice %291 {offsets = [0, 128], sizes = [8, 128], strides = [1, 1]} : vector<8x256xf32> to vector<8x128xf32>
    %304 = arith.addf %302, %303 : vector<8x128xf32>
    %305 = arith.negf %304 : vector<8x128xf32>
    %306 = math.exp %305 : vector<8x128xf32>
    %cst_116 = arith.constant 1.000000e+00 : f32
    %307 = vector.broadcast %cst_116 : f32 to vector<8x128xf32>
    %308 = arith.addf %307, %306 : vector<8x128xf32>
    %309 = arith.divf %307, %308 : vector<8x128xf32>
    %310 = vector.extract_strided_slice %289 {offsets = [0, 256], sizes = [8, 128], strides = [1, 1]} : vector<8x384xf32> to vector<8x128xf32>
    %311 = arith.addf %293, %9 : vector<8x128xf32>
    %312 = arith.mulf %301, %311 : vector<8x128xf32>
    %313 = arith.addf %310, %312 : vector<8x128xf32>
    %314 = math.tanh %313 : vector<8x128xf32>
    %315 = arith.subf %257, %314 : vector<8x128xf32>
    %316 = arith.mulf %309, %315 : vector<8x128xf32>
    %317 = arith.addf %314, %316 : vector<8x128xf32>
    %c0_117 = arith.constant 0 : index
    %c0_118 = arith.constant 0 : index
    %318 = vector.load %arg7[%c0_117, %c0_118] : memref<128x384xf32, #tpu.memory_space<vmem>>, vector<128x384xf32>
    %cst_119 = arith.constant dense<0.000000e+00> : vector<8x384xf32>
    %319 = tpu.matmul %257, %318, %cst_119 {dimension_numbers = #tpu.dot_dimension_numbers<[1], [0], [0], [1], [0, 0, 1, 1], [], []>} : vector<8x128xf32>, vector<128x384xf32>, vector<8x384xf32> -> vector<8x384xf32>
    %320 = arith.addf %319, %12 : vector<8x384xf32>
    %c0_120 = arith.constant 0 : index
    %c0_121 = arith.constant 0 : index
    %321 = vector.load %arg9[%c0_120, %c0_121] : memref<128x256xf32, #tpu.memory_space<vmem>>, vector<128x256xf32>
    %cst_122 = arith.constant dense<0.000000e+00> : vector<8x256xf32>
    %322 = tpu.matmul %288, %321, %cst_122 {dimension_numbers = #tpu.dot_dimension_numbers<[1], [0], [0], [1], [0, 0, 1, 1], [], []>} : vector<8x128xf32>, vector<128x256xf32>, vector<8x256xf32> -> vector<8x256xf32>
    %c0_123 = arith.constant 0 : index
    %c0_124 = arith.constant 0 : index
    %323 = vector.load %arg10[%c0_123, %c0_124] : memref<128x128xf32, #tpu.memory_space<vmem>>, vector<128x128xf32>
    %cst_125 = arith.constant dense<0.000000e+00> : vector<8x128xf32>
    %324 = tpu.matmul %288, %323, %cst_125 {dimension_numbers = #tpu.dot_dimension_numbers<[1], [0], [0], [1], [0, 0, 1, 1], [], []>} : vector<8x128xf32>, vector<128x128xf32>, vector<8x128xf32> -> vector<8x128xf32>
    %325 = vector.extract_strided_slice %320 {offsets = [0, 0], sizes = [8, 128], strides = [1, 1]} : vector<8x384xf32> to vector<8x128xf32>
    %326 = vector.extract_strided_slice %322 {offsets = [0, 0], sizes = [8, 128], strides = [1, 1]} : vector<8x256xf32> to vector<8x128xf32>
    %327 = arith.addf %325, %326 : vector<8x128xf32>
    %328 = arith.negf %327 : vector<8x128xf32>
    %329 = math.exp %328 : vector<8x128xf32>
    %cst_126 = arith.constant 1.000000e+00 : f32
    %330 = vector.broadcast %cst_126 : f32 to vector<8x128xf32>
    %331 = arith.addf %330, %329 : vector<8x128xf32>
    %332 = arith.divf %330, %331 : vector<8x128xf32>
    %333 = vector.extract_strided_slice %320 {offsets = [0, 128], sizes = [8, 128], strides = [1, 1]} : vector<8x384xf32> to vector<8x128xf32>
    %334 = vector.extract_strided_slice %322 {offsets = [0, 128], sizes = [8, 128], strides = [1, 1]} : vector<8x256xf32> to vector<8x128xf32>
    %335 = arith.addf %333, %334 : vector<8x128xf32>
    %336 = arith.negf %335 : vector<8x128xf32>
    %337 = math.exp %336 : vector<8x128xf32>
    %cst_127 = arith.constant 1.000000e+00 : f32
    %338 = vector.broadcast %cst_127 : f32 to vector<8x128xf32>
    %339 = arith.addf %338, %337 : vector<8x128xf32>
    %340 = arith.divf %338, %339 : vector<8x128xf32>
    %341 = vector.extract_strided_slice %320 {offsets = [0, 256], sizes = [8, 128], strides = [1, 1]} : vector<8x384xf32> to vector<8x128xf32>
    %342 = arith.addf %324, %15 : vector<8x128xf32>
    %343 = arith.mulf %332, %342 : vector<8x128xf32>
    %344 = arith.addf %341, %343 : vector<8x128xf32>
    %345 = math.tanh %344 : vector<8x128xf32>
    %346 = arith.subf %288, %345 : vector<8x128xf32>
    %347 = arith.mulf %340, %346 : vector<8x128xf32>
    %348 = arith.addf %345, %347 : vector<8x128xf32>
    %c0_128 = arith.constant 0 : index
    %c0_129 = arith.constant 0 : index
    %349 = vector.load %arg7[%c0_128, %c0_129] : memref<128x384xf32, #tpu.memory_space<vmem>>, vector<128x384xf32>
    %cst_130 = arith.constant dense<0.000000e+00> : vector<8x384xf32>
    %350 = tpu.matmul %317, %349, %cst_130 {dimension_numbers = #tpu.dot_dimension_numbers<[1], [0], [0], [1], [0, 0, 1, 1], [], []>} : vector<8x128xf32>, vector<128x384xf32>, vector<8x384xf32> -> vector<8x384xf32>
    %351 = arith.addf %350, %12 : vector<8x384xf32>
    %c0_131 = arith.constant 0 : index
    %c0_132 = arith.constant 0 : index
    %352 = vector.load %arg9[%c0_131, %c0_132] : memref<128x256xf32, #tpu.memory_space<vmem>>, vector<128x256xf32>
    %cst_133 = arith.constant dense<0.000000e+00> : vector<8x256xf32>
    %353 = tpu.matmul %348, %352, %cst_133 {dimension_numbers = #tpu.dot_dimension_numbers<[1], [0], [0], [1], [0, 0, 1, 1], [], []>} : vector<8x128xf32>, vector<128x256xf32>, vector<8x256xf32> -> vector<8x256xf32>
    %c0_134 = arith.constant 0 : index
    %c0_135 = arith.constant 0 : index
    %354 = vector.load %arg10[%c0_134, %c0_135] : memref<128x128xf32, #tpu.memory_space<vmem>>, vector<128x128xf32>
    %cst_136 = arith.constant dense<0.000000e+00> : vector<8x128xf32>
    %355 = tpu.matmul %348, %354, %cst_136 {dimension_numbers = #tpu.dot_dimension_numbers<[1], [0], [0], [1], [0, 0, 1, 1], [], []>} : vector<8x128xf32>, vector<128x128xf32>, vector<8x128xf32> -> vector<8x128xf32>
    %356 = vector.extract_strided_slice %351 {offsets = [0, 0], sizes = [8, 128], strides = [1, 1]} : vector<8x384xf32> to vector<8x128xf32>
    %357 = vector.extract_strided_slice %353 {offsets = [0, 0], sizes = [8, 128], strides = [1, 1]} : vector<8x256xf32> to vector<8x128xf32>
    %358 = arith.addf %356, %357 : vector<8x128xf32>
    %359 = arith.negf %358 : vector<8x128xf32>
    %360 = math.exp %359 : vector<8x128xf32>
    %cst_137 = arith.constant 1.000000e+00 : f32
    %361 = vector.broadcast %cst_137 : f32 to vector<8x128xf32>
    %362 = arith.addf %361, %360 : vector<8x128xf32>
    %363 = arith.divf %361, %362 : vector<8x128xf32>
    %364 = vector.extract_strided_slice %351 {offsets = [0, 128], sizes = [8, 128], strides = [1, 1]} : vector<8x384xf32> to vector<8x128xf32>
    %365 = vector.extract_strided_slice %353 {offsets = [0, 128], sizes = [8, 128], strides = [1, 1]} : vector<8x256xf32> to vector<8x128xf32>
    %366 = arith.addf %364, %365 : vector<8x128xf32>
    %367 = arith.negf %366 : vector<8x128xf32>
    %368 = math.exp %367 : vector<8x128xf32>
    %cst_138 = arith.constant 1.000000e+00 : f32
    %369 = vector.broadcast %cst_138 : f32 to vector<8x128xf32>
    %370 = arith.addf %369, %368 : vector<8x128xf32>
    %371 = arith.divf %369, %370 : vector<8x128xf32>
    %372 = vector.extract_strided_slice %351 {offsets = [0, 256], sizes = [8, 128], strides = [1, 1]} : vector<8x384xf32> to vector<8x128xf32>
    %373 = arith.addf %355, %15 : vector<8x128xf32>
    %374 = arith.mulf %363, %373 : vector<8x128xf32>
    %375 = arith.addf %372, %374 : vector<8x128xf32>
    %376 = math.tanh %375 : vector<8x128xf32>
    %377 = arith.subf %348, %376 : vector<8x128xf32>
    %378 = arith.mulf %371, %377 : vector<8x128xf32>
    %379 = arith.addf %376, %378 : vector<8x128xf32>
    %c0_139 = arith.constant 0 : index
    %c0_140 = arith.constant 0 : index
    %c0_141 = arith.constant 0 : index
    %380 = vector.load %arg15[%c0_139, %c0_140, %c0_141] : memref<2x8x128xf32, #tpu.memory_space<vmem>>, vector<1x8x128xf32>
    %381 = vector.shape_cast %380 : vector<1x8x128xf32> to vector<8x128xf32>
    %382 = vector.shape_cast %317 : vector<8x128xf32> to vector<1x8x128xf32>
    tpu.vector_store %arg15[%c0_139, %c0_140, %c0_141], %382 {strides = array<i32>} : memref<2x8x128xf32, #tpu.memory_space<vmem>>, vector<1x8x128xf32>,
    %c1_142 = arith.constant 1 : index
    %c0_143 = arith.constant 0 : index
    %c0_144 = arith.constant 0 : index
    %383 = vector.load %arg15[%c1_142, %c0_143, %c0_144] : memref<2x8x128xf32, #tpu.memory_space<vmem>>, vector<1x8x128xf32>
    %384 = vector.shape_cast %383 : vector<1x8x128xf32> to vector<8x128xf32>
    %385 = vector.shape_cast %379 : vector<8x128xf32> to vector<1x8x128xf32>
    tpu.vector_store %arg15[%c1_142, %c0_143, %c0_144], %385 {strides = array<i32>} : memref<2x8x128xf32, #tpu.memory_space<vmem>>, vector<1x8x128xf32>,
    %386 = tpu.concatenate %108, %168, %228, %288, %348, %379 in 0 : vector<8x128xf32>, vector<8x128xf32>, vector<8x128xf32>, vector<8x128xf32>, vector<8x128xf32>, vector<8x128xf32> -> vector<48x128xf32>
    %c0_145 = arith.constant 0 : index
    %c0_146 = arith.constant 0 : index
    %387 = vector.load %arg12[%c0_145, %c0_146] : memref<128x128xf32, #tpu.memory_space<vmem>>, vector<128x128xf32>
    %cst_147 = arith.constant dense<0.000000e+00> : vector<48x128xf32>
    %388 = tpu.matmul %386, %387, %cst_147 {dimension_numbers = #tpu.dot_dimension_numbers<[1], [0], [0], [1], [0, 0, 1, 1], [], []>} : vector<48x128xf32>, vector<128x128xf32>, vector<48x128xf32> -> vector<48x128xf32>
    %c0_148 = arith.constant 0 : index
    %c0_149 = arith.constant 0 : index
    %389 = vector.load %arg13[%c0_148, %c0_149] : memref<1x128xf32, #tpu.memory_space<vmem>>, vector<1x128xf32>
    %390 = vector.broadcast %389 : vector<1x128xf32> to vector<48x128xf32>
    %391 = arith.addf %388, %390 : vector<48x128xf32>
    %c0_150 = arith.constant 0 : index
    %c0_151 = arith.constant 0 : index
    %392 = vector.load %arg14[%c0_150, %c0_151] : memref<48x128xf32, #tpu.memory_space<vmem>>, vector<48x128xf32>
    tpu.vector_store %arg14[%c0_150, %c0_151], %391 {strides = array<i32>} : memref<48x128xf32, #tpu.memory_space<vmem>>, vector<48x128xf32>,
    %cst_152 = arith.constant dense<0xFF800000> : vector<48xf32>
    %393 = vector.multi_reduction <maximumf>, %391, %cst_152 [1] : vector<48x128xf32> to vector<48xf32>
    %394 = vector.shape_cast %393 : vector<48xf32> to vector<48x1xf32>
    %395 = vector.broadcast %394 : vector<48x1xf32> to vector<48x128xf32>
    %396 = arith.subf %391, %395 : vector<48x128xf32>
    %397 = math.exp %396 : vector<48x128xf32>
    %cst_153 = arith.constant dense<0.000000e+00> : vector<48xf32>
    %398 = vector.multi_reduction <add>, %397, %cst_153 [1] : vector<48x128xf32> to vector<48xf32>
    %399 = vector.shape_cast %398 : vector<48xf32> to vector<48x1xf32>
    %400 = tpu.reciprocal %399 : vector<48x1xf32> -> vector<48x1xf32>
    %401 = vector.broadcast %400 : vector<48x1xf32> to vector<48x128xf32>
    %402 = arith.mulf %397, %401 : vector<48x128xf32>
    %c0_154 = arith.constant 0 : index
    %c0_155 = arith.constant 0 : index
    %403 = vector.load %arg16[%c0_154, %c0_155] : memref<48x128xf32, #tpu.memory_space<vmem>>, vector<48x128xf32>
    tpu.vector_store %arg16[%c0_154, %c0_155], %402 {strides = array<i32>} : memref<48x128xf32, #tpu.memory_space<vmem>>, vector<48x128xf32>,
    return
  }
}

</mosaic_0001>

<llo_original>
// kernel: tpu_custom_call.1
$region0: #{tpu_custom_call.1}
  #allocation0 [shape = 'u32[]', space=smem, size = 0x4, offset = 0x4, fixed_abs, tag = 'smem constant byte address 0x4 - core index']
  #allocation1 [shape = 'u32[144,128]{1,0:T(1,128)}', space=vmem, size = 0x12000, scoped, tag = 'internal scratch']
  #allocation2 [shape = 'f32[48,384]{1,0:T(8,128)}', space=vmem, size = 0x12000, scoped, tag = 'scratch operand']
  %s0 = inlined_call_operand.vmem [shape: f32[48,16], index: 0, kind: input, shape index: {}]
  %s1 = inlined_call_operand.vmem [shape: f32[2,8,128], index: 1, kind: input, shape index: {}]
  %s2 = inlined_call_operand.vmem [shape: f32[16,384], index: 2, kind: input, shape index: {}]
  %s3 = inlined_call_operand.vmem [shape: f32[1,384], index: 3, kind: input, shape index: {}]
  %s4 = inlined_call_operand.hbm [shape: f32[128,256], index: 4, kind: input, shape index: {}]
  %s5 = inlined_call_operand.hbm [shape: f32[128,128], index: 5, kind: input, shape index: {}]
  %s6 = inlined_call_operand.vmem [shape: f32[1,128], index: 6, kind: input, shape index: {}]
  %s7 = inlined_call_operand.hbm [shape: f32[128,384], index: 7, kind: input, shape index: {}]
  %s8 = inlined_call_operand.vmem [shape: f32[1,384], index: 8, kind: input, shape index: {}]
  %s9 = inlined_call_operand.hbm [shape: f32[128,256], index: 9, kind: input, shape index: {}]
  %s10 = inlined_call_operand.hbm [shape: f32[128,128], index: 10, kind: input, shape index: {}]
  %s11 = inlined_call_operand.vmem [shape: f32[1,128], index: 11, kind: input, shape index: {}]
  %s12 = inlined_call_operand.hbm [shape: f32[128,128], index: 12, kind: input, shape index: {}]
  %s13 = inlined_call_operand.vmem [shape: f32[1,128], index: 13, kind: input, shape index: {}]
  %s14 = inlined_call_operand.hbm [shape: f32[48,128], index: 14, kind: output, shape index: {0}]
  %s15 = inlined_call_operand.hbm [shape: f32[2,8,128], index: 15, kind: output, shape index: {1}]
  %s16 = inlined_call_operand.hbm [shape: f32[48,128], index: 16, kind: output, shape index: {2}]
  %17 = xla_tuple %s14, %s15, %s16
  %s18 = sld [smem:[#allocation0]]
  $region106: #{tpu_custom_call.1} parent=0
    _
  %s20 = ssub.s32 1, %s18
  %s21 = scalar_select 0, %s20, %s18
  $region1: #{tpu_custom_call.1} parent=0
    #allocation3 [shape = 'u8[131072]{0}', space=vmem, size = 0x20000, scoped, tag = 'input window, operand 4, single buffered']
    #allocation4 [shape = 's32[1]{0}', space=sflag, size = 0x4, scoped, tag = 'scoped memory for tpu_custom_call.1']
    #allocation5 [shape = 's32[1]{0}', space=sflag, size = 0x4, scoped, tag = 'scoped memory for tpu_custom_call.1']
    #allocation6 [shape = 'u8[65536]{0}', space=vmem, size = 0x10000, scoped, tag = 'input window, operand 5, single buffered']
    #allocation7 [shape = 's32[1]{0}', space=sflag, size = 0x4, scoped, tag = 'scoped memory for tpu_custom_call.1']
    #allocation8 [shape = 'u8[196608]{0}', space=vmem, size = 0x30000, scoped, tag = 'input window, operand 7, single buffered']
    #allocation9 [shape = 'u8[131072]{0}', space=vmem, size = 0x20000, scoped, tag = 'input window, operand 9, single buffered']
    #allocation10 [shape = 's32[1]{0}', space=sflag, size = 0x4, scoped, tag = 'scoped memory for tpu_custom_call.1']
    #allocation11 [shape = 'u8[65536]{0}', space=vmem, size = 0x10000, scoped, tag = 'input window, operand 10, single buffered']
    #allocation12 [shape = 'u8[65536]{0}', space=vmem, size = 0x10000, scoped, tag = 'input window, operand 12, single buffered']
    #allocation13 [shape = 's32[1]{0}', space=sflag, size = 0x4, scoped, tag = 'scoped memory for tpu_custom_call.1']
    #allocation14 [shape = 'u8[24576]{0}', space=vmem, size = 0x6000, scoped, tag = 'output window, operand 0, single buffered']
    #allocation15 [shape = 'u8[8192]{0}', space=vmem, size = 0x2000, scoped, tag = 'output window, operand 1, single buffered']
    #allocation16 [shape = 's32[1]{0}', space=sflag, size = 0x4, scoped, tag = 'scoped memory for tpu_custom_call.1']
    #allocation17 [shape = 'u8[24576]{0}', space=vmem, size = 0x6000, scoped, tag = 'output window, operand 2, single buffered']
    %22 = vsyncpa [#allocation4], 0
    %23 = vsyncpa [#allocation7], 0
    %24 = vsyncpa [#allocation10], 0
    %25 = vsyncpa [#allocation13], 0
    %26 = vsyncpa [#allocation5], 0
    %27 = vsyncpa [#allocation16], 0
    // Predicated region
    $region2: #{tpu_custom_call.1} parent=1 // pred_check
      _
    $region3: #{tpu_custom_call.1} parent=1 // pred_check_branch
      %29 = sbr.rel (0) target = $region5
    $region4: #{tpu_custom_call.1} parent=1 // pred_region
      _
    $region5: #{tpu_custom_call.1} parent=1 // pred_fallthru
      _
    // Predicated region
    $region6: #{tpu_custom_call.1} parent=1 // pred_check
      _
    $region7: #{tpu_custom_call.1} parent=1 // pred_check_branch
      %31 = sbr.rel (0) target = $region9
    $region8: #{tpu_custom_call.1} parent=1 // pred_region
      _
    $region9: #{tpu_custom_call.1} parent=1 // pred_fallthru
      _
    // Predicated region
    $region10: #{tpu_custom_call.1} parent=1 // pred_check
      _
    $region11: #{tpu_custom_call.1} parent=1 // pred_check_branch
      %33 = sbr.rel (0) target = $region13
    $region12: #{tpu_custom_call.1} parent=1 // pred_region
      _
    $region13: #{tpu_custom_call.1} parent=1 // pred_fallthru
      _
    // Predicated region
    $region14: #{tpu_custom_call.1} parent=1 // pred_check
      _
    $region15: #{tpu_custom_call.1} parent=1 // pred_check_branch
      %35 = sbr.rel (0) target = $region17
    $region16: #{tpu_custom_call.1} parent=1 // pred_region
      _
    $region17: #{tpu_custom_call.1} parent=1 // pred_fallthru
      _
    // Predicated region
    $region18: #{tpu_custom_call.1} parent=1 // pred_check
      _
    $region19: #{tpu_custom_call.1} parent=1 // pred_check_branch
      %37 = sbr.rel (0) target = $region21
    $region20: #{tpu_custom_call.1} parent=1 // pred_region
      %s39 = ssub.s32 4096, 4096
      %40 = vsyncadd [#allocation4], %s39
      %s41 = sshll.u32 [#allocation3], 4
      %s42 = int_to_ptr.vmem [resolvable:$true] %s41
      %47 = dma.hbm_to_vmem [thread:$0]  %s4, 4096, %s42, [#allocation4], 256, 256, 16
    $region21: #{tpu_custom_call.1} parent=1 // pred_fallthru
      _
    // Predicated region
    $region22: #{tpu_custom_call.1} parent=1 // pred_check
      _
    $region23: #{tpu_custom_call.1} parent=1 // pred_check_branch
      %49 = sbr.rel (0) target = $region25
    $region24: #{tpu_custom_call.1} parent=1 // pred_region
      %s51 = ssub.s32 2048, 2048
      %52 = vsyncadd [#allocation7], %s51
      %s53 = sshll.u32 [#allocation6], 4
      %s54 = int_to_ptr.vmem [resolvable:$true] %s53
      %59 = dma.hbm_to_vmem [thread:$0]  %s5, 2048, %s54, [#allocation7], 128, 128, 8
    $region25: #{tpu_custom_call.1} parent=1 // pred_fallthru
      _
    // Predicated region
    $region26: #{tpu_custom_call.1} parent=1 // pred_check
      _
    $region27: #{tpu_custom_call.1} parent=1 // pred_check_branch
      %61 = sbr.rel (0) target = $region29
    $region28: #{tpu_custom_call.1} parent=1 // pred_region
      _
    $region29: #{tpu_custom_call.1} parent=1 // pred_fallthru
      _
    // Predicated region
    $region30: #{tpu_custom_call.1} parent=1 // pred_check
      _
    $region31: #{tpu_custom_call.1} parent=1 // pred_check_branch
      %63 = sbr.rel (0) target = $region33
    $region32: #{tpu_custom_call.1} parent=1 // pred_region
      %s65 = ssub.s32 6144, 6144
      %66 = vsyncadd [#allocation7], %s65
      %s67 = sshll.u32 [#allocation8], 4
      %s68 = int_to_ptr.vmem [resolvable:$true] %s67
      %73 = dma.hbm_to_vmem [thread:$0]  %s7, 6144, %s68, [#allocation7], 384, 384, 24
    $region33: #{tpu_custom_call.1} parent=1 // pred_fallthru
      _
    // Predicated region
    $region34: #{tpu_custom_call.1} parent=1 // pred_check
      _
    $region35: #{tpu_custom_call.1} parent=1 // pred_check_branch
      %75 = sbr.rel (0) target = $region37
    $region36: #{tpu_custom_call.1} parent=1 // pred_region
      _
    $region37: #{tpu_custom_call.1} parent=1 // pred_fallthru
      _
    // Predicated region
    $region38: #{tpu_custom_call.1} parent=1 // pred_check
      _
    $region39: #{tpu_custom_call.1} parent=1 // pred_check_branch
      %77 = sbr.rel (0) target = $region41
    $region40: #{tpu_custom_call.1} parent=1 // pred_region
      %s79 = ssub.s32 4096, 4096
      %80 = vsyncadd [#allocation10], %s79
      %s81 = sshll.u32 [#allocation9], 4
      %s82 = int_to_ptr.vmem [resolvable:$true] %s81
      %87 = dma.hbm_to_vmem [thread:$0]  %s9, 4096, %s82, [#allocation10], 256, 256, 16
    $region41: #{tpu_custom_call.1} parent=1 // pred_fallthru
      _
    // Predicated region
    $region42: #{tpu_custom_call.1} parent=1 // pred_check
      _
    $region43: #{tpu_custom_call.1} parent=1 // pred_check_branch
      %89 = sbr.rel (0) target = $region45
    $region44: #{tpu_custom_call.1} parent=1 // pred_region
      %s91 = ssub.s32 2048, 2048
      %92 = vsyncadd [#allocation10], %s91
      %s93 = sshll.u32 [#allocation11], 4
      %s94 = int_to_ptr.vmem [resolvable:$true] %s93
      %99 = dma.hbm_to_vmem [thread:$0]  %s10, 2048, %s94, [#allocation10], 128, 128, 8
    $region45: #{tpu_custom_call.1} parent=1 // pred_fallthru
      _
    // Predicated region
    $region46: #{tpu_custom_call.1} parent=1 // pred_check
      _
    $region47: #{tpu_custom_call.1} parent=1 // pred_check_branch
      %101 = sbr.rel (0) target = $region49
    $region48: #{tpu_custom_call.1} parent=1 // pred_region
      _
    $region49: #{tpu_custom_call.1} parent=1 // pred_fallthru
      _
    // Predicated region
    $region50: #{tpu_custom_call.1} parent=1 // pred_check
      _
    $region51: #{tpu_custom_call.1} parent=1 // pred_check_branch
      %103 = sbr.rel (0) target = $region53
    $region52: #{tpu_custom_call.1} parent=1 // pred_region
      %s105 = ssub.s32 2048, 2048
      %106 = vsyncadd [#allocation13], %s105
      %s107 = sshll.u32 [#allocation12], 4
      %s108 = int_to_ptr.vmem [resolvable:$true] %s107
      %113 = dma.hbm_to_vmem [thread:$0]  %s12, 2048, %s108, [#allocation13], 128, 128, 8
    $region53: #{tpu_custom_call.1} parent=1 // pred_fallthru
      _
    // Predicated region
    $region54: #{tpu_custom_call.1} parent=1 // pred_check
      _
    $region55: #{tpu_custom_call.1} parent=1 // pred_check_branch
      %115 = sbr.rel (0) target = $region57
    $region56: #{tpu_custom_call.1} parent=1 // pred_region
      _
    $region57: #{tpu_custom_call.1} parent=1 // pred_fallthru
      _
    // Predicated region
    $region58: #{tpu_custom_call.1} parent=1 // pred_check
      _
    $region59: #{tpu_custom_call.1} parent=1 // pred_check_branch
      %117 = sbr.rel (0) target = $region61
    $region60: #{tpu_custom_call.1} parent=1 // pred_region
      %118 = dma.done [#allocation4], 4096
    $region61: #{tpu_custom_call.1} parent=1 // pred_fallthru
      _
    // Predicated region
    $region62: #{tpu_custom_call.1} parent=1 // pred_check
      _
    $region63: #{tpu_custom_call.1} parent=1 // pred_check_branch
      %120 = sbr.rel (0) target = $region65
    $region64: #{tpu_custom_call.1} parent=1 // pred_region
      %121 = dma.done [#allocation7], 2048
    $region65: #{tpu_custom_call.1} parent=1 // pred_fallthru
      _
    // Predicated region
    $region66: #{tpu_custom_call.1} parent=1 // pred_check
      _
    $region67: #{tpu_custom_call.1} parent=1 // pred_check_branch
      %123 = sbr.rel (0) target = $region69
    $region68: #{tpu_custom_call.1} parent=1 // pred_region
      %124 = dma.done [#allocation7], 6144
    $region69: #{tpu_custom_call.1} parent=1 // pred_fallthru
      _
    // Predicated region
    $region70: #{tpu_custom_call.1} parent=1 // pred_check
      _
    $region71: #{tpu_custom_call.1} parent=1 // pred_check_branch
      %126 = sbr.rel (0) target = $region73
    $region72: #{tpu_custom_call.1} parent=1 // pred_region
      %127 = dma.done [#allocation10], 4096
    $region73: #{tpu_custom_call.1} parent=1 // pred_fallthru
      _
    // Predicated region
    $region74: #{tpu_custom_call.1} parent=1 // pred_check
      _
    $region75: #{tpu_custom_call.1} parent=1 // pred_check_branch
      %129 = sbr.rel (0) target = $region77
    $region76: #{tpu_custom_call.1} parent=1 // pred_region
      %130 = dma.done [#allocation10], 2048
    $region77: #{tpu_custom_call.1} parent=1 // pred_fallthru
      _
    // Predicated region
    $region78: #{tpu_custom_call.1} parent=1 // pred_check
      _
    $region79: #{tpu_custom_call.1} parent=1 // pred_check_branch
      %132 = sbr.rel (0) target = $region81
    $region80: #{tpu_custom_call.1} parent=1 // pred_region
      %133 = dma.done [#allocation13], 2048
    $region81: #{tpu_custom_call.1} parent=1 // pred_fallthru
      _
    %v134 = vld [vmem:[%s0] sm:$0xff]
    %v135 = vld [vmem:[%s0 + $0x8] sm:$0xff]
    %v136 = vld [vmem:[%s0 + $0x10] sm:$0xff]
    %v137 = vld [vmem:[%s0 + $0x18] sm:$0xff]
    %v138 = vld [vmem:[%s0 + $0x20] sm:$0xff]
    %v139 = vld [vmem:[%s0 + $0x28] sm:$0xff]
    %v140 = vld [vmem:[%s2] sm:$0xff]
    %v141 = vld [vmem:[%s2 + $0x8] sm:$0xff]
    %v142 = vld [vmem:[%s2 + $0x10] sm:$0xff]
    %v143 = vld [vmem:[%s2 + $0x18] sm:$0xff]
    %v144 = vld [vmem:[%s2 + $0x20] sm:$0xff]
    %v145 = vld [vmem:[%s2 + $0x28] sm:$0xff]
    %v146 = vld [vmem:[%s3] sm:$0x7]
    %v148 = vlaneseq
    %v149 = vshrl.u32 %v148, 7
    %v150 = vsub.s32 0, %v149
    %v151 = vrot.slane %v146, %v150
    %v152 = vlaneseq
    %v153 = vshrl.u32 %v152, 7
    %v154 = vsub.s32 1, %v153
    %v155 = vrot.slane %v146, %v154
    %v156 = vlaneseq
    %v157 = vshrl.u32 %v156, 7
    %v158 = vsub.s32 2, %v157
    %v159 = vrot.slane %v146, %v158
    %vm163 = vcmask 130048
    %v165 = vsel %vm163, %v134, 0
    %v168 = vsel %vm163, %v135, 0
    %v171 = vsel %vm163, %v136, 0
    %v174 = vsel %vm163, %v137, 0
    %v177 = vsel %vm163, %v138, 0
    %v180 = vsel %vm163, %v139, 0
    %182 = vmatprep.subr.mxu0 %v141
    %183 = vmatpush1.msra.mxu0 %v140
    %184 = vmatprep.subr.mxu0 %v144
    %185 = vmatpush1.msra.mxu0 %v143
    %186 = vmatprep.subr.mxu0 0.0
    %187 = vmatpush1.msra.mxu0 0.0
    %188 = vmatprep.subr.mxu0 0.0
    %189 = vmatpush1.msra.mxu0 0.0
    %190 = vmatprep.subr.mxu0 0.0
    %191 = vmatpush1.msra.mxu0 0.0
    %192 = vmatprep.subr.mxu0 0.0
    %193 = vmatpush1.msra.mxu0 0.0
    %194 = vmatprep.subr.mxu0 0.0
    %195 = vmatpush1.msra.mxu0 0.0
    %196 = vmatprep.subr.mxu0 0.0
    %197 = vmatpush1.msra.mxu0 0.0
    %198 = vmatprep.subr.mxu0 0.0
    %199 = vmatpush1.msra.mxu0 0.0
    %200 = vmatprep.subr.mxu0 0.0
    %201 = vmatpush1.msra.mxu0 0.0
    %202 = vmatprep.subr.mxu0 0.0
    %203 = vmatpush1.msra.mxu0 0.0
    %204 = vmatprep.subr.mxu0 0.0
    %205 = vmatpush1.msra.mxu0 0.0
    %206 = vmatprep.subr.mxu0 0.0
    %207 = vmatpush1.msra.mxu0 0.0
    %208 = vmatprep.subr.mxu0 0.0
    %209 = vmatpush1.msra.mxu0 0.0
    %210 = vmatprep.subr.mxu0 0.0
    %211 = vmatpush1.msra.mxu0 0.0
    %212 = vmatprep.subr.mxu0 0.0
    %213 = vmatpush1.msra.mxu0 0.0
    %214 = vmatprep.subr.mxu0 0.0
    %215 = vmatpush1.msra.mxu0 0.0
    %216 = vmatprep.subr.mxu0 0.0
    %217 = vmatpush1.msra.mxu0 0.0
    %218 = vmatprep.subr.mxu0 0.0
    %219 = vmatpush1.msra.mxu0 0.0
    %220 = vmatprep.subr.mxu0 0.0
    %221 = vmatpush1.msra.mxu0 0.0
    %222 = vmatprep.subr.mxu0 0.0
    %223 = vmatpush1.msra.mxu0 0.0
    %224 = vmatprep.subr.mxu0 0.0
    %225 = vmatpush1.msra.mxu0 0.0
    %226 = vmatprep.subr.mxu0 0.0
    %227 = vmatpush1.msra.mxu0 0.0
    %228 = vmatprep.subr.mxu0 0.0
    %229 = vmatpush1.msra.mxu0 0.0
    %230 = vmatprep.subr.mxu0 0.0
    %231 = vmatpush1.msra.mxu0 0.0
    %232 = vmatprep.subr.mxu0 0.0
    %233 = vmatpush1.msra.mxu0 0.0
    %234 = vmatprep.subr.mxu0 0.0
    %235 = vmatpush1.msra.mxu0 0.0
    %236 = vmatprep.subr.mxu0 0.0
    %237 = vmatpush1.msra.mxu0 0.0
    %238 = vmatprep.subr.mxu0 0.0
    %239 = vmatpush1.msra.mxu0 0.0
    %240 = vmatprep.subr.mxu0 0.0
    %241 = vmatpush1.msra.mxu0 0.0
    %242 = vmatprep.subr.mxu0 0.0
    %243 = vmatpush1.msra.mxu0 0.0
    %244 = vmatprep.subr.mxu0 0.0
    %245 = vmatpush1.msra.mxu0 0.0
    %246 = vmatprep.mubr.f32.mxu0 0.0
    %247 = vmatmul.mubr.f32.gmra.mrb[0].mxu0 %v165
    %v248 = vpop.f32.mrb[0].mxu0
    %v249 = vadd.f32 %v151, %v248
    %v250 = vpop.f32.mrb[0].mxu0
    %v251 = vadd.f32 %v155, %v250
    %252 = vmatprep.mubr.f32.mxu0 0.0
    %253 = vmatmul.mubr.f32.gmra.mrb[0].mxu0 %v168
    %v254 = vpop.f32.mrb[0].mxu0
    %v255 = vadd.f32 %v151, %v254
    %v256 = vpop.f32.mrb[0].mxu0
    %v257 = vadd.f32 %v155, %v256
    %258 = vmatprep.mubr.f32.mxu0 0.0
    %259 = vmatmul.mubr.f32.gmra.mrb[0].mxu0 %v171
    %v260 = vpop.f32.mrb[0].mxu0
    %v261 = vadd.f32 %v151, %v260
    %v262 = vpop.f32.mrb[0].mxu0
    %v263 = vadd.f32 %v155, %v262
    %264 = vmatprep.mubr.f32.mxu0 0.0
    %265 = vmatmul.mubr.f32.gmra.mrb[0].mxu0 %v174
    %v266 = vpop.f32.mrb[0].mxu0
    %v267 = vadd.f32 %v151, %v266
    %v268 = vpop.f32.mrb[0].mxu0
    %v269 = vadd.f32 %v155, %v268
    %270 = vmatprep.mubr.f32.mxu0 0.0
    %271 = vmatmul.mubr.f32.gmra.mrb[0].mxu0 %v177
    %v272 = vpop.f32.mrb[0].mxu0
    %v273 = vadd.f32 %v151, %v272
    %v274 = vpop.f32.mrb[0].mxu0
    %v275 = vadd.f32 %v155, %v274
    %276 = vmatprep.mubr.f32.mxu0 0.0
    %277 = vmatmul.mubr.f32.gmra.mrb[0].mxu0 %v180
    %v278 = vpop.f32.mrb[0].mxu0
    %v279 = vadd.f32 %v151, %v278
    %v280 = vpop.f32.mrb[0].mxu0
    %v281 = vadd.f32 %v155, %v280
    %282 = vdwg.mxu0
    %283 = vmatprep.subr.mxu0 0.0
    %284 = vmatpush1.msra.mxu0 %v142
    %285 = vmatprep.subr.mxu0 0.0
    %286 = vmatpush1.msra.mxu0 %v145
    %287 = vmatprep.subr.mxu0 0.0
    %288 = vmatpush1.msra.mxu0 0.0
    %289 = vmatprep.subr.mxu0 0.0
    %290 = vmatpush1.msra.mxu0 0.0
    %291 = vmatprep.subr.mxu0 0.0
    %292 = vmatpush1.msra.mxu0 0.0
    %293 = vmatprep.subr.mxu0 0.0
    %294 = vmatpush1.msra.mxu0 0.0
    %295 = vmatprep.subr.mxu0 0.0
    %296 = vmatpush1.msra.mxu0 0.0
    %297 = vmatprep.subr.mxu0 0.0
    %298 = vmatpush1.msra.mxu0 0.0
    %299 = vmatprep.subr.mxu0 0.0
    %300 = vmatpush1.msra.mxu0 0.0
    %301 = vmatprep.subr.mxu0 0.0
    %302 = vmatpush1.msra.mxu0 0.0
    %303 = vmatprep.subr.mxu0 0.0
    %304 = vmatpush1.msra.mxu0 0.0
    %305 = vmatprep.subr.mxu0 0.0
    %306 = vmatpush1.msra.mxu0 0.0
    %307 = vmatprep.subr.mxu0 0.0
    %308 = vmatpush1.msra.mxu0 0.0
    %309 = vmatprep.subr.mxu0 0.0
    %310 = vmatpush1.msra.mxu0 0.0
    %311 = vmatprep.subr.mxu0 0.0
    %312 = vmatpush1.msra.mxu0 0.0
    %313 = vmatprep.subr.mxu0 0.0
    %314 = vmatpush1.msra.mxu0 0.0
    %315 = vmatprep.subr.mxu0 0.0
    %316 = vmatpush1.msra.mxu0 0.0
    %317 = vmatprep.subr.mxu0 0.0
    %318 = vmatpush1.msra.mxu0 0.0
    %319 = vmatprep.subr.mxu0 0.0
    %320 = vmatpush1.msra.mxu0 0.0
    %321 = vmatprep.subr.mxu0 0.0
    %322 = vmatpush1.msra.mxu0 0.0
    %323 = vmatprep.subr.mxu0 0.0
    %324 = vmatpush1.msra.mxu0 0.0
    %325 = vmatprep.subr.mxu0 0.0
    %326 = vmatpush1.msra.mxu0 0.0
    %327 = vmatprep.subr.mxu0 0.0
    %328 = vmatpush1.msra.mxu0 0.0
    %329 = vmatprep.subr.mxu0 0.0
    %330 = vmatpush1.msra.mxu0 0.0
    %331 = vmatprep.subr.mxu0 0.0
    %332 = vmatpush1.msra.mxu0 0.0
    %333 = vmatprep.subr.mxu0 0.0
    %334 = vmatpush1.msra.mxu0 0.0
    %335 = vmatprep.subr.mxu0 0.0
    %336 = vmatpush1.msra.mxu0 0.0
    %337 = vmatprep.subr.mxu0 0.0
    %338 = vmatpush1.msra.mxu0 0.0
    %339 = vmatprep.subr.mxu0 0.0
    %340 = vmatpush1.msra.mxu0 0.0
    %341 = vmatprep.subr.mxu0 0.0
    %342 = vmatpush1.msra.mxu0 0.0
    %343 = vmatprep.subr.mxu0 0.0
    %344 = vmatpush1.msra.mxu0 0.0
    %345 = vmatprep.subr.mxu0 0.0
    %346 = vmatpush1.msra.mxu0 0.0
    %347 = vmatprep.mubr.f32.mxu0 0.0
    %348 = vmatmul.mubr.f32.gmra.mrb[0].mxu0 %v165
    %v349 = vpop.f32.mrb[0].mxu0
    %v350 = vadd.f32 %v159, %v349
    %v351 = vpop.f32.mrb[0].mxu0
    %352 = vmatprep.mubr.f32.mxu0 0.0
    %353 = vmatmul.mubr.f32.gmra.mrb[0].mxu0 %v168
    %v354 = vpop.f32.mrb[0].mxu0
    %v355 = vadd.f32 %v159, %v354
    %v356 = vpop.f32.mrb[0].mxu0
    %357 = vmatprep.mubr.f32.mxu0 0.0
    %358 = vmatmul.mubr.f32.gmra.mrb[0].mxu0 %v171
    %v359 = vpop.f32.mrb[0].mxu0
    %v360 = vadd.f32 %v159, %v359
    %v361 = vpop.f32.mrb[0].mxu0
    %362 = vmatprep.mubr.f32.mxu0 0.0
    %363 = vmatmul.mubr.f32.gmra.mrb[0].mxu0 %v174
    %v364 = vpop.f32.mrb[0].mxu0
    %v365 = vadd.f32 %v159, %v364
    %v366 = vpop.f32.mrb[0].mxu0
    %367 = vmatprep.mubr.f32.mxu0 0.0
    %368 = vmatmul.mubr.f32.gmra.mrb[0].mxu0 %v177
    %v369 = vpop.f32.mrb[0].mxu0
    %v370 = vadd.f32 %v159, %v369
    %v371 = vpop.f32.mrb[0].mxu0
    %372 = vmatprep.mubr.f32.mxu0 0.0
    %373 = vmatmul.mubr.f32.gmra.mrb[0].mxu0 %v180
    %v374 = vpop.f32.mrb[0].mxu0
    %v375 = vadd.f32 %v159, %v374
    %v376 = vpop.f32.mrb[0].mxu0
    %377 = vdwg.mxu0
    %378 = vst [vmem:[#allocation2] sm:$0xff] %v249
    %379 = vst [vmem:[#allocation2 + $0x8] sm:$0xff] %v251
    %380 = vst [vmem:[#allocation2 + $0x10] sm:$0xff] %v350
    %381 = vst [vmem:[#allocation2 + $0x18] sm:$0xff] %v255
    %382 = vst [vmem:[#allocation2 + $0x20] sm:$0xff] %v257
    %383 = vst [vmem:[#allocation2 + $0x28] sm:$0xff] %v355
    %384 = vst [vmem:[#allocation2 + $0x30] sm:$0xff] %v261
    %385 = vst [vmem:[#allocation2 + $0x38] sm:$0xff] %v263
    %386 = vst [vmem:[#allocation2 + $0x40] sm:$0xff] %v360
    %387 = vst [vmem:[#allocation2 + $0x48] sm:$0xff] %v267
    %388 = vst [vmem:[#allocation2 + $0x50] sm:$0xff] %v269
    %389 = vst [vmem:[#allocation2 + $0x58] sm:$0xff] %v365
    %390 = vst [vmem:[#allocation2 + $0x60] sm:$0xff] %v273
    %391 = vst [vmem:[#allocation2 + $0x68] sm:$0xff] %v275
    %392 = vst [vmem:[#allocation2 + $0x70] sm:$0xff] %v370
    %393 = vst [vmem:[#allocation2 + $0x78] sm:$0xff] %v279
    %394 = vst [vmem:[#allocation2 + $0x80] sm:$0xff] %v281
    %395 = vst [vmem:[#allocation2 + $0x88] sm:$0xff] %v375
    %v396 = vld [vmem:[%s6] sm:$0x1]
    %v398 = vlaneseq
    %v399 = vshrl.u32 %v398, 7
    %v400 = vsub.s32 0, %v399
    %v401 = vrot.slane %v396, %v400
    %v403 = vld [vmem:[%s8] sm:$0x7]
    %v405 = vlaneseq
    %v406 = vshrl.u32 %v405, 7
    %v407 = vsub.s32 0, %v406
    %v408 = vrot.slane %v403, %v407
    %v409 = vlaneseq
    %v410 = vshrl.u32 %v409, 7
    %v411 = vsub.s32 1, %v410
    %v412 = vrot.slane %v403, %v411
    %v413 = vlaneseq
    %v414 = vshrl.u32 %v413, 7
    %v415 = vsub.s32 2, %v414
    %v416 = vrot.slane %v403, %v415
    %v420 = vld [vmem:[%s11] sm:$0x1]
    %v422 = vlaneseq
    %v423 = vshrl.u32 %v422, 7
    %v424 = vsub.s32 0, %v423
    %v425 = vrot.slane %v420, %v424
    %v427 = vld [vmem:[%s1] sm:$0xff]
    %s428 = scalar_lea.vmem %s1, 8
    %v429 = vld [vmem:[%s428] sm:$0xff]
    %v430 = vld [vmem:[#allocation2] sm:$0xff]
    %v431 = vld [vmem:[#allocation2 + $0x8] sm:$0xff]
    %v432 = vld [vmem:[#allocation2 + $0x10] sm:$0xff]
    %v433 = vld [vmem:[#allocation3] sm:$0xff]
    %v434 = vld [vmem:[#allocation3 + $0x8] sm:$0xff]
    %v435 = vld [vmem:[#allocation3 + $0x10] sm:$0xff]
    %v436 = vld [vmem:[#allocation3 + $0x18] sm:$0xff]
    %v437 = vld [vmem:[#allocation3 + $0x20] sm:$0xff]
    %v438 = vld [vmem:[#allocation3 + $0x28] sm:$0xff]
    %v439 = vld [vmem:[#allocation3 + $0x30] sm:$0xff]
    %v440 = vld [vmem:[#allocation3 + $0x38] sm:$0xff]
    %v441 = vld [vmem:[#allocation3 + $0x40] sm:$0xff]
    %v442 = vld [vmem:[#allocation3 + $0x48] sm:$0xff]
    %v443 = vld [vmem:[#allocation3 + $0x50] sm:$0xff]
    %v444 = vld [vmem:[#allocation3 + $0x58] sm:$0xff]
    %v445 = vld [vmem:[#allocation3 + $0x60] sm:$0xff]
    %v446 = vld [vmem:[#allocation3 + $0x68] sm:$0xff]
    %v447 = vld [vmem:[#allocation3 + $0x70] sm:$0xff]
    %v448 = vld [vmem:[#allocation3 + $0x78] sm:$0xff]
    %v449 = vld [vmem:[#allocation3 + $0x80] sm:$0xff]
    %v450 = vld [vmem:[#allocation3 + $0x88] sm:$0xff]
    %v451 = vld [vmem:[#allocation3 + $0x90] sm:$0xff]
    %v452 = vld [vmem:[#allocation3 + $0x98] sm:$0xff]
    %v453 = vld [vmem:[#allocation3 + $0xa0] sm:$0xff]
    %v454 = vld [vmem:[#allocation3 + $0xa8] sm:$0xff]
    %v455 = vld [vmem:[#allocation3 + $0xb0] sm:$0xff]
    %v456 = vld [vmem:[#allocation3 + $0xb8] sm:$0xff]
    %v457 = vld [vmem:[#allocation3 + $0xc0] sm:$0xff]
    %v458 = vld [vmem:[#allocation3 + $0xc8] sm:$0xff]
    %v459 = vld [vmem:[#allocation3 + $0xd0] sm:$0xff]
    %v460 = vld [vmem:[#allocation3 + $0xd8] sm:$0xff]
    %v461 = vld [vmem:[#allocation3 + $0xe0] sm:$0xff]
    %v462 = vld [vmem:[#allocation3 + $0xe8] sm:$0xff]
    %v463 = vld [vmem:[#allocation3 + $0xf0] sm:$0xff]
    %v464 = vld [vmem:[#allocation3 + $0xf8] sm:$0xff]
    %465 = vmatprep.subr.mxu0 %v434
    %466 = vmatpush1.msra.mxu0 %v433
    %467 = vmatprep.subr.mxu0 %v436
    %468 = vmatpush1.msra.mxu0 %v435
    %469 = vmatprep.subr.mxu0 %v438
    %470 = vmatpush1.msra.mxu0 %v437
    %471 = vmatprep.subr.mxu0 %v440
    %472 = vmatpush1.msra.mxu0 %v439
    %473 = vmatprep.subr.mxu0 %v442
    %474 = vmatpush1.msra.mxu0 %v441
    %475 = vmatprep.subr.mxu0 %v444
    %476 = vmatpush1.msra.mxu0 %v443
    %477 = vmatprep.subr.mxu0 %v446
    %478 = vmatpush1.msra.mxu0 %v445
    %479 = vmatprep.subr.mxu0 %v448
    %480 = vmatpush1.msra.mxu0 %v447
    %481 = vmatprep.subr.mxu0 %v450
    %482 = vmatpush1.msra.mxu0 %v449
    %483 = vmatprep.subr.mxu0 %v452
    %484 = vmatpush1.msra.mxu0 %v451
    %485 = vmatprep.subr.mxu0 %v454
    %486 = vmatpush1.msra.mxu0 %v453
    %487 = vmatprep.subr.mxu0 %v456
    %488 = vmatpush1.msra.mxu0 %v455
    %489 = vmatprep.subr.mxu0 %v458
    %490 = vmatpush1.msra.mxu0 %v457
    %491 = vmatprep.subr.mxu0 %v460
    %492 = vmatpush1.msra.mxu0 %v459
    %493 = vmatprep.subr.mxu0 %v462
    %494 = vmatpush1.msra.mxu0 %v461
    %495 = vmatprep.subr.mxu0 %v464
    %496 = vmatpush1.msra.mxu0 %v463
    %497 = vmatprep.subr.mxu0 0.0
    %498 = vmatpush1.msra.mxu0 0.0
    %499 = vmatprep.subr.mxu0 0.0
    %500 = vmatpush1.msra.mxu0 0.0
    %501 = vmatprep.subr.mxu0 0.0
    %502 = vmatpush1.msra.mxu0 0.0
    %503 = vmatprep.subr.mxu0 0.0
    %504 = vmatpush1.msra.mxu0 0.0
    %505 = vmatprep.subr.mxu0 0.0
    %506 = vmatpush1.msra.mxu0 0.0
    %507 = vmatprep.subr.mxu0 0.0
    %508 = vmatpush1.msra.mxu0 0.0
    %509 = vmatprep.subr.mxu0 0.0
    %510 = vmatpush1.msra.mxu0 0.0
    %511 = vmatprep.subr.mxu0 0.0
    %512 = vmatpush1.msra.mxu0 0.0
    %513 = vmatprep.subr.mxu0 0.0
    %514 = vmatpush1.msra.mxu0 0.0
    %515 = vmatprep.subr.mxu0 0.0
    %516 = vmatpush1.msra.mxu0 0.0
    %517 = vmatprep.subr.mxu0 0.0
    %518 = vmatpush1.msra.mxu0 0.0
    %519 = vmatprep.subr.mxu0 0.0
    %520 = vmatpush1.msra.mxu0 0.0
    %521 = vmatprep.subr.mxu0 0.0
    %522 = vmatpush1.msra.mxu0 0.0
    %523 = vmatprep.subr.mxu0 0.0
    %524 = vmatpush1.msra.mxu0 0.0
    %525 = vmatprep.subr.mxu0 0.0
    %526 = vmatpush1.msra.mxu0 0.0
    %527 = vmatprep.subr.mxu0 0.0
    %528 = vmatpush1.msra.mxu0 0.0
    %529 = vmatprep.mubr.f32.mxu0 0.0
    %530 = vmatmul.mubr.f32.gmra.mrb[0].mxu0 %v427
    %v531 = vpop.f32.mrb[0].mxu0
    %v532 = vadd.f32 0.0, %v531
    %v533 = vpop.f32.mrb[0].mxu0
    %v534 = vadd.f32 0.0, %v533
    %535 = vdwg.mxu0
    %v536 = vld [vmem:[#allocation6] sm:$0xff]
    %v537 = vld [vmem:[#allocation6 + $0x8] sm:$0xff]
    %v538 = vld [vmem:[#allocation6 + $0x10] sm:$0xff]
    %v539 = vld [vmem:[#allocation6 + $0x18] sm:$0xff]
    %v540 = vld [vmem:[#allocation6 + $0x20] sm:$0xff]
    %v541 = vld [vmem:[#allocation6 + $0x28] sm:$0xff]
    %v542 = vld [vmem:[#allocation6 + $0x30] sm:$0xff]
    %v543 = vld [vmem:[#allocation6 + $0x38] sm:$0xff]
    %v544 = vld [vmem:[#allocation6 + $0x40] sm:$0xff]
    %v545 = vld [vmem:[#allocation6 + $0x48] sm:$0xff]
    %v546 = vld [vmem:[#allocation6 + $0x50] sm:$0xff]
    %v547 = vld [vmem:[#allocation6 + $0x58] sm:$0xff]
    %v548 = vld [vmem:[#allocation6 + $0x60] sm:$0xff]
    %v549 = vld [vmem:[#allocation6 + $0x68] sm:$0xff]
    %v550 = vld [vmem:[#allocation6 + $0x70] sm:$0xff]
    %v551 = vld [vmem:[#allocation6 + $0x78] sm:$0xff]
    %v552 = vadd.f32 %v430, %v532
    %v553 = vxor.u32 %v552, 2147483648
    %v554 = vmul.f32 %v553, 1.442695
    %v555 = vpow.pop %v554
    %v556 = vadd.f32 %v555, 1.0
    %v557 = vrcp.pop %v556
    %v558 = vmul.f32 1.0, %v557
    %v559 = vadd.f32 %v431, %v534
    %v560 = vxor.u32 %v559, 2147483648
    %v561 = vmul.f32 %v560, 1.442695
    %v562 = vpow.pop %v561
    %v563 = vadd.f32 %v562, 1.0
    %v564 = vrcp.pop %v563
    %v565 = vmul.f32 1.0, %v564
    %566 = vmatprep.subr.mxu0 0.0
    %567 = vmatpush1.msra.mxu0 %v536
    %568 = vmatprep.subr.mxu0 0.0
    %569 = vmatpush1.msra.mxu0 %v537
    %570 = vmatprep.subr.mxu0 0.0
    %571 = vmatpush1.msra.mxu0 %v538
    %572 = vmatprep.subr.mxu0 0.0
    %573 = vmatpush1.msra.mxu0 %v539
    %574 = vmatprep.subr.mxu0 0.0
    %575 = vmatpush1.msra.mxu0 %v540
    %576 = vmatprep.subr.mxu0 0.0
    %577 = vmatpush1.msra.mxu0 %v541
    %578 = vmatprep.subr.mxu0 0.0
    %579 = vmatpush1.msra.mxu0 %v542
    %580 = vmatprep.subr.mxu0 0.0
    %581 = vmatpush1.msra.mxu0 %v543
    %582 = vmatprep.subr.mxu0 0.0
    %583 = vmatpush1.msra.mxu0 %v544
    %584 = vmatprep.subr.mxu0 0.0
    %585 = vmatpush1.msra.mxu0 %v545
    %586 = vmatprep.subr.mxu0 0.0
    %587 = vmatpush1.msra.mxu0 %v546
    %588 = vmatprep.subr.mxu0 0.0
    %589 = vmatpush1.msra.mxu0 %v547
    %590 = vmatprep.subr.mxu0 0.0
    %591 = vmatpush1.msra.mxu0 %v548
    %592 = vmatprep.subr.mxu0 0.0
    %593 = vmatpush1.msra.mxu0 %v549
    %594 = vmatprep.subr.mxu0 0.0
    %595 = vmatpush1.msra.mxu0 %v550
    %596 = vmatprep.subr.mxu0 0.0
    %597 = vmatpush1.msra.mxu0 %v551
    %598 = vmatprep.subr.mxu0 0.0
    %599 = vmatpush1.msra.mxu0 0.0
    %600 = vmatprep.subr.mxu0 0.0
    %601 = vmatpush1.msra.mxu0 0.0
    %602 = vmatprep.subr.mxu0 0.0
    %603 = vmatpush1.msra.mxu0 0.0
    %604 = vmatprep.subr.mxu0 0.0
    %605 = vmatpush1.msra.mxu0 0.0
    %606 = vmatprep.subr.mxu0 0.0
    %607 = vmatpush1.msra.mxu0 0.0
    %608 = vmatprep.subr.mxu0 0.0
    %609 = vmatpush1.msra.mxu0 0.0
    %610 = vmatprep.subr.mxu0 0.0
    %611 = vmatpush1.msra.mxu0 0.0
    %612 = vmatprep.subr.mxu0 0.0
    %613 = vmatpush1.msra.mxu0 0.0
    %614 = vmatprep.subr.mxu0 0.0
    %615 = vmatpush1.msra.mxu0 0.0
    %616 = vmatprep.subr.mxu0 0.0
    %617 = vmatpush1.msra.mxu0 0.0
    %618 = vmatprep.subr.mxu0 0.0
    %619 = vmatpush1.msra.mxu0 0.0
    %620 = vmatprep.subr.mxu0 0.0
    %621 = vmatpush1.msra.mxu0 0.0
    %622 = vmatprep.subr.mxu0 0.0
    %623 = vmatpush1.msra.mxu0 0.0
    %624 = vmatprep.subr.mxu0 0.0
    %625 = vmatpush1.msra.mxu0 0.0
    %626 = vmatprep.subr.mxu0 0.0
    %627 = vmatpush1.msra.mxu0 0.0
    %628 = vmatprep.subr.mxu0 0.0
    %629 = vmatpush1.msra.mxu0 0.0
    %630 = vmatprep.mubr.f32.mxu0 0.0
    %631 = vmatmul.mubr.f32.gmra.mrb[0].mxu0 %v427
    %v632 = vpop.f32.mrb[0].mxu0
    %v633 = vadd.f32 %v401, %v632
    %v634 = vpop.f32.mrb[0].mxu0
    %635 = vdwg.mxu0
    %v636 = vmul.f32 %v558, %v633
    %v637 = vadd.f32 %v432, %v636
    %v638 = vtanh.pop %v637
    %v639 = vsub.f32 %v427, %v638
    %v640 = vmul.f32 %v565, %v639
    %v641 = vadd.f32 %v638, %v640
    %v642 = vld [vmem:[#allocation2 + $0x18] sm:$0xff]
    %v643 = vld [vmem:[#allocation2 + $0x20] sm:$0xff]
    %v644 = vld [vmem:[#allocation2 + $0x28] sm:$0xff]
    %645 = vmatprep.subr.mxu0 %v434
    %646 = vmatpush1.msra.mxu0 %v433
    %647 = vmatprep.subr.mxu0 %v436
    %648 = vmatpush1.msra.mxu0 %v435
    %649 = vmatprep.subr.mxu0 %v438
    %650 = vmatpush1.msra.mxu0 %v437
    %651 = vmatprep.subr.mxu0 %v440
    %652 = vmatpush1.msra.mxu0 %v439
    %653 = vmatprep.subr.mxu0 %v442
    %654 = vmatpush1.msra.mxu0 %v441
    %655 = vmatprep.subr.mxu0 %v444
    %656 = vmatpush1.msra.mxu0 %v443
    %657 = vmatprep.subr.mxu0 %v446
    %658 = vmatpush1.msra.mxu0 %v445
    %659 = vmatprep.subr.mxu0 %v448
    %660 = vmatpush1.msra.mxu0 %v447
    %661 = vmatprep.subr.mxu0 %v450
    %662 = vmatpush1.msra.mxu0 %v449
    %663 = vmatprep.subr.mxu0 %v452
    %664 = vmatpush1.msra.mxu0 %v451
    %665 = vmatprep.subr.mxu0 %v454
    %666 = vmatpush1.msra.mxu0 %v453
    %667 = vmatprep.subr.mxu0 %v456
    %668 = vmatpush1.msra.mxu0 %v455
    %669 = vmatprep.subr.mxu0 %v458
    %670 = vmatpush1.msra.mxu0 %v457
    %671 = vmatprep.subr.mxu0 %v460
    %672 = vmatpush1.msra.mxu0 %v459
    %673 = vmatprep.subr.mxu0 %v462
    %674 = vmatpush1.msra.mxu0 %v461
    %675 = vmatprep.subr.mxu0 %v464
    %676 = vmatpush1.msra.mxu0 %v463
    %677 = vmatprep.subr.mxu0 0.0
    %678 = vmatpush1.msra.mxu0 0.0
    %679 = vmatprep.subr.mxu0 0.0
    %680 = vmatpush1.msra.mxu0 0.0
    %681 = vmatprep.subr.mxu0 0.0
    %682 = vmatpush1.msra.mxu0 0.0
    %683 = vmatprep.subr.mxu0 0.0
    %684 = vmatpush1.msra.mxu0 0.0
    %685 = vmatprep.subr.mxu0 0.0
    %686 = vmatpush1.msra.mxu0 0.0
    %687 = vmatprep.subr.mxu0 0.0
    %688 = vmatpush1.msra.mxu0 0.0
    %689 = vmatprep.subr.mxu0 0.0
    %690 = vmatpush1.msra.mxu0 0.0
    %691 = vmatprep.subr.mxu0 0.0
    %692 = vmatpush1.msra.mxu0 0.0
    %693 = vmatprep.subr.mxu0 0.0
    %694 = vmatpush1.msra.mxu0 0.0
    %695 = vmatprep.subr.mxu0 0.0
    %696 = vmatpush1.msra.mxu0 0.0
    %697 = vmatprep.subr.mxu0 0.0
    %698 = vmatpush1.msra.mxu0 0.0
    %699 = vmatprep.subr.mxu0 0.0
    %700 = vmatpush1.msra.mxu0 0.0
    %701 = vmatprep.subr.mxu0 0.0
    %702 = vmatpush1.msra.mxu0 0.0
    %703 = vmatprep.subr.mxu0 0.0
    %704 = vmatpush1.msra.mxu0 0.0
    %705 = vmatprep.subr.mxu0 0.0
    %706 = vmatpush1.msra.mxu0 0.0
    %707 = vmatprep.subr.mxu0 0.0
    %708 = vmatpush1.msra.mxu0 0.0
    %709 = vmatprep.mubr.f32.mxu0 0.0
    %710 = vmatmul.mubr.f32.gmra.mrb[0].mxu0 %v641
    %v711 = vpop.f32.mrb[0].mxu0
    %v712 = vadd.f32 0.0, %v711
    %v713 = vpop.f32.mrb[0].mxu0
    %v714 = vadd.f32 0.0, %v713
    %715 = vdwg.mxu0
    %v716 = vadd.f32 %v642, %v712
    %v717 = vxor.u32 %v716, 2147483648
    %v718 = vmul.f32 %v717, 1.442695
    %v719 = vpow.pop %v718
    %v720 = vadd.f32 %v719, 1.0
    %v721 = vrcp.pop %v720
    %v722 = vmul.f32 1.0, %v721
    %v723 = vadd.f32 %v643, %v714
    %v724 = vxor.u32 %v723, 2147483648
    %v725 = vmul.f32 %v724, 1.442695
    %v726 = vpow.pop %v725
    %v727 = vadd.f32 %v726, 1.0
    %v728 = vrcp.pop %v727
    %v729 = vmul.f32 1.0, %v728
    %730 = vmatprep.subr.mxu0 0.0
    %731 = vmatpush1.msra.mxu0 %v536
    %732 = vmatprep.subr.mxu0 0.0
    %733 = vmatpush1.msra.mxu0 %v537
    %734 = vmatprep.subr.mxu0 0.0
    %735 = vmatpush1.msra.mxu0 %v538
    %736 = vmatprep.subr.mxu0 0.0
    %737 = vmatpush1.msra.mxu0 %v539
    %738 = vmatprep.subr.mxu0 0.0
    %739 = vmatpush1.msra.mxu0 %v540
    %740 = vmatprep.subr.mxu0 0.0
    %741 = vmatpush1.msra.mxu0 %v541
    %742 = vmatprep.subr.mxu0 0.0
    %743 = vmatpush1.msra.mxu0 %v542
    %744 = vmatprep.subr.mxu0 0.0
    %745 = vmatpush1.msra.mxu0 %v543
    %746 = vmatprep.subr.mxu0 0.0
    %747 = vmatpush1.msra.mxu0 %v544
    %748 = vmatprep.subr.mxu0 0.0
    %749 = vmatpush1.msra.mxu0 %v545
    %750 = vmatprep.subr.mxu0 0.0
    %751 = vmatpush1.msra.mxu0 %v546
    %752 = vmatprep.subr.mxu0 0.0
    %753 = vmatpush1.msra.mxu0 %v547
    %754 = vmatprep.subr.mxu0 0.0
    %755 = vmatpush1.msra.mxu0 %v548
    %756 = vmatprep.subr.mxu0 0.0
    %757 = vmatpush1.msra.mxu0 %v549
    %758 = vmatprep.subr.mxu0 0.0
    %759 = vmatpush1.msra.mxu0 %v550
    %760 = vmatprep.subr.mxu0 0.0
    %761 = vmatpush1.msra.mxu0 %v551
    %762 = vmatprep.subr.mxu0 0.0
    %763 = vmatpush1.msra.mxu0 0.0
    %764 = vmatprep.subr.mxu0 0.0
    %765 = vmatpush1.msra.mxu0 0.0
    %766 = vmatprep.subr.mxu0 0.0
    %767 = vmatpush1.msra.mxu0 0.0
    %768 = vmatprep.subr.mxu0 0.0
    %769 = vmatpush1.msra.mxu0 0.0
    %770 = vmatprep.subr.mxu0 0.0
    %771 = vmatpush1.msra.mxu0 0.0
    %772 = vmatprep.subr.mxu0 0.0
    %773 = vmatpush1.msra.mxu0 0.0
    %774 = vmatprep.subr.mxu0 0.0
    %775 = vmatpush1.msra.mxu0 0.0
    %776 = vmatprep.subr.mxu0 0.0
    %777 = vmatpush1.msra.mxu0 0.0
    %778 = vmatprep.subr.mxu0 0.0
    %779 = vmatpush1.msra.mxu0 0.0
    %780 = vmatprep.subr.mxu0 0.0
    %781 = vmatpush1.msra.mxu0 0.0
    %782 = vmatprep.subr.mxu0 0.0
    %783 = vmatpush1.msra.mxu0 0.0
    %784 = vmatprep.subr.mxu0 0.0
    %785 = vmatpush1.msra.mxu0 0.0
    %786 = vmatprep.subr.mxu0 0.0
    %787 = vmatpush1.msra.mxu0 0.0
    %788 = vmatprep.subr.mxu0 0.0
    %789 = vmatpush1.msra.mxu0 0.0
    %790 = vmatprep.subr.mxu0 0.0
    %791 = vmatpush1.msra.mxu0 0.0
    %792 = vmatprep.subr.mxu0 0.0
    %793 = vmatpush1.msra.mxu0 0.0
    %794 = vmatprep.mubr.f32.mxu0 0.0
    %795 = vmatmul.mubr.f32.gmra.mrb[0].mxu0 %v641
    %v796 = vpop.f32.mrb[0].mxu0
    %v797 = vadd.f32 %v401, %v796
    %v798 = vpop.f32.mrb[0].mxu0
    %799 = vdwg.mxu0
    %v800 = vmul.f32 %v722, %v797
    %v801 = vadd.f32 %v644, %v800
    %v802 = vtanh.pop %v801
    %v803 = vsub.f32 %v641, %v802
    %v804 = vmul.f32 %v729, %v803
    %v805 = vadd.f32 %v802, %v804
    %v806 = vld [vmem:[#allocation8] sm:$0xff]
    %v807 = vld [vmem:[#allocation8 + $0x8] sm:$0xff]
    %v808 = vld [vmem:[#allocation8 + $0x10] sm:$0xff]
    %v809 = vld [vmem:[#allocation8 + $0x18] sm:$0xff]
    %v810 = vld [vmem:[#allocation8 + $0x20] sm:$0xff]
    %v811 = vld [vmem:[#allocation8 + $0x28] sm:$0xff]
    %v812 = vld [vmem:[#allocation8 + $0x30] sm:$0xff]
    %v813 = vld [vmem:[#allocation8 + $0x38] sm:$0xff]
    %v814 = vld [vmem:[#allocation8 + $0x40] sm:$0xff]
    %v815 = vld [vmem:[#allocation8 + $0x48] sm:$0xff]
    %v816 = vld [vmem:[#allocation8 + $0x50] sm:$0xff]
    %v817 = vld [vmem:[#allocation8 + $0x58] sm:$0xff]
    %v818 = vld [vmem:[#allocation8 + $0x60] sm:$0xff]
    %v819 = vld [vmem:[#allocation8 + $0x68] sm:$0xff]
    %v820 = vld [vmem:[#allocation8 + $0x70] sm:$0xff]
    %v821 = vld [vmem:[#allocation8 + $0x78] sm:$0xff]
    %v822 = vld [vmem:[#allocation8 + $0x80] sm:$0xff]
    %v823 = vld [vmem:[#allocation8 + $0x88] sm:$0xff]
    %v824 = vld [vmem:[#allocation8 + $0x90] sm:$0xff]
    %v825 = vld [vmem:[#allocation8 + $0x98] sm:$0xff]
    %v826 = vld [vmem:[#allocation8 + $0xa0] sm:$0xff]
    %v827 = vld [vmem:[#allocation8 + $0xa8] sm:$0xff]
    %v828 = vld [vmem:[#allocation8 + $0xb0] sm:$0xff]
    %v829 = vld [vmem:[#allocation8 + $0xb8] sm:$0xff]
    %v830 = vld [vmem:[#allocation8 + $0xc0] sm:$0xff]
    %v831 = vld [vmem:[#allocation8 + $0xc8] sm:$0xff]
    %v832 = vld [vmem:[#allocation8 + $0xd0] sm:$0xff]
    %v833 = vld [vmem:[#allocation8 + $0xd8] sm:$0xff]
    %v834 = vld [vmem:[#allocation8 + $0xe0] sm:$0xff]
    %v835 = vld [vmem:[#allocation8 + $0xe8] sm:$0xff]
    %v836 = vld [vmem:[#allocation8 + $0xf0] sm:$0xff]
    %v837 = vld [vmem:[#allocation8 + $0xf8] sm:$0xff]
    %v838 = vld [vmem:[#allocation8 + $0x100] sm:$0xff]
    %v839 = vld [vmem:[#allocation8 + $0x108] sm:$0xff]
    %v840 = vld [vmem:[#allocation8 + $0x110] sm:$0xff]
    %v841 = vld [vmem:[#allocation8 + $0x118] sm:$0xff]
    %v842 = vld [vmem:[#allocation8 + $0x120] sm:$0xff]
    %v843 = vld [vmem:[#allocation8 + $0x128] sm:$0xff]
    %v844 = vld [vmem:[#allocation8 + $0x130] sm:$0xff]
    %v845 = vld [vmem:[#allocation8 + $0x138] sm:$0xff]
    %v846 = vld [vmem:[#allocation8 + $0x140] sm:$0xff]
    %v847 = vld [vmem:[#allocation8 + $0x148] sm:$0xff]
    %v848 = vld [vmem:[#allocation8 + $0x150] sm:$0xff]
    %v849 = vld [vmem:[#allocation8 + $0x158] sm:$0xff]
    %v850 = vld [vmem:[#allocation8 + $0x160] sm:$0xff]
    %v851 = vld [vmem:[#allocation8 + $0x168] sm:$0xff]
    %v852 = vld [vmem:[#allocation8 + $0x170] sm:$0xff]
    %v853 = vld [vmem:[#allocation8 + $0x178] sm:$0xff]
    %854 = vmatprep.subr.mxu0 %v807
    %855 = vmatpush1.msra.mxu0 %v806
    %856 = vmatprep.subr.mxu0 %v810
    %857 = vmatpush1.msra.mxu0 %v809
    %858 = vmatprep.subr.mxu0 %v813
    %859 = vmatpush1.msra.mxu0 %v812
    %860 = vmatprep.subr.mxu0 %v816
    %861 = vmatpush1.msra.mxu0 %v815
    %862 = vmatprep.subr.mxu0 %v819
    %863 = vmatpush1.msra.mxu0 %v818
    %864 = vmatprep.subr.mxu0 %v822
    %865 = vmatpush1.msra.mxu0 %v821
    %866 = vmatprep.subr.mxu0 %v825
    %867 = vmatpush1.msra.mxu0 %v824
    %868 = vmatprep.subr.mxu0 %v828
    %869 = vmatpush1.msra.mxu0 %v827
    %870 = vmatprep.subr.mxu0 %v831
    %871 = vmatpush1.msra.mxu0 %v830
    %872 = vmatprep.subr.mxu0 %v834
    %873 = vmatpush1.msra.mxu0 %v833
    %874 = vmatprep.subr.mxu0 %v837
    %875 = vmatpush1.msra.mxu0 %v836
    %876 = vmatprep.subr.mxu0 %v840
    %877 = vmatpush1.msra.mxu0 %v839
    %878 = vmatprep.subr.mxu0 %v843
    %879 = vmatpush1.msra.mxu0 %v842
    %880 = vmatprep.subr.mxu0 %v846
    %881 = vmatpush1.msra.mxu0 %v845
    %882 = vmatprep.subr.mxu0 %v849
    %883 = vmatpush1.msra.mxu0 %v848
    %884 = vmatprep.subr.mxu0 %v852
    %885 = vmatpush1.msra.mxu0 %v851
    %886 = vmatprep.subr.mxu0 0.0
    %887 = vmatpush1.msra.mxu0 0.0
    %888 = vmatprep.subr.mxu0 0.0
    %889 = vmatpush1.msra.mxu0 0.0
    %890 = vmatprep.subr.mxu0 0.0
    %891 = vmatpush1.msra.mxu0 0.0
    %892 = vmatprep.subr.mxu0 0.0
    %893 = vmatpush1.msra.mxu0 0.0
    %894 = vmatprep.subr.mxu0 0.0
    %895 = vmatpush1.msra.mxu0 0.0
    %896 = vmatprep.subr.mxu0 0.0
    %897 = vmatpush1.msra.mxu0 0.0
    %898 = vmatprep.subr.mxu0 0.0
    %899 = vmatpush1.msra.mxu0 0.0
    %900 = vmatprep.subr.mxu0 0.0
    %901 = vmatpush1.msra.mxu0 0.0
    %902 = vmatprep.subr.mxu0 0.0
    %903 = vmatpush1.msra.mxu0 0.0
    %904 = vmatprep.subr.mxu0 0.0
    %905 = vmatpush1.msra.mxu0 0.0
    %906 = vmatprep.subr.mxu0 0.0
    %907 = vmatpush1.msra.mxu0 0.0
    %908 = vmatprep.subr.mxu0 0.0
    %909 = vmatpush1.msra.mxu0 0.0
    %910 = vmatprep.subr.mxu0 0.0
    %911 = vmatpush1.msra.mxu0 0.0
    %912 = vmatprep.subr.mxu0 0.0
    %913 = vmatpush1.msra.mxu0 0.0
    %914 = vmatprep.subr.mxu0 0.0
    %915 = vmatpush1.msra.mxu0 0.0
    %916 = vmatprep.subr.mxu0 0.0
    %917 = vmatpush1.msra.mxu0 0.0
    %918 = vmatprep.mubr.f32.mxu0 0.0
    %919 = vmatmul.mubr.f32.gmra.mrb[0].mxu0 %v641
    %v920 = vpop.f32.mrb[0].mxu0
    %v921 = vadd.f32 %v408, %v920
    %v922 = vpop.f32.mrb[0].mxu0
    %v923 = vadd.f32 %v412, %v922
    %924 = vdwg.mxu0
    %925 = vmatprep.subr.mxu0 0.0
    %926 = vmatpush1.msra.mxu0 %v808
    %927 = vmatprep.subr.mxu0 0.0
    %928 = vmatpush1.msra.mxu0 %v811
    %929 = vmatprep.subr.mxu0 0.0
    %930 = vmatpush1.msra.mxu0 %v814
    %931 = vmatprep.subr.mxu0 0.0
    %932 = vmatpush1.msra.mxu0 %v817
    %933 = vmatprep.subr.mxu0 0.0
    %934 = vmatpush1.msra.mxu0 %v820
    %935 = vmatprep.subr.mxu0 0.0
    %936 = vmatpush1.msra.mxu0 %v823
    %937 = vmatprep.subr.mxu0 0.0
    %938 = vmatpush1.msra.mxu0 %v826
    %939 = vmatprep.subr.mxu0 0.0
    %940 = vmatpush1.msra.mxu0 %v829
    %941 = vmatprep.subr.mxu0 0.0
    %942 = vmatpush1.msra.mxu0 %v832
    %943 = vmatprep.subr.mxu0 0.0
    %944 = vmatpush1.msra.mxu0 %v835
    %945 = vmatprep.subr.mxu0 0.0
    %946 = vmatpush1.msra.mxu0 %v838
    %947 = vmatprep.subr.mxu0 0.0
    %948 = vmatpush1.msra.mxu0 %v841
    %949 = vmatprep.subr.mxu0 0.0
    %950 = vmatpush1.msra.mxu0 %v844
    %951 = vmatprep.subr.mxu0 0.0
    %952 = vmatpush1.msra.mxu0 %v847
    %953 = vmatprep.subr.mxu0 0.0
    %954 = vmatpush1.msra.mxu0 %v850
    %955 = vmatprep.subr.mxu0 0.0
    %956 = vmatpush1.msra.mxu0 %v853
    %957 = vmatprep.subr.mxu0 0.0
    %958 = vmatpush1.msra.mxu0 0.0
    %959 = vmatprep.subr.mxu0 0.0
    %960 = vmatpush1.msra.mxu0 0.0
    %961 = vmatprep.subr.mxu0 0.0
    %962 = vmatpush1.msra.mxu0 0.0
    %963 = vmatprep.subr.mxu0 0.0
    %964 = vmatpush1.msra.mxu0 0.0
    %965 = vmatprep.subr.mxu0 0.0
    %966 = vmatpush1.msra.mxu0 0.0
    %967 = vmatprep.subr.mxu0 0.0
    %968 = vmatpush1.msra.mxu0 0.0
    %969 = vmatprep.subr.mxu0 0.0
    %970 = vmatpush1.msra.mxu0 0.0
    %971 = vmatprep.subr.mxu0 0.0
    %972 = vmatpush1.msra.mxu0 0.0
    %973 = vmatprep.subr.mxu0 0.0
    %974 = vmatpush1.msra.mxu0 0.0
    %975 = vmatprep.subr.mxu0 0.0
    %976 = vmatpush1.msra.mxu0 0.0
    %977 = vmatprep.subr.mxu0 0.0
    %978 = vmatpush1.msra.mxu0 0.0
    %979 = vmatprep.subr.mxu0 0.0
    %980 = vmatpush1.msra.mxu0 0.0
    %981 = vmatprep.subr.mxu0 0.0
    %982 = vmatpush1.msra.mxu0 0.0
    %983 = vmatprep.subr.mxu0 0.0
    %984 = vmatpush1.msra.mxu0 0.0
    %985 = vmatprep.subr.mxu0 0.0
    %986 = vmatpush1.msra.mxu0 0.0
    %987 = vmatprep.subr.mxu0 0.0
    %988 = vmatpush1.msra.mxu0 0.0
    %989 = vmatprep.mubr.f32.mxu0 0.0
    %990 = vmatmul.mubr.f32.gmra.mrb[0].mxu0 %v641
    %v991 = vpop.f32.mrb[0].mxu0
    %v992 = vadd.f32 %v416, %v991
    %v993 = vpop.f32.mrb[0].mxu0
    %994 = vdwg.mxu0
    %v995 = vld [vmem:[#allocation9] sm:$0xff]
    %v996 = vld [vmem:[#allocation9 + $0x8] sm:$0xff]
    %v997 = vld [vmem:[#allocation9 + $0x10] sm:$0xff]
    %v998 = vld [vmem:[#allocation9 + $0x18] sm:$0xff]
    %v999 = vld [vmem:[#allocation9 + $0x20] sm:$0xff]
    %v1000 = vld [vmem:[#allocation9 + $0x28] sm:$0xff]
    %v1001 = vld [vmem:[#allocation9 + $0x30] sm:$0xff]
    %v1002 = vld [vmem:[#allocation9 + $0x38] sm:$0xff]
    %v1003 = vld [vmem:[#allocation9 + $0x40] sm:$0xff]
    %v1004 = vld [vmem:[#allocation9 + $0x48] sm:$0xff]
    %v1005 = vld [vmem:[#allocation9 + $0x50] sm:$0xff]
    %v1006 = vld [vmem:[#allocation9 + $0x58] sm:$0xff]
    %v1007 = vld [vmem:[#allocation9 + $0x60] sm:$0xff]
    %v1008 = vld [vmem:[#allocation9 + $0x68] sm:$0xff]
    %v1009 = vld [vmem:[#allocation9 + $0x70] sm:$0xff]
    %v1010 = vld [vmem:[#allocation9 + $0x78] sm:$0xff]
    %v1011 = vld [vmem:[#allocation9 + $0x80] sm:$0xff]
    %v1012 = vld [vmem:[#allocation9 + $0x88] sm:$0xff]
    %v1013 = vld [vmem:[#allocation9 + $0x90] sm:$0xff]
    %v1014 = vld [vmem:[#allocation9 + $0x98] sm:$0xff]
    %v1015 = vld [vmem:[#allocation9 + $0xa0] sm:$0xff]
    %v1016 = vld [vmem:[#allocation9 + $0xa8] sm:$0xff]
    %v1017 = vld [vmem:[#allocation9 + $0xb0] sm:$0xff]
    %v1018 = vld [vmem:[#allocation9 + $0xb8] sm:$0xff]
    %v1019 = vld [vmem:[#allocation9 + $0xc0] sm:$0xff]
    %v1020 = vld [vmem:[#allocation9 + $0xc8] sm:$0xff]
    %v1021 = vld [vmem:[#allocation9 + $0xd0] sm:$0xff]
    %v1022 = vld [vmem:[#allocation9 + $0xd8] sm:$0xff]
    %v1023 = vld [vmem:[#allocation9 + $0xe0] sm:$0xff]
    %v1024 = vld [vmem:[#allocation9 + $0xe8] sm:$0xff]
    %v1025 = vld [vmem:[#allocation9 + $0xf0] sm:$0xff]
    %v1026 = vld [vmem:[#allocation9 + $0xf8] sm:$0xff]
    %1027 = vmatprep.subr.mxu0 %v996
    %1028 = vmatpush1.msra.mxu0 %v995
    %1029 = vmatprep.subr.mxu0 %v998
    %1030 = vmatpush1.msra.mxu0 %v997
    %1031 = vmatprep.subr.mxu0 %v1000
    %1032 = vmatpush1.msra.mxu0 %v999
    %1033 = vmatprep.subr.mxu0 %v1002
    %1034 = vmatpush1.msra.mxu0 %v1001
    %1035 = vmatprep.subr.mxu0 %v1004
    %1036 = vmatpush1.msra.mxu0 %v1003
    %1037 = vmatprep.subr.mxu0 %v1006
    %1038 = vmatpush1.msra.mxu0 %v1005
    %1039 = vmatprep.subr.mxu0 %v1008
    %1040 = vmatpush1.msra.mxu0 %v1007
    %1041 = vmatprep.subr.mxu0 %v1010
    %1042 = vmatpush1.msra.mxu0 %v1009
    %1043 = vmatprep.subr.mxu0 %v1012
    %1044 = vmatpush1.msra.mxu0 %v1011
    %1045 = vmatprep.subr.mxu0 %v1014
    %1046 = vmatpush1.msra.mxu0 %v1013
    %1047 = vmatprep.subr.mxu0 %v1016
    %1048 = vmatpush1.msra.mxu0 %v1015
    %1049 = vmatprep.subr.mxu0 %v1018
    %1050 = vmatpush1.msra.mxu0 %v1017
    %1051 = vmatprep.subr.mxu0 %v1020
    %1052 = vmatpush1.msra.mxu0 %v1019
    %1053 = vmatprep.subr.mxu0 %v1022
    %1054 = vmatpush1.msra.mxu0 %v1021
    %1055 = vmatprep.subr.mxu0 %v1024
    %1056 = vmatpush1.msra.mxu0 %v1023
    %1057 = vmatprep.subr.mxu0 %v1026
    %1058 = vmatpush1.msra.mxu0 %v1025
    %1059 = vmatprep.subr.mxu0 0.0
    %1060 = vmatpush1.msra.mxu0 0.0
    %1061 = vmatprep.subr.mxu0 0.0
    %1062 = vmatpush1.msra.mxu0 0.0
    %1063 = vmatprep.subr.mxu0 0.0
    %1064 = vmatpush1.msra.mxu0 0.0
    %1065 = vmatprep.subr.mxu0 0.0
    %1066 = vmatpush1.msra.mxu0 0.0
    %1067 = vmatprep.subr.mxu0 0.0
    %1068 = vmatpush1.msra.mxu0 0.0
    %1069 = vmatprep.subr.mxu0 0.0
    %1070 = vmatpush1.msra.mxu0 0.0
    %1071 = vmatprep.subr.mxu0 0.0
    %1072 = vmatpush1.msra.mxu0 0.0
    %1073 = vmatprep.subr.mxu0 0.0
    %1074 = vmatpush1.msra.mxu0 0.0
    %1075 = vmatprep.subr.mxu0 0.0
    %1076 = vmatpush1.msra.mxu0 0.0
    %1077 = vmatprep.subr.mxu0 0.0
    %1078 = vmatpush1.msra.mxu0 0.0
    %1079 = vmatprep.subr.mxu0 0.0
    %1080 = vmatpush1.msra.mxu0 0.0
    %1081 = vmatprep.subr.mxu0 0.0
    %1082 = vmatpush1.msra.mxu0 0.0
    %1083 = vmatprep.subr.mxu0 0.0
    %1084 = vmatpush1.msra.mxu0 0.0
    %1085 = vmatprep.subr.mxu0 0.0
    %1086 = vmatpush1.msra.mxu0 0.0
    %1087 = vmatprep.subr.mxu0 0.0
    %1088 = vmatpush1.msra.mxu0 0.0
    %1089 = vmatprep.subr.mxu0 0.0
    %1090 = vmatpush1.msra.mxu0 0.0
    %1091 = vmatprep.mubr.f32.mxu0 0.0
    %1092 = vmatmul.mubr.f32.gmra.mrb[0].mxu0 %v429
    %v1093 = vpop.f32.mrb[0].mxu0
    %v1094 = vadd.f32 0.0, %v1093
    %v1095 = vpop.f32.mrb[0].mxu0
    %v1096 = vadd.f32 0.0, %v1095
    %1097 = vdwg.mxu0
    %v1098 = vld [vmem:[#allocation11] sm:$0xff]
    %v1099 = vld [vmem:[#allocation11 + $0x8] sm:$0xff]
    %v1100 = vld [vmem:[#allocation11 + $0x10] sm:$0xff]
    %v1101 = vld [vmem:[#allocation11 + $0x18] sm:$0xff]
    %v1102 = vld [vmem:[#allocation11 + $0x20] sm:$0xff]
    %v1103 = vld [vmem:[#allocation11 + $0x28] sm:$0xff]
    %v1104 = vld [vmem:[#allocation11 + $0x30] sm:$0xff]
    %v1105 = vld [vmem:[#allocation11 + $0x38] sm:$0xff]
    %v1106 = vld [vmem:[#allocation11 + $0x40] sm:$0xff]
    %v1107 = vld [vmem:[#allocation11 + $0x48] sm:$0xff]
    %v1108 = vld [vmem:[#allocation11 + $0x50] sm:$0xff]
    %v1109 = vld [vmem:[#allocation11 + $0x58] sm:$0xff]
    %v1110 = vld [vmem:[#allocation11 + $0x60] sm:$0xff]
    %v1111 = vld [vmem:[#allocation11 + $0x68] sm:$0xff]
    %v1112 = vld [vmem:[#allocation11 + $0x70] sm:$0xff]
    %v1113 = vld [vmem:[#allocation11 + $0x78] sm:$0xff]
    %v1114 = vadd.f32 %v921, %v1094
    %v1115 = vxor.u32 %v1114, 2147483648
    %v1116 = vmul.f32 %v1115, 1.442695
    %v1117 = vpow.pop %v1116
    %v1118 = vadd.f32 %v1117, 1.0
    %v1119 = vrcp.pop %v1118
    %v1120 = vmul.f32 1.0, %v1119
    %v1121 = vadd.f32 %v923, %v1096
    %v1122 = vxor.u32 %v1121, 2147483648
    %v1123 = vmul.f32 %v1122, 1.442695
    %v1124 = vpow.pop %v1123
    %v1125 = vadd.f32 %v1124, 1.0
    %v1126 = vrcp.pop %v1125
    %v1127 = vmul.f32 1.0, %v1126
    %1128 = vmatprep.subr.mxu0 0.0
    %1129 = vmatpush1.msra.mxu0 %v1098
    %1130 = vmatprep.subr.mxu0 0.0
    %1131 = vmatpush1.msra.mxu0 %v1099
    %1132 = vmatprep.subr.mxu0 0.0
    %1133 = vmatpush1.msra.mxu0 %v1100
    %1134 = vmatprep.subr.mxu0 0.0
    %1135 = vmatpush1.msra.mxu0 %v1101
    %1136 = vmatprep.subr.mxu0 0.0
    %1137 = vmatpush1.msra.mxu0 %v1102
    %1138 = vmatprep.subr.mxu0 0.0
    %1139 = vmatpush1.msra.mxu0 %v1103
    %1140 = vmatprep.subr.mxu0 0.0
    %1141 = vmatpush1.msra.mxu0 %v1104
    %1142 = vmatprep.subr.mxu0 0.0
    %1143 = vmatpush1.msra.mxu0 %v1105
    %1144 = vmatprep.subr.mxu0 0.0
    %1145 = vmatpush1.msra.mxu0 %v1106
    %1146 = vmatprep.subr.mxu0 0.0
    %1147 = vmatpush1.msra.mxu0 %v1107
    %1148 = vmatprep.subr.mxu0 0.0
    %1149 = vmatpush1.msra.mxu0 %v1108
    %1150 = vmatprep.subr.mxu0 0.0
    %1151 = vmatpush1.msra.mxu0 %v1109
    %1152 = vmatprep.subr.mxu0 0.0
    %1153 = vmatpush1.msra.mxu0 %v1110
    %1154 = vmatprep.subr.mxu0 0.0
    %1155 = vmatpush1.msra.mxu0 %v1111
    %1156 = vmatprep.subr.mxu0 0.0
    %1157 = vmatpush1.msra.mxu0 %v1112
    %1158 = vmatprep.subr.mxu0 0.0
    %1159 = vmatpush1.msra.mxu0 %v1113
    %1160 = vmatprep.subr.mxu0 0.0
    %1161 = vmatpush1.msra.mxu0 0.0
    %1162 = vmatprep.subr.mxu0 0.0
    %1163 = vmatpush1.msra.mxu0 0.0
    %1164 = vmatprep.subr.mxu0 0.0
    %1165 = vmatpush1.msra.mxu0 0.0
    %1166 = vmatprep.subr.mxu0 0.0
    %1167 = vmatpush1.msra.mxu0 0.0
    %1168 = vmatprep.subr.mxu0 0.0
    %1169 = vmatpush1.msra.mxu0 0.0
    %1170 = vmatprep.subr.mxu0 0.0
    %1171 = vmatpush1.msra.mxu0 0.0
    %1172 = vmatprep.subr.mxu0 0.0
    %1173 = vmatpush1.msra.mxu0 0.0
    %1174 = vmatprep.subr.mxu0 0.0
    %1175 = vmatpush1.msra.mxu0 0.0
    %1176 = vmatprep.subr.mxu0 0.0
    %1177 = vmatpush1.msra.mxu0 0.0
    %1178 = vmatprep.subr.mxu0 0.0
    %1179 = vmatpush1.msra.mxu0 0.0
    %1180 = vmatprep.subr.mxu0 0.0
    %1181 = vmatpush1.msra.mxu0 0.0
    %1182 = vmatprep.subr.mxu0 0.0
    %1183 = vmatpush1.msra.mxu0 0.0
    %1184 = vmatprep.subr.mxu0 0.0
    %1185 = vmatpush1.msra.mxu0 0.0
    %1186 = vmatprep.subr.mxu0 0.0
    %1187 = vmatpush1.msra.mxu0 0.0
    %1188 = vmatprep.subr.mxu0 0.0
    %1189 = vmatpush1.msra.mxu0 0.0
    %1190 = vmatprep.subr.mxu0 0.0
    %1191 = vmatpush1.msra.mxu0 0.0
    %1192 = vmatprep.mubr.f32.mxu0 0.0
    %1193 = vmatmul.mubr.f32.gmra.mrb[0].mxu0 %v429
    %v1194 = vpop.f32.mrb[0].mxu0
    %v1195 = vadd.f32 %v425, %v1194
    %v1196 = vpop.f32.mrb[0].mxu0
    %1197 = vdwg.mxu0
    %v1198 = vmul.f32 %v1120, %v1195
    %v1199 = vadd.f32 %v992, %v1198
    %v1200 = vtanh.pop %v1199
    %v1201 = vsub.f32 %v429, %v1200
    %v1202 = vmul.f32 %v1127, %v1201
    %v1203 = vadd.f32 %v1200, %v1202
    %v1204 = vld [vmem:[#allocation2 + $0x30] sm:$0xff]
    %v1205 = vld [vmem:[#allocation2 + $0x38] sm:$0xff]
    %v1206 = vld [vmem:[#allocation2 + $0x40] sm:$0xff]
    %1207 = vmatprep.subr.mxu0 %v434
    %1208 = vmatpush1.msra.mxu0 %v433
    %1209 = vmatprep.subr.mxu0 %v436
    %1210 = vmatpush1.msra.mxu0 %v435
    %1211 = vmatprep.subr.mxu0 %v438
    %1212 = vmatpush1.msra.mxu0 %v437
    %1213 = vmatprep.subr.mxu0 %v440
    %1214 = vmatpush1.msra.mxu0 %v439
    %1215 = vmatprep.subr.mxu0 %v442
    %1216 = vmatpush1.msra.mxu0 %v441
    %1217 = vmatprep.subr.mxu0 %v444
    %1218 = vmatpush1.msra.mxu0 %v443
    %1219 = vmatprep.subr.mxu0 %v446
    %1220 = vmatpush1.msra.mxu0 %v445
    %1221 = vmatprep.subr.mxu0 %v448
    %1222 = vmatpush1.msra.mxu0 %v447
    %1223 = vmatprep.subr.mxu0 %v450
    %1224 = vmatpush1.msra.mxu0 %v449
    %1225 = vmatprep.subr.mxu0 %v452
    %1226 = vmatpush1.msra.mxu0 %v451
    %1227 = vmatprep.subr.mxu0 %v454
    %1228 = vmatpush1.msra.mxu0 %v453
    %1229 = vmatprep.subr.mxu0 %v456
    %1230 = vmatpush1.msra.mxu0 %v455
    %1231 = vmatprep.subr.mxu0 %v458
    %1232 = vmatpush1.msra.mxu0 %v457
    %1233 = vmatprep.subr.mxu0 %v460
    %1234 = vmatpush1.msra.mxu0 %v459
    %1235 = vmatprep.subr.mxu0 %v462
    %1236 = vmatpush1.msra.mxu0 %v461
    %1237 = vmatprep.subr.mxu0 %v464
    %1238 = vmatpush1.msra.mxu0 %v463
    %1239 = vmatprep.subr.mxu0 0.0
    %1240 = vmatpush1.msra.mxu0 0.0
    %1241 = vmatprep.subr.mxu0 0.0
    %1242 = vmatpush1.msra.mxu0 0.0
    %1243 = vmatprep.subr.mxu0 0.0
    %1244 = vmatpush1.msra.mxu0 0.0
    %1245 = vmatprep.subr.mxu0 0.0
    %1246 = vmatpush1.msra.mxu0 0.0
    %1247 = vmatprep.subr.mxu0 0.0
    %1248 = vmatpush1.msra.mxu0 0.0
    %1249 = vmatprep.subr.mxu0 0.0
    %1250 = vmatpush1.msra.mxu0 0.0
    %1251 = vmatprep.subr.mxu0 0.0
    %1252 = vmatpush1.msra.mxu0 0.0
    %1253 = vmatprep.subr.mxu0 0.0
    %1254 = vmatpush1.msra.mxu0 0.0
    %1255 = vmatprep.subr.mxu0 0.0
    %1256 = vmatpush1.msra.mxu0 0.0
    %1257 = vmatprep.subr.mxu0 0.0
    %1258 = vmatpush1.msra.mxu0 0.0
    %1259 = vmatprep.subr.mxu0 0.0
    %1260 = vmatpush1.msra.mxu0 0.0
    %1261 = vmatprep.subr.mxu0 0.0
    %1262 = vmatpush1.msra.mxu0 0.0
    %1263 = vmatprep.subr.mxu0 0.0
    %1264 = vmatpush1.msra.mxu0 0.0
    %1265 = vmatprep.subr.mxu0 0.0
    %1266 = vmatpush1.msra.mxu0 0.0
    %1267 = vmatprep.subr.mxu0 0.0
    %1268 = vmatpush1.msra.mxu0 0.0
    %1269 = vmatprep.subr.mxu0 0.0
    %1270 = vmatpush1.msra.mxu0 0.0
    %1271 = vmatprep.mubr.f32.mxu0 0.0
    %1272 = vmatmul.mubr.f32.gmra.mrb[0].mxu0 %v805
    %v1273 = vpop.f32.mrb[0].mxu0
    %v1274 = vadd.f32 0.0, %v1273
    %v1275 = vpop.f32.mrb[0].mxu0
    %v1276 = vadd.f32 0.0, %v1275
    %1277 = vdwg.mxu0
    %v1278 = vadd.f32 %v1204, %v1274
    %v1279 = vxor.u32 %v1278, 2147483648
    %v1280 = vmul.f32 %v1279, 1.442695
    %v1281 = vpow.pop %v1280
    %v1282 = vadd.f32 %v1281, 1.0
    %v1283 = vrcp.pop %v1282
    %v1284 = vmul.f32 1.0, %v1283
    %v1285 = vadd.f32 %v1205, %v1276
    %v1286 = vxor.u32 %v1285, 2147483648
    %v1287 = vmul.f32 %v1286, 1.442695
    %v1288 = vpow.pop %v1287
    %v1289 = vadd.f32 %v1288, 1.0
    %v1290 = vrcp.pop %v1289
    %v1291 = vmul.f32 1.0, %v1290
    %1292 = vmatprep.subr.mxu0 0.0
    %1293 = vmatpush1.msra.mxu0 %v536
    %1294 = vmatprep.subr.mxu0 0.0
    %1295 = vmatpush1.msra.mxu0 %v537
    %1296 = vmatprep.subr.mxu0 0.0
    %1297 = vmatpush1.msra.mxu0 %v538
    %1298 = vmatprep.subr.mxu0 0.0
    %1299 = vmatpush1.msra.mxu0 %v539
    %1300 = vmatprep.subr.mxu0 0.0
    %1301 = vmatpush1.msra.mxu0 %v540
    %1302 = vmatprep.subr.mxu0 0.0
    %1303 = vmatpush1.msra.mxu0 %v541
    %1304 = vmatprep.subr.mxu0 0.0
    %1305 = vmatpush1.msra.mxu0 %v542
    %1306 = vmatprep.subr.mxu0 0.0
    %1307 = vmatpush1.msra.mxu0 %v543
    %1308 = vmatprep.subr.mxu0 0.0
    %1309 = vmatpush1.msra.mxu0 %v544
    %1310 = vmatprep.subr.mxu0 0.0
    %1311 = vmatpush1.msra.mxu0 %v545
    %1312 = vmatprep.subr.mxu0 0.0
    %1313 = vmatpush1.msra.mxu0 %v546
    %1314 = vmatprep.subr.mxu0 0.0
    %1315 = vmatpush1.msra.mxu0 %v547
    %1316 = vmatprep.subr.mxu0 0.0
    %1317 = vmatpush1.msra.mxu0 %v548
    %1318 = vmatprep.subr.mxu0 0.0
    %1319 = vmatpush1.msra.mxu0 %v549
    %1320 = vmatprep.subr.mxu0 0.0
    %1321 = vmatpush1.msra.mxu0 %v550
    %1322 = vmatprep.subr.mxu0 0.0
    %1323 = vmatpush1.msra.mxu0 %v551
    %1324 = vmatprep.subr.mxu0 0.0
    %1325 = vmatpush1.msra.mxu0 0.0
    %1326 = vmatprep.subr.mxu0 0.0
    %1327 = vmatpush1.msra.mxu0 0.0
    %1328 = vmatprep.subr.mxu0 0.0
    %1329 = vmatpush1.msra.mxu0 0.0
    %1330 = vmatprep.subr.mxu0 0.0
    %1331 = vmatpush1.msra.mxu0 0.0
    %1332 = vmatprep.subr.mxu0 0.0
    %1333 = vmatpush1.msra.mxu0 0.0
    %1334 = vmatprep.subr.mxu0 0.0
    %1335 = vmatpush1.msra.mxu0 0.0
    %1336 = vmatprep.subr.mxu0 0.0
    %1337 = vmatpush1.msra.mxu0 0.0
    %1338 = vmatprep.subr.mxu0 0.0
    %1339 = vmatpush1.msra.mxu0 0.0
    %1340 = vmatprep.subr.mxu0 0.0
    %1341 = vmatpush1.msra.mxu0 0.0
    %1342 = vmatprep.subr.mxu0 0.0
    %1343 = vmatpush1.msra.mxu0 0.0
    %1344 = vmatprep.subr.mxu0 0.0
    %1345 = vmatpush1.msra.mxu0 0.0
    %1346 = vmatprep.subr.mxu0 0.0
    %1347 = vmatpush1.msra.mxu0 0.0
    %1348 = vmatprep.subr.mxu0 0.0
    %1349 = vmatpush1.msra.mxu0 0.0
    %1350 = vmatprep.subr.mxu0 0.0
    %1351 = vmatpush1.msra.mxu0 0.0
    %1352 = vmatprep.subr.mxu0 0.0
    %1353 = vmatpush1.msra.mxu0 0.0
    %1354 = vmatprep.subr.mxu0 0.0
    %1355 = vmatpush1.msra.mxu0 0.0
    %1356 = vmatprep.mubr.f32.mxu0 0.0
    %1357 = vmatmul.mubr.f32.gmra.mrb[0].mxu0 %v805
    %v1358 = vpop.f32.mrb[0].mxu0
    %v1359 = vadd.f32 %v401, %v1358
    %v1360 = vpop.f32.mrb[0].mxu0
    %1361 = vdwg.mxu0
    %v1362 = vmul.f32 %v1284, %v1359
    %v1363 = vadd.f32 %v1206, %v1362
    %v1364 = vtanh.pop %v1363
    %v1365 = vsub.f32 %v805, %v1364
    %v1366 = vmul.f32 %v1291, %v1365
    %v1367 = vadd.f32 %v1364, %v1366
    %1368 = vmatprep.subr.mxu0 %v807
    %1369 = vmatpush1.msra.mxu0 %v806
    %1370 = vmatprep.subr.mxu0 %v810
    %1371 = vmatpush1.msra.mxu0 %v809
    %1372 = vmatprep.subr.mxu0 %v813
    %1373 = vmatpush1.msra.mxu0 %v812
    %1374 = vmatprep.subr.mxu0 %v816
    %1375 = vmatpush1.msra.mxu0 %v815
    %1376 = vmatprep.subr.mxu0 %v819
    %1377 = vmatpush1.msra.mxu0 %v818
    %1378 = vmatprep.subr.mxu0 %v822
    %1379 = vmatpush1.msra.mxu0 %v821
    %1380 = vmatprep.subr.mxu0 %v825
    %1381 = vmatpush1.msra.mxu0 %v824
    %1382 = vmatprep.subr.mxu0 %v828
    %1383 = vmatpush1.msra.mxu0 %v827
    %1384 = vmatprep.subr.mxu0 %v831
    %1385 = vmatpush1.msra.mxu0 %v830
    %1386 = vmatprep.subr.mxu0 %v834
    %1387 = vmatpush1.msra.mxu0 %v833
    %1388 = vmatprep.subr.mxu0 %v837
    %1389 = vmatpush1.msra.mxu0 %v836
    %1390 = vmatprep.subr.mxu0 %v840
    %1391 = vmatpush1.msra.mxu0 %v839
    %1392 = vmatprep.subr.mxu0 %v843
    %1393 = vmatpush1.msra.mxu0 %v842
    %1394 = vmatprep.subr.mxu0 %v846
    %1395 = vmatpush1.msra.mxu0 %v845
    %1396 = vmatprep.subr.mxu0 %v849
    %1397 = vmatpush1.msra.mxu0 %v848
    %1398 = vmatprep.subr.mxu0 %v852
    %1399 = vmatpush1.msra.mxu0 %v851
    %1400 = vmatprep.subr.mxu0 0.0
    %1401 = vmatpush1.msra.mxu0 0.0
    %1402 = vmatprep.subr.mxu0 0.0
    %1403 = vmatpush1.msra.mxu0 0.0
    %1404 = vmatprep.subr.mxu0 0.0
    %1405 = vmatpush1.msra.mxu0 0.0
    %1406 = vmatprep.subr.mxu0 0.0
    %1407 = vmatpush1.msra.mxu0 0.0
    %1408 = vmatprep.subr.mxu0 0.0
    %1409 = vmatpush1.msra.mxu0 0.0
    %1410 = vmatprep.subr.mxu0 0.0
    %1411 = vmatpush1.msra.mxu0 0.0
    %1412 = vmatprep.subr.mxu0 0.0
    %1413 = vmatpush1.msra.mxu0 0.0
    %1414 = vmatprep.subr.mxu0 0.0
    %1415 = vmatpush1.msra.mxu0 0.0
    %1416 = vmatprep.subr.mxu0 0.0
    %1417 = vmatpush1.msra.mxu0 0.0
    %1418 = vmatprep.subr.mxu0 0.0
    %1419 = vmatpush1.msra.mxu0 0.0
    %1420 = vmatprep.subr.mxu0 0.0
    %1421 = vmatpush1.msra.mxu0 0.0
    %1422 = vmatprep.subr.mxu0 0.0
    %1423 = vmatpush1.msra.mxu0 0.0
    %1424 = vmatprep.subr.mxu0 0.0
    %1425 = vmatpush1.msra.mxu0 0.0
    %1426 = vmatprep.subr.mxu0 0.0
    %1427 = vmatpush1.msra.mxu0 0.0
    %1428 = vmatprep.subr.mxu0 0.0
    %1429 = vmatpush1.msra.mxu0 0.0
    %1430 = vmatprep.subr.mxu0 0.0
    %1431 = vmatpush1.msra.mxu0 0.0
    %1432 = vmatprep.mubr.f32.mxu0 0.0
    %1433 = vmatmul.mubr.f32.gmra.mrb[0].mxu0 %v805
    %v1434 = vpop.f32.mrb[0].mxu0
    %v1435 = vadd.f32 %v408, %v1434
    %v1436 = vpop.f32.mrb[0].mxu0
    %v1437 = vadd.f32 %v412, %v1436
    %1438 = vdwg.mxu0
    %1439 = vmatprep.subr.mxu0 0.0
    %1440 = vmatpush1.msra.mxu0 %v808
    %1441 = vmatprep.subr.mxu0 0.0
    %1442 = vmatpush1.msra.mxu0 %v811
    %1443 = vmatprep.subr.mxu0 0.0
    %1444 = vmatpush1.msra.mxu0 %v814
    %1445 = vmatprep.subr.mxu0 0.0
    %1446 = vmatpush1.msra.mxu0 %v817
    %1447 = vmatprep.subr.mxu0 0.0
    %1448 = vmatpush1.msra.mxu0 %v820
    %1449 = vmatprep.subr.mxu0 0.0
    %1450 = vmatpush1.msra.mxu0 %v823
    %1451 = vmatprep.subr.mxu0 0.0
    %1452 = vmatpush1.msra.mxu0 %v826
    %1453 = vmatprep.subr.mxu0 0.0
    %1454 = vmatpush1.msra.mxu0 %v829
    %1455 = vmatprep.subr.mxu0 0.0
    %1456 = vmatpush1.msra.mxu0 %v832
    %1457 = vmatprep.subr.mxu0 0.0
    %1458 = vmatpush1.msra.mxu0 %v835
    %1459 = vmatprep.subr.mxu0 0.0
    %1460 = vmatpush1.msra.mxu0 %v838
    %1461 = vmatprep.subr.mxu0 0.0
    %1462 = vmatpush1.msra.mxu0 %v841
    %1463 = vmatprep.subr.mxu0 0.0
    %1464 = vmatpush1.msra.mxu0 %v844
    %1465 = vmatprep.subr.mxu0 0.0
    %1466 = vmatpush1.msra.mxu0 %v847
    %1467 = vmatprep.subr.mxu0 0.0
    %1468 = vmatpush1.msra.mxu0 %v850
    %1469 = vmatprep.subr.mxu0 0.0
    %1470 = vmatpush1.msra.mxu0 %v853
    %1471 = vmatprep.subr.mxu0 0.0
    %1472 = vmatpush1.msra.mxu0 0.0
    %1473 = vmatprep.subr.mxu0 0.0
    %1474 = vmatpush1.msra.mxu0 0.0
    %1475 = vmatprep.subr.mxu0 0.0
    %1476 = vmatpush1.msra.mxu0 0.0
    %1477 = vmatprep.subr.mxu0 0.0
    %1478 = vmatpush1.msra.mxu0 0.0
    %1479 = vmatprep.subr.mxu0 0.0
    %1480 = vmatpush1.msra.mxu0 0.0
    %1481 = vmatprep.subr.mxu0 0.0
    %1482 = vmatpush1.msra.mxu0 0.0
    %1483 = vmatprep.subr.mxu0 0.0
    %1484 = vmatpush1.msra.mxu0 0.0
    %1485 = vmatprep.subr.mxu0 0.0
    %1486 = vmatpush1.msra.mxu0 0.0
    %1487 = vmatprep.subr.mxu0 0.0
    %1488 = vmatpush1.msra.mxu0 0.0
    %1489 = vmatprep.subr.mxu0 0.0
    %1490 = vmatpush1.msra.mxu0 0.0
    %1491 = vmatprep.subr.mxu0 0.0
    %1492 = vmatpush1.msra.mxu0 0.0
    %1493 = vmatprep.subr.mxu0 0.0
    %1494 = vmatpush1.msra.mxu0 0.0
    %1495 = vmatprep.subr.mxu0 0.0
    %1496 = vmatpush1.msra.mxu0 0.0
    %1497 = vmatprep.subr.mxu0 0.0
    %1498 = vmatpush1.msra.mxu0 0.0
    %1499 = vmatprep.subr.mxu0 0.0
    %1500 = vmatpush1.msra.mxu0 0.0
    %1501 = vmatprep.subr.mxu0 0.0
    %1502 = vmatpush1.msra.mxu0 0.0
    %1503 = vmatprep.mubr.f32.mxu0 0.0
    %1504 = vmatmul.mubr.f32.gmra.mrb[0].mxu0 %v805
    %v1505 = vpop.f32.mrb[0].mxu0
    %v1506 = vadd.f32 %v416, %v1505
    %v1507 = vpop.f32.mrb[0].mxu0
    %1508 = vdwg.mxu0
    %1509 = vmatprep.subr.mxu0 %v996
    %1510 = vmatpush1.msra.mxu0 %v995
    %1511 = vmatprep.subr.mxu0 %v998
    %1512 = vmatpush1.msra.mxu0 %v997
    %1513 = vmatprep.subr.mxu0 %v1000
    %1514 = vmatpush1.msra.mxu0 %v999
    %1515 = vmatprep.subr.mxu0 %v1002
    %1516 = vmatpush1.msra.mxu0 %v1001
    %1517 = vmatprep.subr.mxu0 %v1004
    %1518 = vmatpush1.msra.mxu0 %v1003
    %1519 = vmatprep.subr.mxu0 %v1006
    %1520 = vmatpush1.msra.mxu0 %v1005
    %1521 = vmatprep.subr.mxu0 %v1008
    %1522 = vmatpush1.msra.mxu0 %v1007
    %1523 = vmatprep.subr.mxu0 %v1010
    %1524 = vmatpush1.msra.mxu0 %v1009
    %1525 = vmatprep.subr.mxu0 %v1012
    %1526 = vmatpush1.msra.mxu0 %v1011
    %1527 = vmatprep.subr.mxu0 %v1014
    %1528 = vmatpush1.msra.mxu0 %v1013
    %1529 = vmatprep.subr.mxu0 %v1016
    %1530 = vmatpush1.msra.mxu0 %v1015
    %1531 = vmatprep.subr.mxu0 %v1018
    %1532 = vmatpush1.msra.mxu0 %v1017
    %1533 = vmatprep.subr.mxu0 %v1020
    %1534 = vmatpush1.msra.mxu0 %v1019
    %1535 = vmatprep.subr.mxu0 %v1022
    %1536 = vmatpush1.msra.mxu0 %v1021
    %1537 = vmatprep.subr.mxu0 %v1024
    %1538 = vmatpush1.msra.mxu0 %v1023
    %1539 = vmatprep.subr.mxu0 %v1026
    %1540 = vmatpush1.msra.mxu0 %v1025
    %1541 = vmatprep.subr.mxu0 0.0
    %1542 = vmatpush1.msra.mxu0 0.0
    %1543 = vmatprep.subr.mxu0 0.0
    %1544 = vmatpush1.msra.mxu0 0.0
    %1545 = vmatprep.subr.mxu0 0.0
    %1546 = vmatpush1.msra.mxu0 0.0
    %1547 = vmatprep.subr.mxu0 0.0
    %1548 = vmatpush1.msra.mxu0 0.0
    %1549 = vmatprep.subr.mxu0 0.0
    %1550 = vmatpush1.msra.mxu0 0.0
    %1551 = vmatprep.subr.mxu0 0.0
    %1552 = vmatpush1.msra.mxu0 0.0
    %1553 = vmatprep.subr.mxu0 0.0
    %1554 = vmatpush1.msra.mxu0 0.0
    %1555 = vmatprep.subr.mxu0 0.0
    %1556 = vmatpush1.msra.mxu0 0.0
    %1557 = vmatprep.subr.mxu0 0.0
    %1558 = vmatpush1.msra.mxu0 0.0
    %1559 = vmatprep.subr.mxu0 0.0
    %1560 = vmatpush1.msra.mxu0 0.0
    %1561 = vmatprep.subr.mxu0 0.0
    %1562 = vmatpush1.msra.mxu0 0.0
    %1563 = vmatprep.subr.mxu0 0.0
    %1564 = vmatpush1.msra.mxu0 0.0
    %1565 = vmatprep.subr.mxu0 0.0
    %1566 = vmatpush1.msra.mxu0 0.0
    %1567 = vmatprep.subr.mxu0 0.0
    %1568 = vmatpush1.msra.mxu0 0.0
    %1569 = vmatprep.subr.mxu0 0.0
    %1570 = vmatpush1.msra.mxu0 0.0
    %1571 = vmatprep.subr.mxu0 0.0
    %1572 = vmatpush1.msra.mxu0 0.0
    %1573 = vmatprep.mubr.f32.mxu0 0.0
    %1574 = vmatmul.mubr.f32.gmra.mrb[0].mxu0 %v1203
    %v1575 = vpop.f32.mrb[0].mxu0
    %v1576 = vadd.f32 0.0, %v1575
    %v1577 = vpop.f32.mrb[0].mxu0
    %v1578 = vadd.f32 0.0, %v1577
    %1579 = vdwg.mxu0
    %v1580 = vadd.f32 %v1435, %v1576
    %v1581 = vxor.u32 %v1580, 2147483648
    %v1582 = vmul.f32 %v1581, 1.442695
    %v1583 = vpow.pop %v1582
    %v1584 = vadd.f32 %v1583, 1.0
    %v1585 = vrcp.pop %v1584
    %v1586 = vmul.f32 1.0, %v1585
    %v1587 = vadd.f32 %v1437, %v1578
    %v1588 = vxor.u32 %v1587, 2147483648
    %v1589 = vmul.f32 %v1588, 1.442695
    %v1590 = vpow.pop %v1589
    %v1591 = vadd.f32 %v1590, 1.0
    %v1592 = vrcp.pop %v1591
    %v1593 = vmul.f32 1.0, %v1592
    %1594 = vmatprep.subr.mxu0 0.0
    %1595 = vmatpush1.msra.mxu0 %v1098
    %1596 = vmatprep.subr.mxu0 0.0
    %1597 = vmatpush1.msra.mxu0 %v1099
    %1598 = vmatprep.subr.mxu0 0.0
    %1599 = vmatpush1.msra.mxu0 %v1100
    %1600 = vmatprep.subr.mxu0 0.0
    %1601 = vmatpush1.msra.mxu0 %v1101
    %1602 = vmatprep.subr.mxu0 0.0
    %1603 = vmatpush1.msra.mxu0 %v1102
    %1604 = vmatprep.subr.mxu0 0.0
    %1605 = vmatpush1.msra.mxu0 %v1103
    %1606 = vmatprep.subr.mxu0 0.0
    %1607 = vmatpush1.msra.mxu0 %v1104
    %1608 = vmatprep.subr.mxu0 0.0
    %1609 = vmatpush1.msra.mxu0 %v1105
    %1610 = vmatprep.subr.mxu0 0.0
    %1611 = vmatpush1.msra.mxu0 %v1106
    %1612 = vmatprep.subr.mxu0 0.0
    %1613 = vmatpush1.msra.mxu0 %v1107
    %1614 = vmatprep.subr.mxu0 0.0
    %1615 = vmatpush1.msra.mxu0 %v1108
    %1616 = vmatprep.subr.mxu0 0.0
    %1617 = vmatpush1.msra.mxu0 %v1109
    %1618 = vmatprep.subr.mxu0 0.0
    %1619 = vmatpush1.msra.mxu0 %v1110
    %1620 = vmatprep.subr.mxu0 0.0
    %1621 = vmatpush1.msra.mxu0 %v1111
    %1622 = vmatprep.subr.mxu0 0.0
    %1623 = vmatpush1.msra.mxu0 %v1112
    %1624 = vmatprep.subr.mxu0 0.0
    %1625 = vmatpush1.msra.mxu0 %v1113
    %1626 = vmatprep.subr.mxu0 0.0
    %1627 = vmatpush1.msra.mxu0 0.0
    %1628 = vmatprep.subr.mxu0 0.0
    %1629 = vmatpush1.msra.mxu0 0.0
    %1630 = vmatprep.subr.mxu0 0.0
    %1631 = vmatpush1.msra.mxu0 0.0
    %1632 = vmatprep.subr.mxu0 0.0
    %1633 = vmatpush1.msra.mxu0 0.0
    %1634 = vmatprep.subr.mxu0 0.0
    %1635 = vmatpush1.msra.mxu0 0.0
    %1636 = vmatprep.subr.mxu0 0.0
    %1637 = vmatpush1.msra.mxu0 0.0
    %1638 = vmatprep.subr.mxu0 0.0
    %1639 = vmatpush1.msra.mxu0 0.0
    %1640 = vmatprep.subr.mxu0 0.0
    %1641 = vmatpush1.msra.mxu0 0.0
    %1642 = vmatprep.subr.mxu0 0.0
    %1643 = vmatpush1.msra.mxu0 0.0
    %1644 = vmatprep.subr.mxu0 0.0
    %1645 = vmatpush1.msra.mxu0 0.0
    %1646 = vmatprep.subr.mxu0 0.0
    %1647 = vmatpush1.msra.mxu0 0.0
    %1648 = vmatprep.subr.mxu0 0.0
    %1649 = vmatpush1.msra.mxu0 0.0
    %1650 = vmatprep.subr.mxu0 0.0
    %1651 = vmatpush1.msra.mxu0 0.0
    %1652 = vmatprep.subr.mxu0 0.0
    %1653 = vmatpush1.msra.mxu0 0.0
    %1654 = vmatprep.subr.mxu0 0.0
    %1655 = vmatpush1.msra.mxu0 0.0
    %1656 = vmatprep.subr.mxu0 0.0
    %1657 = vmatpush1.msra.mxu0 0.0
    %1658 = vmatprep.mubr.f32.mxu0 0.0
    %1659 = vmatmul.mubr.f32.gmra.mrb[0].mxu0 %v1203
    %v1660 = vpop.f32.mrb[0].mxu0
    %v1661 = vadd.f32 %v425, %v1660
    %v1662 = vpop.f32.mrb[0].mxu0
    %1663 = vdwg.mxu0
    %v1664 = vmul.f32 %v1586, %v1661
    %v1665 = vadd.f32 %v1506, %v1664
    %v1666 = vtanh.pop %v1665
    %v1667 = vsub.f32 %v1203, %v1666
    %v1668 = vmul.f32 %v1593, %v1667
    %v1669 = vadd.f32 %v1666, %v1668
    %v1670 = vld [vmem:[#allocation2 + $0x48] sm:$0xff]
    %v1671 = vld [vmem:[#allocation2 + $0x50] sm:$0xff]
    %v1672 = vld [vmem:[#allocation2 + $0x58] sm:$0xff]
    %1673 = vmatprep.subr.mxu0 %v434
    %1674 = vmatpush1.msra.mxu0 %v433
    %1675 = vmatprep.subr.mxu0 %v436
    %1676 = vmatpush1.msra.mxu0 %v435
    %1677 = vmatprep.subr.mxu0 %v438
    %1678 = vmatpush1.msra.mxu0 %v437
    %1679 = vmatprep.subr.mxu0 %v440
    %1680 = vmatpush1.msra.mxu0 %v439
    %1681 = vmatprep.subr.mxu0 %v442
    %1682 = vmatpush1.msra.mxu0 %v441
    %1683 = vmatprep.subr.mxu0 %v444
    %1684 = vmatpush1.msra.mxu0 %v443
    %1685 = vmatprep.subr.mxu0 %v446
    %1686 = vmatpush1.msra.mxu0 %v445
    %1687 = vmatprep.subr.mxu0 %v448
    %1688 = vmatpush1.msra.mxu0 %v447
    %1689 = vmatprep.subr.mxu0 %v450
    %1690 = vmatpush1.msra.mxu0 %v449
    %1691 = vmatprep.subr.mxu0 %v452
    %1692 = vmatpush1.msra.mxu0 %v451
    %1693 = vmatprep.subr.mxu0 %v454
    %1694 = vmatpush1.msra.mxu0 %v453
    %1695 = vmatprep.subr.mxu0 %v456
    %1696 = vmatpush1.msra.mxu0 %v455
    %1697 = vmatprep.subr.mxu0 %v458
    %1698 = vmatpush1.msra.mxu0 %v457
    %1699 = vmatprep.subr.mxu0 %v460
    %1700 = vmatpush1.msra.mxu0 %v459
    %1701 = vmatprep.subr.mxu0 %v462
    %1702 = vmatpush1.msra.mxu0 %v461
    %1703 = vmatprep.subr.mxu0 %v464
    %1704 = vmatpush1.msra.mxu0 %v463
    %1705 = vmatprep.subr.mxu0 0.0
    %1706 = vmatpush1.msra.mxu0 0.0
    %1707 = vmatprep.subr.mxu0 0.0
    %1708 = vmatpush1.msra.mxu0 0.0
    %1709 = vmatprep.subr.mxu0 0.0
    %1710 = vmatpush1.msra.mxu0 0.0
    %1711 = vmatprep.subr.mxu0 0.0
    %1712 = vmatpush1.msra.mxu0 0.0
    %1713 = vmatprep.subr.mxu0 0.0
    %1714 = vmatpush1.msra.mxu0 0.0
    %1715 = vmatprep.subr.mxu0 0.0
    %1716 = vmatpush1.msra.mxu0 0.0
    %1717 = vmatprep.subr.mxu0 0.0
    %1718 = vmatpush1.msra.mxu0 0.0
    %1719 = vmatprep.subr.mxu0 0.0
    %1720 = vmatpush1.msra.mxu0 0.0
    %1721 = vmatprep.subr.mxu0 0.0
    %1722 = vmatpush1.msra.mxu0 0.0
    %1723 = vmatprep.subr.mxu0 0.0
    %1724 = vmatpush1.msra.mxu0 0.0
    %1725 = vmatprep.subr.mxu0 0.0
    %1726 = vmatpush1.msra.mxu0 0.0
    %1727 = vmatprep.subr.mxu0 0.0
    %1728 = vmatpush1.msra.mxu0 0.0
    %1729 = vmatprep.subr.mxu0 0.0
    %1730 = vmatpush1.msra.mxu0 0.0
    %1731 = vmatprep.subr.mxu0 0.0
    %1732 = vmatpush1.msra.mxu0 0.0
    %1733 = vmatprep.subr.mxu0 0.0
    %1734 = vmatpush1.msra.mxu0 0.0
    %1735 = vmatprep.subr.mxu0 0.0
    %1736 = vmatpush1.msra.mxu0 0.0
    %1737 = vmatprep.mubr.f32.mxu0 0.0
    %1738 = vmatmul.mubr.f32.gmra.mrb[0].mxu0 %v1367
    %v1739 = vpop.f32.mrb[0].mxu0
    %v1740 = vadd.f32 0.0, %v1739
    %v1741 = vpop.f32.mrb[0].mxu0
    %v1742 = vadd.f32 0.0, %v1741
    %1743 = vdwg.mxu0
    %v1744 = vadd.f32 %v1670, %v1740
    %v1745 = vxor.u32 %v1744, 2147483648
    %v1746 = vmul.f32 %v1745, 1.442695
    %v1747 = vpow.pop %v1746
    %v1748 = vadd.f32 %v1747, 1.0
    %v1749 = vrcp.pop %v1748
    %v1750 = vmul.f32 1.0, %v1749
    %v1751 = vadd.f32 %v1671, %v1742
    %v1752 = vxor.u32 %v1751, 2147483648
    %v1753 = vmul.f32 %v1752, 1.442695
    %v1754 = vpow.pop %v1753
    %v1755 = vadd.f32 %v1754, 1.0
    %v1756 = vrcp.pop %v1755
    %v1757 = vmul.f32 1.0, %v1756
    %1758 = vmatprep.subr.mxu0 0.0
    %1759 = vmatpush1.msra.mxu0 %v536
    %1760 = vmatprep.subr.mxu0 0.0
    %1761 = vmatpush1.msra.mxu0 %v537
    %1762 = vmatprep.subr.mxu0 0.0
    %1763 = vmatpush1.msra.mxu0 %v538
    %1764 = vmatprep.subr.mxu0 0.0
    %1765 = vmatpush1.msra.mxu0 %v539
    %1766 = vmatprep.subr.mxu0 0.0
    %1767 = vmatpush1.msra.mxu0 %v540
    %1768 = vmatprep.subr.mxu0 0.0
    %1769 = vmatpush1.msra.mxu0 %v541
    %1770 = vmatprep.subr.mxu0 0.0
    %1771 = vmatpush1.msra.mxu0 %v542
    %1772 = vmatprep.subr.mxu0 0.0
    %1773 = vmatpush1.msra.mxu0 %v543
    %1774 = vmatprep.subr.mxu0 0.0
    %1775 = vmatpush1.msra.mxu0 %v544
    %1776 = vmatprep.subr.mxu0 0.0
    %1777 = vmatpush1.msra.mxu0 %v545
    %1778 = vmatprep.subr.mxu0 0.0
    %1779 = vmatpush1.msra.mxu0 %v546
    %1780 = vmatprep.subr.mxu0 0.0
    %1781 = vmatpush1.msra.mxu0 %v547
    %1782 = vmatprep.subr.mxu0 0.0
    %1783 = vmatpush1.msra.mxu0 %v548
    %1784 = vmatprep.subr.mxu0 0.0
    %1785 = vmatpush1.msra.mxu0 %v549
    %1786 = vmatprep.subr.mxu0 0.0
    %1787 = vmatpush1.msra.mxu0 %v550
    %1788 = vmatprep.subr.mxu0 0.0
    %1789 = vmatpush1.msra.mxu0 %v551
    %1790 = vmatprep.subr.mxu0 0.0
    %1791 = vmatpush1.msra.mxu0 0.0
    %1792 = vmatprep.subr.mxu0 0.0
    %1793 = vmatpush1.msra.mxu0 0.0
    %1794 = vmatprep.subr.mxu0 0.0
    %1795 = vmatpush1.msra.mxu0 0.0
    %1796 = vmatprep.subr.mxu0 0.0
    %1797 = vmatpush1.msra.mxu0 0.0
    %1798 = vmatprep.subr.mxu0 0.0
    %1799 = vmatpush1.msra.mxu0 0.0
    %1800 = vmatprep.subr.mxu0 0.0
    %1801 = vmatpush1.msra.mxu0 0.0
    %1802 = vmatprep.subr.mxu0 0.0
    %1803 = vmatpush1.msra.mxu0 0.0
    %1804 = vmatprep.subr.mxu0 0.0
    %1805 = vmatpush1.msra.mxu0 0.0
    %1806 = vmatprep.subr.mxu0 0.0
    %1807 = vmatpush1.msra.mxu0 0.0
    %1808 = vmatprep.subr.mxu0 0.0
    %1809 = vmatpush1.msra.mxu0 0.0
    %1810 = vmatprep.subr.mxu0 0.0
    %1811 = vmatpush1.msra.mxu0 0.0
    %1812 = vmatprep.subr.mxu0 0.0
    %1813 = vmatpush1.msra.mxu0 0.0
    %1814 = vmatprep.subr.mxu0 0.0
    %1815 = vmatpush1.msra.mxu0 0.0
    %1816 = vmatprep.subr.mxu0 0.0
    %1817 = vmatpush1.msra.mxu0 0.0
    %1818 = vmatprep.subr.mxu0 0.0
    %1819 = vmatpush1.msra.mxu0 0.0
    %1820 = vmatprep.subr.mxu0 0.0
    %1821 = vmatpush1.msra.mxu0 0.0
    %1822 = vmatprep.mubr.f32.mxu0 0.0
    %1823 = vmatmul.mubr.f32.gmra.mrb[0].mxu0 %v1367
    %v1824 = vpop.f32.mrb[0].mxu0
    %v1825 = vadd.f32 %v401, %v1824
    %v1826 = vpop.f32.mrb[0].mxu0
    %1827 = vdwg.mxu0
    %v1828 = vmul.f32 %v1750, %v1825
    %v1829 = vadd.f32 %v1672, %v1828
    %v1830 = vtanh.pop %v1829
    %v1831 = vsub.f32 %v1367, %v1830
    %v1832 = vmul.f32 %v1757, %v1831
    %v1833 = vadd.f32 %v1830, %v1832
    %1834 = vmatprep.subr.mxu0 %v807
    %1835 = vmatpush1.msra.mxu0 %v806
    %1836 = vmatprep.subr.mxu0 %v810
    %1837 = vmatpush1.msra.mxu0 %v809
    %1838 = vmatprep.subr.mxu0 %v813
    %1839 = vmatpush1.msra.mxu0 %v812
    %1840 = vmatprep.subr.mxu0 %v816
    %1841 = vmatpush1.msra.mxu0 %v815
    %1842 = vmatprep.subr.mxu0 %v819
    %1843 = vmatpush1.msra.mxu0 %v818
    %1844 = vmatprep.subr.mxu0 %v822
    %1845 = vmatpush1.msra.mxu0 %v821
    %1846 = vmatprep.subr.mxu0 %v825
    %1847 = vmatpush1.msra.mxu0 %v824
    %1848 = vmatprep.subr.mxu0 %v828
    %1849 = vmatpush1.msra.mxu0 %v827
    %1850 = vmatprep.subr.mxu0 %v831
    %1851 = vmatpush1.msra.mxu0 %v830
    %1852 = vmatprep.subr.mxu0 %v834
    %1853 = vmatpush1.msra.mxu0 %v833
    %1854 = vmatprep.subr.mxu0 %v837
    %1855 = vmatpush1.msra.mxu0 %v836
    %1856 = vmatprep.subr.mxu0 %v840
    %1857 = vmatpush1.msra.mxu0 %v839
    %1858 = vmatprep.subr.mxu0 %v843
    %1859 = vmatpush1.msra.mxu0 %v842
    %1860 = vmatprep.subr.mxu0 %v846
    %1861 = vmatpush1.msra.mxu0 %v845
    %1862 = vmatprep.subr.mxu0 %v849
    %1863 = vmatpush1.msra.mxu0 %v848
    %1864 = vmatprep.subr.mxu0 %v852
    %1865 = vmatpush1.msra.mxu0 %v851
    %1866 = vmatprep.subr.mxu0 0.0
    %1867 = vmatpush1.msra.mxu0 0.0
    %1868 = vmatprep.subr.mxu0 0.0
    %1869 = vmatpush1.msra.mxu0 0.0
    %1870 = vmatprep.subr.mxu0 0.0
    %1871 = vmatpush1.msra.mxu0 0.0
    %1872 = vmatprep.subr.mxu0 0.0
    %1873 = vmatpush1.msra.mxu0 0.0
    %1874 = vmatprep.subr.mxu0 0.0
    %1875 = vmatpush1.msra.mxu0 0.0
    %1876 = vmatprep.subr.mxu0 0.0
    %1877 = vmatpush1.msra.mxu0 0.0
    %1878 = vmatprep.subr.mxu0 0.0
    %1879 = vmatpush1.msra.mxu0 0.0
    %1880 = vmatprep.subr.mxu0 0.0
    %1881 = vmatpush1.msra.mxu0 0.0
    %1882 = vmatprep.subr.mxu0 0.0
    %1883 = vmatpush1.msra.mxu0 0.0
    %1884 = vmatprep.subr.mxu0 0.0
    %1885 = vmatpush1.msra.mxu0 0.0
    %1886 = vmatprep.subr.mxu0 0.0
    %1887 = vmatpush1.msra.mxu0 0.0
    %1888 = vmatprep.subr.mxu0 0.0
    %1889 = vmatpush1.msra.mxu0 0.0
    %1890 = vmatprep.subr.mxu0 0.0
    %1891 = vmatpush1.msra.mxu0 0.0
    %1892 = vmatprep.subr.mxu0 0.0
    %1893 = vmatpush1.msra.mxu0 0.0
    %1894 = vmatprep.subr.mxu0 0.0
    %1895 = vmatpush1.msra.mxu0 0.0
    %1896 = vmatprep.subr.mxu0 0.0
    %1897 = vmatpush1.msra.mxu0 0.0
    %1898 = vmatprep.mubr.f32.mxu0 0.0
    %1899 = vmatmul.mubr.f32.gmra.mrb[0].mxu0 %v1367
    %v1900 = vpop.f32.mrb[0].mxu0
    %v1901 = vadd.f32 %v408, %v1900
    %v1902 = vpop.f32.mrb[0].mxu0
    %v1903 = vadd.f32 %v412, %v1902
    %1904 = vdwg.mxu0
    %1905 = vmatprep.subr.mxu0 0.0
    %1906 = vmatpush1.msra.mxu0 %v808
    %1907 = vmatprep.subr.mxu0 0.0
    %1908 = vmatpush1.msra.mxu0 %v811
    %1909 = vmatprep.subr.mxu0 0.0
    %1910 = vmatpush1.msra.mxu0 %v814
    %1911 = vmatprep.subr.mxu0 0.0
    %1912 = vmatpush1.msra.mxu0 %v817
    %1913 = vmatprep.subr.mxu0 0.0
    %1914 = vmatpush1.msra.mxu0 %v820
    %1915 = vmatprep.subr.mxu0 0.0
    %1916 = vmatpush1.msra.mxu0 %v823
    %1917 = vmatprep.subr.mxu0 0.0
    %1918 = vmatpush1.msra.mxu0 %v826
    %1919 = vmatprep.subr.mxu0 0.0
    %1920 = vmatpush1.msra.mxu0 %v829
    %1921 = vmatprep.subr.mxu0 0.0
    %1922 = vmatpush1.msra.mxu0 %v832
    %1923 = vmatprep.subr.mxu0 0.0
    %1924 = vmatpush1.msra.mxu0 %v835
    %1925 = vmatprep.subr.mxu0 0.0
    %1926 = vmatpush1.msra.mxu0 %v838
    %1927 = vmatprep.subr.mxu0 0.0
    %1928 = vmatpush1.msra.mxu0 %v841
    %1929 = vmatprep.subr.mxu0 0.0
    %1930 = vmatpush1.msra.mxu0 %v844
    %1931 = vmatprep.subr.mxu0 0.0
    %1932 = vmatpush1.msra.mxu0 %v847
    %1933 = vmatprep.subr.mxu0 0.0
    %1934 = vmatpush1.msra.mxu0 %v850
    %1935 = vmatprep.subr.mxu0 0.0
    %1936 = vmatpush1.msra.mxu0 %v853
    %1937 = vmatprep.subr.mxu0 0.0
    %1938 = vmatpush1.msra.mxu0 0.0
    %1939 = vmatprep.subr.mxu0 0.0
    %1940 = vmatpush1.msra.mxu0 0.0
    %1941 = vmatprep.subr.mxu0 0.0
    %1942 = vmatpush1.msra.mxu0 0.0
    %1943 = vmatprep.subr.mxu0 0.0
    %1944 = vmatpush1.msra.mxu0 0.0
    %1945 = vmatprep.subr.mxu0 0.0
    %1946 = vmatpush1.msra.mxu0 0.0
    %1947 = vmatprep.subr.mxu0 0.0
    %1948 = vmatpush1.msra.mxu0 0.0
    %1949 = vmatprep.subr.mxu0 0.0
    %1950 = vmatpush1.msra.mxu0 0.0
    %1951 = vmatprep.subr.mxu0 0.0
    %1952 = vmatpush1.msra.mxu0 0.0
    %1953 = vmatprep.subr.mxu0 0.0
    %1954 = vmatpush1.msra.mxu0 0.0
    %1955 = vmatprep.subr.mxu0 0.0
    %1956 = vmatpush1.msra.mxu0 0.0
    %1957 = vmatprep.subr.mxu0 0.0
    %1958 = vmatpush1.msra.mxu0 0.0
    %1959 = vmatprep.subr.mxu0 0.0
    %1960 = vmatpush1.msra.mxu0 0.0
    %1961 = vmatprep.subr.mxu0 0.0
    %1962 = vmatpush1.msra.mxu0 0.0
    %1963 = vmatprep.subr.mxu0 0.0
    %1964 = vmatpush1.msra.mxu0 0.0
    %1965 = vmatprep.subr.mxu0 0.0
    %1966 = vmatpush1.msra.mxu0 0.0
    %1967 = vmatprep.subr.mxu0 0.0
    %1968 = vmatpush1.msra.mxu0 0.0
    %1969 = vmatprep.mubr.f32.mxu0 0.0
    %1970 = vmatmul.mubr.f32.gmra.mrb[0].mxu0 %v1367
    %v1971 = vpop.f32.mrb[0].mxu0
    %v1972 = vadd.f32 %v416, %v1971
    %v1973 = vpop.f32.mrb[0].mxu0
    %1974 = vdwg.mxu0
    %1975 = vmatprep.subr.mxu0 %v996
    %1976 = vmatpush1.msra.mxu0 %v995
    %1977 = vmatprep.subr.mxu0 %v998
    %1978 = vmatpush1.msra.mxu0 %v997
    %1979 = vmatprep.subr.mxu0 %v1000
    %1980 = vmatpush1.msra.mxu0 %v999
    %1981 = vmatprep.subr.mxu0 %v1002
    %1982 = vmatpush1.msra.mxu0 %v1001
    %1983 = vmatprep.subr.mxu0 %v1004
    %1984 = vmatpush1.msra.mxu0 %v1003
    %1985 = vmatprep.subr.mxu0 %v1006
    %1986 = vmatpush1.msra.mxu0 %v1005
    %1987 = vmatprep.subr.mxu0 %v1008
    %1988 = vmatpush1.msra.mxu0 %v1007
    %1989 = vmatprep.subr.mxu0 %v1010
    %1990 = vmatpush1.msra.mxu0 %v1009
    %1991 = vmatprep.subr.mxu0 %v1012
    %1992 = vmatpush1.msra.mxu0 %v1011
    %1993 = vmatprep.subr.mxu0 %v1014
    %1994 = vmatpush1.msra.mxu0 %v1013
    %1995 = vmatprep.subr.mxu0 %v1016
    %1996 = vmatpush1.msra.mxu0 %v1015
    %1997 = vmatprep.subr.mxu0 %v1018
    %1998 = vmatpush1.msra.mxu0 %v1017
    %1999 = vmatprep.subr.mxu0 %v1020
    %2000 = vmatpush1.msra.mxu0 %v1019
    %2001 = vmatprep.subr.mxu0 %v1022
    %2002 = vmatpush1.msra.mxu0 %v1021
    %2003 = vmatprep.subr.mxu0 %v1024
    %2004 = vmatpush1.msra.mxu0 %v1023
    %2005 = vmatprep.subr.mxu0 %v1026
    %2006 = vmatpush1.msra.mxu0 %v1025
    %2007 = vmatprep.subr.mxu0 0.0
    %2008 = vmatpush1.msra.mxu0 0.0
    %2009 = vmatprep.subr.mxu0 0.0
    %2010 = vmatpush1.msra.mxu0 0.0
    %2011 = vmatprep.subr.mxu0 0.0
    %2012 = vmatpush1.msra.mxu0 0.0
    %2013 = vmatprep.subr.mxu0 0.0
    %2014 = vmatpush1.msra.mxu0 0.0
    %2015 = vmatprep.subr.mxu0 0.0
    %2016 = vmatpush1.msra.mxu0 0.0
    %2017 = vmatprep.subr.mxu0 0.0
    %2018 = vmatpush1.msra.mxu0 0.0
    %2019 = vmatprep.subr.mxu0 0.0
    %2020 = vmatpush1.msra.mxu0 0.0
    %2021 = vmatprep.subr.mxu0 0.0
    %2022 = vmatpush1.msra.mxu0 0.0
    %2023 = vmatprep.subr.mxu0 0.0
    %2024 = vmatpush1.msra.mxu0 0.0
    %2025 = vmatprep.subr.mxu0 0.0
    %2026 = vmatpush1.msra.mxu0 0.0
    %2027 = vmatprep.subr.mxu0 0.0
    %2028 = vmatpush1.msra.mxu0 0.0
    %2029 = vmatprep.subr.mxu0 0.0
    %2030 = vmatpush1.msra.mxu0 0.0
    %2031 = vmatprep.subr.mxu0 0.0
    %2032 = vmatpush1.msra.mxu0 0.0
    %2033 = vmatprep.subr.mxu0 0.0
    %2034 = vmatpush1.msra.mxu0 0.0
    %2035 = vmatprep.subr.mxu0 0.0
    %2036 = vmatpush1.msra.mxu0 0.0
    %2037 = vmatprep.subr.mxu0 0.0
    %2038 = vmatpush1.msra.mxu0 0.0
    %2039 = vmatprep.mubr.f32.mxu0 0.0
    %2040 = vmatmul.mubr.f32.gmra.mrb[0].mxu0 %v1669
    %v2041 = vpop.f32.mrb[0].mxu0
    %v2042 = vadd.f32 0.0, %v2041
    %v2043 = vpop.f32.mrb[0].mxu0
    %v2044 = vadd.f32 0.0, %v2043
    %2045 = vdwg.mxu0
    %v2046 = vadd.f32 %v1901, %v2042
    %v2047 = vxor.u32 %v2046, 2147483648
    %v2048 = vmul.f32 %v2047, 1.442695
    %v2049 = vpow.pop %v2048
    %v2050 = vadd.f32 %v2049, 1.0
    %v2051 = vrcp.pop %v2050
    %v2052 = vmul.f32 1.0, %v2051
    %v2053 = vadd.f32 %v1903, %v2044
    %v2054 = vxor.u32 %v2053, 2147483648
    %v2055 = vmul.f32 %v2054, 1.442695
    %v2056 = vpow.pop %v2055
    %v2057 = vadd.f32 %v2056, 1.0
    %v2058 = vrcp.pop %v2057
    %v2059 = vmul.f32 1.0, %v2058
    %2060 = vmatprep.subr.mxu0 0.0
    %2061 = vmatpush1.msra.mxu0 %v1098
    %2062 = vmatprep.subr.mxu0 0.0
    %2063 = vmatpush1.msra.mxu0 %v1099
    %2064 = vmatprep.subr.mxu0 0.0
    %2065 = vmatpush1.msra.mxu0 %v1100
    %2066 = vmatprep.subr.mxu0 0.0
    %2067 = vmatpush1.msra.mxu0 %v1101
    %2068 = vmatprep.subr.mxu0 0.0
    %2069 = vmatpush1.msra.mxu0 %v1102
    %2070 = vmatprep.subr.mxu0 0.0
    %2071 = vmatpush1.msra.mxu0 %v1103
    %2072 = vmatprep.subr.mxu0 0.0
    %2073 = vmatpush1.msra.mxu0 %v1104
    %2074 = vmatprep.subr.mxu0 0.0
    %2075 = vmatpush1.msra.mxu0 %v1105
    %2076 = vmatprep.subr.mxu0 0.0
    %2077 = vmatpush1.msra.mxu0 %v1106
    %2078 = vmatprep.subr.mxu0 0.0
    %2079 = vmatpush1.msra.mxu0 %v1107
    %2080 = vmatprep.subr.mxu0 0.0
    %2081 = vmatpush1.msra.mxu0 %v1108
    %2082 = vmatprep.subr.mxu0 0.0
    %2083 = vmatpush1.msra.mxu0 %v1109
    %2084 = vmatprep.subr.mxu0 0.0
    %2085 = vmatpush1.msra.mxu0 %v1110
    %2086 = vmatprep.subr.mxu0 0.0
    %2087 = vmatpush1.msra.mxu0 %v1111
    %2088 = vmatprep.subr.mxu0 0.0
    %2089 = vmatpush1.msra.mxu0 %v1112
    %2090 = vmatprep.subr.mxu0 0.0
    %2091 = vmatpush1.msra.mxu0 %v1113
    %2092 = vmatprep.subr.mxu0 0.0
    %2093 = vmatpush1.msra.mxu0 0.0
    %2094 = vmatprep.subr.mxu0 0.0
    %2095 = vmatpush1.msra.mxu0 0.0
    %2096 = vmatprep.subr.mxu0 0.0
    %2097 = vmatpush1.msra.mxu0 0.0
    %2098 = vmatprep.subr.mxu0 0.0
    %2099 = vmatpush1.msra.mxu0 0.0
    %2100 = vmatprep.subr.mxu0 0.0
    %2101 = vmatpush1.msra.mxu0 0.0
    %2102 = vmatprep.subr.mxu0 0.0
    %2103 = vmatpush1.msra.mxu0 0.0
    %2104 = vmatprep.subr.mxu0 0.0
    %2105 = vmatpush1.msra.mxu0 0.0
    %2106 = vmatprep.subr.mxu0 0.0
    %2107 = vmatpush1.msra.mxu0 0.0
    %2108 = vmatprep.subr.mxu0 0.0
    %2109 = vmatpush1.msra.mxu0 0.0
    %2110 = vmatprep.subr.mxu0 0.0
    %2111 = vmatpush1.msra.mxu0 0.0
    %2112 = vmatprep.subr.mxu0 0.0
    %2113 = vmatpush1.msra.mxu0 0.0
    %2114 = vmatprep.subr.mxu0 0.0
    %2115 = vmatpush1.msra.mxu0 0.0
    %2116 = vmatprep.subr.mxu0 0.0
    %2117 = vmatpush1.msra.mxu0 0.0
    %2118 = vmatprep.subr.mxu0 0.0
    %2119 = vmatpush1.msra.mxu0 0.0
    %2120 = vmatprep.subr.mxu0 0.0
    %2121 = vmatpush1.msra.mxu0 0.0
    %2122 = vmatprep.subr.mxu0 0.0
    %2123 = vmatpush1.msra.mxu0 0.0
    %2124 = vmatprep.mubr.f32.mxu0 0.0
    %2125 = vmatmul.mubr.f32.gmra.mrb[0].mxu0 %v1669
    %v2126 = vpop.f32.mrb[0].mxu0
    %v2127 = vadd.f32 %v425, %v2126
    %v2128 = vpop.f32.mrb[0].mxu0
    %2129 = vdwg.mxu0
    %v2130 = vmul.f32 %v2052, %v2127
    %v2131 = vadd.f32 %v1972, %v2130
    %v2132 = vtanh.pop %v2131
    %v2133 = vsub.f32 %v1669, %v2132
    %v2134 = vmul.f32 %v2059, %v2133
    %v2135 = vadd.f32 %v2132, %v2134
    %v2136 = vld [vmem:[#allocation2 + $0x60] sm:$0xff]
    %v2137 = vld [vmem:[#allocation2 + $0x68] sm:$0xff]
    %v2138 = vld [vmem:[#allocation2 + $0x70] sm:$0xff]
    %2139 = vmatprep.subr.mxu0 %v434
    %2140 = vmatpush1.msra.mxu0 %v433
    %2141 = vmatprep.subr.mxu0 %v436
    %2142 = vmatpush1.msra.mxu0 %v435
    %2143 = vmatprep.subr.mxu0 %v438
    %2144 = vmatpush1.msra.mxu0 %v437
    %2145 = vmatprep.subr.mxu0 %v440
    %2146 = vmatpush1.msra.mxu0 %v439
    %2147 = vmatprep.subr.mxu0 %v442
    %2148 = vmatpush1.msra.mxu0 %v441
    %2149 = vmatprep.subr.mxu0 %v444
    %2150 = vmatpush1.msra.mxu0 %v443
    %2151 = vmatprep.subr.mxu0 %v446
    %2152 = vmatpush1.msra.mxu0 %v445
    %2153 = vmatprep.subr.mxu0 %v448
    %2154 = vmatpush1.msra.mxu0 %v447
    %2155 = vmatprep.subr.mxu0 %v450
    %2156 = vmatpush1.msra.mxu0 %v449
    %2157 = vmatprep.subr.mxu0 %v452
    %2158 = vmatpush1.msra.mxu0 %v451
    %2159 = vmatprep.subr.mxu0 %v454
    %2160 = vmatpush1.msra.mxu0 %v453
    %2161 = vmatprep.subr.mxu0 %v456
    %2162 = vmatpush1.msra.mxu0 %v455
    %2163 = vmatprep.subr.mxu0 %v458
    %2164 = vmatpush1.msra.mxu0 %v457
    %2165 = vmatprep.subr.mxu0 %v460
    %2166 = vmatpush1.msra.mxu0 %v459
    %2167 = vmatprep.subr.mxu0 %v462
    %2168 = vmatpush1.msra.mxu0 %v461
    %2169 = vmatprep.subr.mxu0 %v464
    %2170 = vmatpush1.msra.mxu0 %v463
    %2171 = vmatprep.subr.mxu0 0.0
    %2172 = vmatpush1.msra.mxu0 0.0
    %2173 = vmatprep.subr.mxu0 0.0
    %2174 = vmatpush1.msra.mxu0 0.0
    %2175 = vmatprep.subr.mxu0 0.0
    %2176 = vmatpush1.msra.mxu0 0.0
    %2177 = vmatprep.subr.mxu0 0.0
    %2178 = vmatpush1.msra.mxu0 0.0
    %2179 = vmatprep.subr.mxu0 0.0
    %2180 = vmatpush1.msra.mxu0 0.0
    %2181 = vmatprep.subr.mxu0 0.0
    %2182 = vmatpush1.msra.mxu0 0.0
    %2183 = vmatprep.subr.mxu0 0.0
    %2184 = vmatpush1.msra.mxu0 0.0
    %2185 = vmatprep.subr.mxu0 0.0
    %2186 = vmatpush1.msra.mxu0 0.0
    %2187 = vmatprep.subr.mxu0 0.0
    %2188 = vmatpush1.msra.mxu0 0.0
    %2189 = vmatprep.subr.mxu0 0.0
    %2190 = vmatpush1.msra.mxu0 0.0
    %2191 = vmatprep.subr.mxu0 0.0
    %2192 = vmatpush1.msra.mxu0 0.0
    %2193 = vmatprep.subr.mxu0 0.0
    %2194 = vmatpush1.msra.mxu0 0.0
    %2195 = vmatprep.subr.mxu0 0.0
    %2196 = vmatpush1.msra.mxu0 0.0
    %2197 = vmatprep.subr.mxu0 0.0
    %2198 = vmatpush1.msra.mxu0 0.0
    %2199 = vmatprep.subr.mxu0 0.0
    %2200 = vmatpush1.msra.mxu0 0.0
    %2201 = vmatprep.subr.mxu0 0.0
    %2202 = vmatpush1.msra.mxu0 0.0
    %2203 = vmatprep.mubr.f32.mxu0 0.0
    %2204 = vmatmul.mubr.f32.gmra.mrb[0].mxu0 %v1833
    %v2205 = vpop.f32.mrb[0].mxu0
    %v2206 = vadd.f32 0.0, %v2205
    %v2207 = vpop.f32.mrb[0].mxu0
    %v2208 = vadd.f32 0.0, %v2207
    %2209 = vdwg.mxu0
    %v2210 = vadd.f32 %v2136, %v2206
    %v2211 = vxor.u32 %v2210, 2147483648
    %v2212 = vmul.f32 %v2211, 1.442695
    %v2213 = vpow.pop %v2212
    %v2214 = vadd.f32 %v2213, 1.0
    %v2215 = vrcp.pop %v2214
    %v2216 = vmul.f32 1.0, %v2215
    %v2217 = vadd.f32 %v2137, %v2208
    %v2218 = vxor.u32 %v2217, 2147483648
    %v2219 = vmul.f32 %v2218, 1.442695
    %v2220 = vpow.pop %v2219
    %v2221 = vadd.f32 %v2220, 1.0
    %v2222 = vrcp.pop %v2221
    %v2223 = vmul.f32 1.0, %v2222
    %2224 = vmatprep.subr.mxu0 0.0
    %2225 = vmatpush1.msra.mxu0 %v536
    %2226 = vmatprep.subr.mxu0 0.0
    %2227 = vmatpush1.msra.mxu0 %v537
    %2228 = vmatprep.subr.mxu0 0.0
    %2229 = vmatpush1.msra.mxu0 %v538
    %2230 = vmatprep.subr.mxu0 0.0
    %2231 = vmatpush1.msra.mxu0 %v539
    %2232 = vmatprep.subr.mxu0 0.0
    %2233 = vmatpush1.msra.mxu0 %v540
    %2234 = vmatprep.subr.mxu0 0.0
    %2235 = vmatpush1.msra.mxu0 %v541
    %2236 = vmatprep.subr.mxu0 0.0
    %2237 = vmatpush1.msra.mxu0 %v542
    %2238 = vmatprep.subr.mxu0 0.0
    %2239 = vmatpush1.msra.mxu0 %v543
    %2240 = vmatprep.subr.mxu0 0.0
    %2241 = vmatpush1.msra.mxu0 %v544
    %2242 = vmatprep.subr.mxu0 0.0
    %2243 = vmatpush1.msra.mxu0 %v545
    %2244 = vmatprep.subr.mxu0 0.0
    %2245 = vmatpush1.msra.mxu0 %v546
    %2246 = vmatprep.subr.mxu0 0.0
    %2247 = vmatpush1.msra.mxu0 %v547
    %2248 = vmatprep.subr.mxu0 0.0
    %2249 = vmatpush1.msra.mxu0 %v548
    %2250 = vmatprep.subr.mxu0 0.0
    %2251 = vmatpush1.msra.mxu0 %v549
    %2252 = vmatprep.subr.mxu0 0.0
    %2253 = vmatpush1.msra.mxu0 %v550
    %2254 = vmatprep.subr.mxu0 0.0
    %2255 = vmatpush1.msra.mxu0 %v551
    %2256 = vmatprep.subr.mxu0 0.0
    %2257 = vmatpush1.msra.mxu0 0.0
    %2258 = vmatprep.subr.mxu0 0.0
    %2259 = vmatpush1.msra.mxu0 0.0
    %2260 = vmatprep.subr.mxu0 0.0
    %2261 = vmatpush1.msra.mxu0 0.0
    %2262 = vmatprep.subr.mxu0 0.0
    %2263 = vmatpush1.msra.mxu0 0.0
    %2264 = vmatprep.subr.mxu0 0.0
    %2265 = vmatpush1.msra.mxu0 0.0
    %2266 = vmatprep.subr.mxu0 0.0
    %2267 = vmatpush1.msra.mxu0 0.0
    %2268 = vmatprep.subr.mxu0 0.0
    %2269 = vmatpush1.msra.mxu0 0.0
    %2270 = vmatprep.subr.mxu0 0.0
    %2271 = vmatpush1.msra.mxu0 0.0
    %2272 = vmatprep.subr.mxu0 0.0
    %2273 = vmatpush1.msra.mxu0 0.0
    %2274 = vmatprep.subr.mxu0 0.0
    %2275 = vmatpush1.msra.mxu0 0.0
    %2276 = vmatprep.subr.mxu0 0.0
    %2277 = vmatpush1.msra.mxu0 0.0
    %2278 = vmatprep.subr.mxu0 0.0
    %2279 = vmatpush1.msra.mxu0 0.0
    %2280 = vmatprep.subr.mxu0 0.0
    %2281 = vmatpush1.msra.mxu0 0.0
    %2282 = vmatprep.subr.mxu0 0.0
    %2283 = vmatpush1.msra.mxu0 0.0
    %2284 = vmatprep.subr.mxu0 0.0
    %2285 = vmatpush1.msra.mxu0 0.0
    %2286 = vmatprep.subr.mxu0 0.0
    %2287 = vmatpush1.msra.mxu0 0.0
    %2288 = vmatprep.mubr.f32.mxu0 0.0
    %2289 = vmatmul.mubr.f32.gmra.mrb[0].mxu0 %v1833
    %v2290 = vpop.f32.mrb[0].mxu0
    %v2291 = vadd.f32 %v401, %v2290
    %v2292 = vpop.f32.mrb[0].mxu0
    %2293 = vdwg.mxu0
    %v2294 = vmul.f32 %v2216, %v2291
    %v2295 = vadd.f32 %v2138, %v2294
    %v2296 = vtanh.pop %v2295
    %v2297 = vsub.f32 %v1833, %v2296
    %v2298 = vmul.f32 %v2223, %v2297
    %v2299 = vadd.f32 %v2296, %v2298
    %2300 = vmatprep.subr.mxu0 %v807
    %2301 = vmatpush1.msra.mxu0 %v806
    %2302 = vmatprep.subr.mxu0 %v810
    %2303 = vmatpush1.msra.mxu0 %v809
    %2304 = vmatprep.subr.mxu0 %v813
    %2305 = vmatpush1.msra.mxu0 %v812
    %2306 = vmatprep.subr.mxu0 %v816
    %2307 = vmatpush1.msra.mxu0 %v815
    %2308 = vmatprep.subr.mxu0 %v819
    %2309 = vmatpush1.msra.mxu0 %v818
    %2310 = vmatprep.subr.mxu0 %v822
    %2311 = vmatpush1.msra.mxu0 %v821
    %2312 = vmatprep.subr.mxu0 %v825
    %2313 = vmatpush1.msra.mxu0 %v824
    %2314 = vmatprep.subr.mxu0 %v828
    %2315 = vmatpush1.msra.mxu0 %v827
    %2316 = vmatprep.subr.mxu0 %v831
    %2317 = vmatpush1.msra.mxu0 %v830
    %2318 = vmatprep.subr.mxu0 %v834
    %2319 = vmatpush1.msra.mxu0 %v833
    %2320 = vmatprep.subr.mxu0 %v837
    %2321 = vmatpush1.msra.mxu0 %v836
    %2322 = vmatprep.subr.mxu0 %v840
    %2323 = vmatpush1.msra.mxu0 %v839
    %2324 = vmatprep.subr.mxu0 %v843
    %2325 = vmatpush1.msra.mxu0 %v842
    %2326 = vmatprep.subr.mxu0 %v846
    %2327 = vmatpush1.msra.mxu0 %v845
    %2328 = vmatprep.subr.mxu0 %v849
    %2329 = vmatpush1.msra.mxu0 %v848
    %2330 = vmatprep.subr.mxu0 %v852
    %2331 = vmatpush1.msra.mxu0 %v851
    %2332 = vmatprep.subr.mxu0 0.0
    %2333 = vmatpush1.msra.mxu0 0.0
    %2334 = vmatprep.subr.mxu0 0.0
    %2335 = vmatpush1.msra.mxu0 0.0
    %2336 = vmatprep.subr.mxu0 0.0
    %2337 = vmatpush1.msra.mxu0 0.0
    %2338 = vmatprep.subr.mxu0 0.0
    %2339 = vmatpush1.msra.mxu0 0.0
    %2340 = vmatprep.subr.mxu0 0.0
    %2341 = vmatpush1.msra.mxu0 0.0
    %2342 = vmatprep.subr.mxu0 0.0
    %2343 = vmatpush1.msra.mxu0 0.0
    %2344 = vmatprep.subr.mxu0 0.0
    %2345 = vmatpush1.msra.mxu0 0.0
    %2346 = vmatprep.subr.mxu0 0.0
    %2347 = vmatpush1.msra.mxu0 0.0
    %2348 = vmatprep.subr.mxu0 0.0
    %2349 = vmatpush1.msra.mxu0 0.0
    %2350 = vmatprep.subr.mxu0 0.0
    %2351 = vmatpush1.msra.mxu0 0.0
    %2352 = vmatprep.subr.mxu0 0.0
    %2353 = vmatpush1.msra.mxu0 0.0
    %2354 = vmatprep.subr.mxu0 0.0
    %2355 = vmatpush1.msra.mxu0 0.0
    %2356 = vmatprep.subr.mxu0 0.0
    %2357 = vmatpush1.msra.mxu0 0.0
    %2358 = vmatprep.subr.mxu0 0.0
    %2359 = vmatpush1.msra.mxu0 0.0
    %2360 = vmatprep.subr.mxu0 0.0
    %2361 = vmatpush1.msra.mxu0 0.0
    %2362 = vmatprep.subr.mxu0 0.0
    %2363 = vmatpush1.msra.mxu0 0.0
    %2364 = vmatprep.mubr.f32.mxu0 0.0
    %2365 = vmatmul.mubr.f32.gmra.mrb[0].mxu0 %v1833
    %v2366 = vpop.f32.mrb[0].mxu0
    %v2367 = vadd.f32 %v408, %v2366
    %v2368 = vpop.f32.mrb[0].mxu0
    %v2369 = vadd.f32 %v412, %v2368
    %2370 = vdwg.mxu0
    %2371 = vmatprep.subr.mxu0 0.0
    %2372 = vmatpush1.msra.mxu0 %v808
    %2373 = vmatprep.subr.mxu0 0.0
    %2374 = vmatpush1.msra.mxu0 %v811
    %2375 = vmatprep.subr.mxu0 0.0
    %2376 = vmatpush1.msra.mxu0 %v814
    %2377 = vmatprep.subr.mxu0 0.0
    %2378 = vmatpush1.msra.mxu0 %v817
    %2379 = vmatprep.subr.mxu0 0.0
    %2380 = vmatpush1.msra.mxu0 %v820
    %2381 = vmatprep.subr.mxu0 0.0
    %2382 = vmatpush1.msra.mxu0 %v823
    %2383 = vmatprep.subr.mxu0 0.0
    %2384 = vmatpush1.msra.mxu0 %v826
    %2385 = vmatprep.subr.mxu0 0.0
    %2386 = vmatpush1.msra.mxu0 %v829
    %2387 = vmatprep.subr.mxu0 0.0
    %2388 = vmatpush1.msra.mxu0 %v832
    %2389 = vmatprep.subr.mxu0 0.0
    %2390 = vmatpush1.msra.mxu0 %v835
    %2391 = vmatprep.subr.mxu0 0.0
    %2392 = vmatpush1.msra.mxu0 %v838
    %2393 = vmatprep.subr.mxu0 0.0
    %2394 = vmatpush1.msra.mxu0 %v841
    %2395 = vmatprep.subr.mxu0 0.0
    %2396 = vmatpush1.msra.mxu0 %v844
    %2397 = vmatprep.subr.mxu0 0.0
    %2398 = vmatpush1.msra.mxu0 %v847
    %2399 = vmatprep.subr.mxu0 0.0
    %2400 = vmatpush1.msra.mxu0 %v850
    %2401 = vmatprep.subr.mxu0 0.0
    %2402 = vmatpush1.msra.mxu0 %v853
    %2403 = vmatprep.subr.mxu0 0.0
    %2404 = vmatpush1.msra.mxu0 0.0
    %2405 = vmatprep.subr.mxu0 0.0
    %2406 = vmatpush1.msra.mxu0 0.0
    %2407 = vmatprep.subr.mxu0 0.0
    %2408 = vmatpush1.msra.mxu0 0.0
    %2409 = vmatprep.subr.mxu0 0.0
    %2410 = vmatpush1.msra.mxu0 0.0
    %2411 = vmatprep.subr.mxu0 0.0
    %2412 = vmatpush1.msra.mxu0 0.0
    %2413 = vmatprep.subr.mxu0 0.0
    %2414 = vmatpush1.msra.mxu0 0.0
    %2415 = vmatprep.subr.mxu0 0.0
    %2416 = vmatpush1.msra.mxu0 0.0
    %2417 = vmatprep.subr.mxu0 0.0
    %2418 = vmatpush1.msra.mxu0 0.0
    %2419 = vmatprep.subr.mxu0 0.0
    %2420 = vmatpush1.msra.mxu0 0.0
    %2421 = vmatprep.subr.mxu0 0.0
    %2422 = vmatpush1.msra.mxu0 0.0
    %2423 = vmatprep.subr.mxu0 0.0
    %2424 = vmatpush1.msra.mxu0 0.0
    %2425 = vmatprep.subr.mxu0 0.0
    %2426 = vmatpush1.msra.mxu0 0.0
    %2427 = vmatprep.subr.mxu0 0.0
    %2428 = vmatpush1.msra.mxu0 0.0
    %2429 = vmatprep.subr.mxu0 0.0
    %2430 = vmatpush1.msra.mxu0 0.0
    %2431 = vmatprep.subr.mxu0 0.0
    %2432 = vmatpush1.msra.mxu0 0.0
    %2433 = vmatprep.subr.mxu0 0.0
    %2434 = vmatpush1.msra.mxu0 0.0
    %2435 = vmatprep.mubr.f32.mxu0 0.0
    %2436 = vmatmul.mubr.f32.gmra.mrb[0].mxu0 %v1833
    %v2437 = vpop.f32.mrb[0].mxu0
    %v2438 = vadd.f32 %v416, %v2437
    %v2439 = vpop.f32.mrb[0].mxu0
    %2440 = vdwg.mxu0
    %2441 = vmatprep.subr.mxu0 %v996
    %2442 = vmatpush1.msra.mxu0 %v995
    %2443 = vmatprep.subr.mxu0 %v998
    %2444 = vmatpush1.msra.mxu0 %v997
    %2445 = vmatprep.subr.mxu0 %v1000
    %2446 = vmatpush1.msra.mxu0 %v999
    %2447 = vmatprep.subr.mxu0 %v1002
    %2448 = vmatpush1.msra.mxu0 %v1001
    %2449 = vmatprep.subr.mxu0 %v1004
    %2450 = vmatpush1.msra.mxu0 %v1003
    %2451 = vmatprep.subr.mxu0 %v1006
    %2452 = vmatpush1.msra.mxu0 %v1005
    %2453 = vmatprep.subr.mxu0 %v1008
    %2454 = vmatpush1.msra.mxu0 %v1007
    %2455 = vmatprep.subr.mxu0 %v1010
    %2456 = vmatpush1.msra.mxu0 %v1009
    %2457 = vmatprep.subr.mxu0 %v1012
    %2458 = vmatpush1.msra.mxu0 %v1011
    %2459 = vmatprep.subr.mxu0 %v1014
    %2460 = vmatpush1.msra.mxu0 %v1013
    %2461 = vmatprep.subr.mxu0 %v1016
    %2462 = vmatpush1.msra.mxu0 %v1015
    %2463 = vmatprep.subr.mxu0 %v1018
    %2464 = vmatpush1.msra.mxu0 %v1017
    %2465 = vmatprep.subr.mxu0 %v1020
    %2466 = vmatpush1.msra.mxu0 %v1019
    %2467 = vmatprep.subr.mxu0 %v1022
    %2468 = vmatpush1.msra.mxu0 %v1021
    %2469 = vmatprep.subr.mxu0 %v1024
    %2470 = vmatpush1.msra.mxu0 %v1023
    %2471 = vmatprep.subr.mxu0 %v1026
    %2472 = vmatpush1.msra.mxu0 %v1025
    %2473 = vmatprep.subr.mxu0 0.0
    %2474 = vmatpush1.msra.mxu0 0.0
    %2475 = vmatprep.subr.mxu0 0.0
    %2476 = vmatpush1.msra.mxu0 0.0
    %2477 = vmatprep.subr.mxu0 0.0
    %2478 = vmatpush1.msra.mxu0 0.0
    %2479 = vmatprep.subr.mxu0 0.0
    %2480 = vmatpush1.msra.mxu0 0.0
    %2481 = vmatprep.subr.mxu0 0.0
    %2482 = vmatpush1.msra.mxu0 0.0
    %2483 = vmatprep.subr.mxu0 0.0
    %2484 = vmatpush1.msra.mxu0 0.0
    %2485 = vmatprep.subr.mxu0 0.0
    %2486 = vmatpush1.msra.mxu0 0.0
    %2487 = vmatprep.subr.mxu0 0.0
    %2488 = vmatpush1.msra.mxu0 0.0
    %2489 = vmatprep.subr.mxu0 0.0
    %2490 = vmatpush1.msra.mxu0 0.0
    %2491 = vmatprep.subr.mxu0 0.0
    %2492 = vmatpush1.msra.mxu0 0.0
    %2493 = vmatprep.subr.mxu0 0.0
    %2494 = vmatpush1.msra.mxu0 0.0
    %2495 = vmatprep.subr.mxu0 0.0
    %2496 = vmatpush1.msra.mxu0 0.0
    %2497 = vmatprep.subr.mxu0 0.0
    %2498 = vmatpush1.msra.mxu0 0.0
    %2499 = vmatprep.subr.mxu0 0.0
    %2500 = vmatpush1.msra.mxu0 0.0
    %2501 = vmatprep.subr.mxu0 0.0
    %2502 = vmatpush1.msra.mxu0 0.0
    %2503 = vmatprep.subr.mxu0 0.0
    %2504 = vmatpush1.msra.mxu0 0.0
    %2505 = vmatprep.mubr.f32.mxu0 0.0
    %2506 = vmatmul.mubr.f32.gmra.mrb[0].mxu0 %v2135
    %v2507 = vpop.f32.mrb[0].mxu0
    %v2508 = vadd.f32 0.0, %v2507
    %v2509 = vpop.f32.mrb[0].mxu0
    %v2510 = vadd.f32 0.0, %v2509
    %2511 = vdwg.mxu0
    %v2512 = vadd.f32 %v2367, %v2508
    %v2513 = vxor.u32 %v2512, 2147483648
    %v2514 = vmul.f32 %v2513, 1.442695
    %v2515 = vpow.pop %v2514
    %v2516 = vadd.f32 %v2515, 1.0
    %v2517 = vrcp.pop %v2516
    %v2518 = vmul.f32 1.0, %v2517
    %v2519 = vadd.f32 %v2369, %v2510
    %v2520 = vxor.u32 %v2519, 2147483648
    %v2521 = vmul.f32 %v2520, 1.442695
    %v2522 = vpow.pop %v2521
    %v2523 = vadd.f32 %v2522, 1.0
    %v2524 = vrcp.pop %v2523
    %v2525 = vmul.f32 1.0, %v2524
    %2526 = vmatprep.subr.mxu0 0.0
    %2527 = vmatpush1.msra.mxu0 %v1098
    %2528 = vmatprep.subr.mxu0 0.0
    %2529 = vmatpush1.msra.mxu0 %v1099
    %2530 = vmatprep.subr.mxu0 0.0
    %2531 = vmatpush1.msra.mxu0 %v1100
    %2532 = vmatprep.subr.mxu0 0.0
    %2533 = vmatpush1.msra.mxu0 %v1101
    %2534 = vmatprep.subr.mxu0 0.0
    %2535 = vmatpush1.msra.mxu0 %v1102
    %2536 = vmatprep.subr.mxu0 0.0
    %2537 = vmatpush1.msra.mxu0 %v1103
    %2538 = vmatprep.subr.mxu0 0.0
    %2539 = vmatpush1.msra.mxu0 %v1104
    %2540 = vmatprep.subr.mxu0 0.0
    %2541 = vmatpush1.msra.mxu0 %v1105
    %2542 = vmatprep.subr.mxu0 0.0
    %2543 = vmatpush1.msra.mxu0 %v1106
    %2544 = vmatprep.subr.mxu0 0.0
    %2545 = vmatpush1.msra.mxu0 %v1107
    %2546 = vmatprep.subr.mxu0 0.0
    %2547 = vmatpush1.msra.mxu0 %v1108
    %2548 = vmatprep.subr.mxu0 0.0
    %2549 = vmatpush1.msra.mxu0 %v1109
    %2550 = vmatprep.subr.mxu0 0.0
    %2551 = vmatpush1.msra.mxu0 %v1110
    %2552 = vmatprep.subr.mxu0 0.0
    %2553 = vmatpush1.msra.mxu0 %v1111
    %2554 = vmatprep.subr.mxu0 0.0
    %2555 = vmatpush1.msra.mxu0 %v1112
    %2556 = vmatprep.subr.mxu0 0.0
    %2557 = vmatpush1.msra.mxu0 %v1113
    %2558 = vmatprep.subr.mxu0 0.0
    %2559 = vmatpush1.msra.mxu0 0.0
    %2560 = vmatprep.subr.mxu0 0.0
    %2561 = vmatpush1.msra.mxu0 0.0
    %2562 = vmatprep.subr.mxu0 0.0
    %2563 = vmatpush1.msra.mxu0 0.0
    %2564 = vmatprep.subr.mxu0 0.0
    %2565 = vmatpush1.msra.mxu0 0.0
    %2566 = vmatprep.subr.mxu0 0.0
    %2567 = vmatpush1.msra.mxu0 0.0
    %2568 = vmatprep.subr.mxu0 0.0
    %2569 = vmatpush1.msra.mxu0 0.0
    %2570 = vmatprep.subr.mxu0 0.0
    %2571 = vmatpush1.msra.mxu0 0.0
    %2572 = vmatprep.subr.mxu0 0.0
    %2573 = vmatpush1.msra.mxu0 0.0
    %2574 = vmatprep.subr.mxu0 0.0
    %2575 = vmatpush1.msra.mxu0 0.0
    %2576 = vmatprep.subr.mxu0 0.0
    %2577 = vmatpush1.msra.mxu0 0.0
    %2578 = vmatprep.subr.mxu0 0.0
    %2579 = vmatpush1.msra.mxu0 0.0
    %2580 = vmatprep.subr.mxu0 0.0
    %2581 = vmatpush1.msra.mxu0 0.0
    %2582 = vmatprep.subr.mxu0 0.0
    %2583 = vmatpush1.msra.mxu0 0.0
    %2584 = vmatprep.subr.mxu0 0.0
    %2585 = vmatpush1.msra.mxu0 0.0
    %2586 = vmatprep.subr.mxu0 0.0
    %2587 = vmatpush1.msra.mxu0 0.0
    %2588 = vmatprep.subr.mxu0 0.0
    %2589 = vmatpush1.msra.mxu0 0.0
    %2590 = vmatprep.mubr.f32.mxu0 0.0
    %2591 = vmatmul.mubr.f32.gmra.mrb[0].mxu0 %v2135
    %v2592 = vpop.f32.mrb[0].mxu0
    %v2593 = vadd.f32 %v425, %v2592
    %v2594 = vpop.f32.mrb[0].mxu0
    %2595 = vdwg.mxu0
    %v2596 = vmul.f32 %v2518, %v2593
    %v2597 = vadd.f32 %v2438, %v2596
    %v2598 = vtanh.pop %v2597
    %v2599 = vsub.f32 %v2135, %v2598
    %v2600 = vmul.f32 %v2525, %v2599
    %v2601 = vadd.f32 %v2598, %v2600
    %v2602 = vld [vmem:[#allocation2 + $0x78] sm:$0xff]
    %v2603 = vld [vmem:[#allocation2 + $0x80] sm:$0xff]
    %v2604 = vld [vmem:[#allocation2 + $0x88] sm:$0xff]
    %2605 = vmatprep.subr.mxu0 %v434
    %2606 = vmatpush1.msra.mxu0 %v433
    %2607 = vmatprep.subr.mxu0 %v436
    %2608 = vmatpush1.msra.mxu0 %v435
    %2609 = vmatprep.subr.mxu0 %v438
    %2610 = vmatpush1.msra.mxu0 %v437
    %2611 = vmatprep.subr.mxu0 %v440
    %2612 = vmatpush1.msra.mxu0 %v439
    %2613 = vmatprep.subr.mxu0 %v442
    %2614 = vmatpush1.msra.mxu0 %v441
    %2615 = vmatprep.subr.mxu0 %v444
    %2616 = vmatpush1.msra.mxu0 %v443
    %2617 = vmatprep.subr.mxu0 %v446
    %2618 = vmatpush1.msra.mxu0 %v445
    %2619 = vmatprep.subr.mxu0 %v448
    %2620 = vmatpush1.msra.mxu0 %v447
    %2621 = vmatprep.subr.mxu0 %v450
    %2622 = vmatpush1.msra.mxu0 %v449
    %2623 = vmatprep.subr.mxu0 %v452
    %2624 = vmatpush1.msra.mxu0 %v451
    %2625 = vmatprep.subr.mxu0 %v454
    %2626 = vmatpush1.msra.mxu0 %v453
    %2627 = vmatprep.subr.mxu0 %v456
    %2628 = vmatpush1.msra.mxu0 %v455
    %2629 = vmatprep.subr.mxu0 %v458
    %2630 = vmatpush1.msra.mxu0 %v457
    %2631 = vmatprep.subr.mxu0 %v460
    %2632 = vmatpush1.msra.mxu0 %v459
    %2633 = vmatprep.subr.mxu0 %v462
    %2634 = vmatpush1.msra.mxu0 %v461
    %2635 = vmatprep.subr.mxu0 %v464
    %2636 = vmatpush1.msra.mxu0 %v463
    %2637 = vmatprep.subr.mxu0 0.0
    %2638 = vmatpush1.msra.mxu0 0.0
    %2639 = vmatprep.subr.mxu0 0.0
    %2640 = vmatpush1.msra.mxu0 0.0
    %2641 = vmatprep.subr.mxu0 0.0
    %2642 = vmatpush1.msra.mxu0 0.0
    %2643 = vmatprep.subr.mxu0 0.0
    %2644 = vmatpush1.msra.mxu0 0.0
    %2645 = vmatprep.subr.mxu0 0.0
    %2646 = vmatpush1.msra.mxu0 0.0
    %2647 = vmatprep.subr.mxu0 0.0
    %2648 = vmatpush1.msra.mxu0 0.0
    %2649 = vmatprep.subr.mxu0 0.0
    %2650 = vmatpush1.msra.mxu0 0.0
    %2651 = vmatprep.subr.mxu0 0.0
    %2652 = vmatpush1.msra.mxu0 0.0
    %2653 = vmatprep.subr.mxu0 0.0
    %2654 = vmatpush1.msra.mxu0 0.0
    %2655 = vmatprep.subr.mxu0 0.0
    %2656 = vmatpush1.msra.mxu0 0.0
    %2657 = vmatprep.subr.mxu0 0.0
    %2658 = vmatpush1.msra.mxu0 0.0
    %2659 = vmatprep.subr.mxu0 0.0
    %2660 = vmatpush1.msra.mxu0 0.0
    %2661 = vmatprep.subr.mxu0 0.0
    %2662 = vmatpush1.msra.mxu0 0.0
    %2663 = vmatprep.subr.mxu0 0.0
    %2664 = vmatpush1.msra.mxu0 0.0
    %2665 = vmatprep.subr.mxu0 0.0
    %2666 = vmatpush1.msra.mxu0 0.0
    %2667 = vmatprep.subr.mxu0 0.0
    %2668 = vmatpush1.msra.mxu0 0.0
    %2669 = vmatprep.mubr.f32.mxu0 0.0
    %2670 = vmatmul.mubr.f32.gmra.mrb[0].mxu0 %v2299
    %v2671 = vpop.f32.mrb[0].mxu0
    %v2672 = vadd.f32 0.0, %v2671
    %v2673 = vpop.f32.mrb[0].mxu0
    %v2674 = vadd.f32 0.0, %v2673
    %2675 = vdwg.mxu0
    %v2676 = vadd.f32 %v2602, %v2672
    %v2677 = vxor.u32 %v2676, 2147483648
    %v2678 = vmul.f32 %v2677, 1.442695
    %v2679 = vpow.pop %v2678
    %v2680 = vadd.f32 %v2679, 1.0
    %v2681 = vrcp.pop %v2680
    %v2682 = vmul.f32 1.0, %v2681
    %v2683 = vadd.f32 %v2603, %v2674
    %v2684 = vxor.u32 %v2683, 2147483648
    %v2685 = vmul.f32 %v2684, 1.442695
    %v2686 = vpow.pop %v2685
    %v2687 = vadd.f32 %v2686, 1.0
    %v2688 = vrcp.pop %v2687
    %v2689 = vmul.f32 1.0, %v2688
    %2690 = vmatprep.subr.mxu0 0.0
    %2691 = vmatpush1.msra.mxu0 %v536
    %2692 = vmatprep.subr.mxu0 0.0
    %2693 = vmatpush1.msra.mxu0 %v537
    %2694 = vmatprep.subr.mxu0 0.0
    %2695 = vmatpush1.msra.mxu0 %v538
    %2696 = vmatprep.subr.mxu0 0.0
    %2697 = vmatpush1.msra.mxu0 %v539
    %2698 = vmatprep.subr.mxu0 0.0
    %2699 = vmatpush1.msra.mxu0 %v540
    %2700 = vmatprep.subr.mxu0 0.0
    %2701 = vmatpush1.msra.mxu0 %v541
    %2702 = vmatprep.subr.mxu0 0.0
    %2703 = vmatpush1.msra.mxu0 %v542
    %2704 = vmatprep.subr.mxu0 0.0
    %2705 = vmatpush1.msra.mxu0 %v543
    %2706 = vmatprep.subr.mxu0 0.0
    %2707 = vmatpush1.msra.mxu0 %v544
    %2708 = vmatprep.subr.mxu0 0.0
    %2709 = vmatpush1.msra.mxu0 %v545
    %2710 = vmatprep.subr.mxu0 0.0
    %2711 = vmatpush1.msra.mxu0 %v546
    %2712 = vmatprep.subr.mxu0 0.0
    %2713 = vmatpush1.msra.mxu0 %v547
    %2714 = vmatprep.subr.mxu0 0.0
    %2715 = vmatpush1.msra.mxu0 %v548
    %2716 = vmatprep.subr.mxu0 0.0
    %2717 = vmatpush1.msra.mxu0 %v549
    %2718 = vmatprep.subr.mxu0 0.0
    %2719 = vmatpush1.msra.mxu0 %v550
    %2720 = vmatprep.subr.mxu0 0.0
    %2721 = vmatpush1.msra.mxu0 %v551
    %2722 = vmatprep.subr.mxu0 0.0
    %2723 = vmatpush1.msra.mxu0 0.0
    %2724 = vmatprep.subr.mxu0 0.0
    %2725 = vmatpush1.msra.mxu0 0.0
    %2726 = vmatprep.subr.mxu0 0.0
    %2727 = vmatpush1.msra.mxu0 0.0
    %2728 = vmatprep.subr.mxu0 0.0
    %2729 = vmatpush1.msra.mxu0 0.0
    %2730 = vmatprep.subr.mxu0 0.0
    %2731 = vmatpush1.msra.mxu0 0.0
    %2732 = vmatprep.subr.mxu0 0.0
    %2733 = vmatpush1.msra.mxu0 0.0
    %2734 = vmatprep.subr.mxu0 0.0
    %2735 = vmatpush1.msra.mxu0 0.0
    %2736 = vmatprep.subr.mxu0 0.0
    %2737 = vmatpush1.msra.mxu0 0.0
    %2738 = vmatprep.subr.mxu0 0.0
    %2739 = vmatpush1.msra.mxu0 0.0
    %2740 = vmatprep.subr.mxu0 0.0
    %2741 = vmatpush1.msra.mxu0 0.0
    %2742 = vmatprep.subr.mxu0 0.0
    %2743 = vmatpush1.msra.mxu0 0.0
    %2744 = vmatprep.subr.mxu0 0.0
    %2745 = vmatpush1.msra.mxu0 0.0
    %2746 = vmatprep.subr.mxu0 0.0
    %2747 = vmatpush1.msra.mxu0 0.0
    %2748 = vmatprep.subr.mxu0 0.0
    %2749 = vmatpush1.msra.mxu0 0.0
    %2750 = vmatprep.subr.mxu0 0.0
    %2751 = vmatpush1.msra.mxu0 0.0
    %2752 = vmatprep.subr.mxu0 0.0
    %2753 = vmatpush1.msra.mxu0 0.0
    %2754 = vmatprep.mubr.f32.mxu0 0.0
    %2755 = vmatmul.mubr.f32.gmra.mrb[0].mxu0 %v2299
    %v2756 = vpop.f32.mrb[0].mxu0
    %v2757 = vadd.f32 %v401, %v2756
    %v2758 = vpop.f32.mrb[0].mxu0
    %2759 = vdwg.mxu0
    %v2760 = vmul.f32 %v2682, %v2757
    %v2761 = vadd.f32 %v2604, %v2760
    %v2762 = vtanh.pop %v2761
    %v2763 = vsub.f32 %v2299, %v2762
    %v2764 = vmul.f32 %v2689, %v2763
    %v2765 = vadd.f32 %v2762, %v2764
    %2766 = vmatprep.subr.mxu0 %v807
    %2767 = vmatpush1.msra.mxu0 %v806
    %2768 = vmatprep.subr.mxu0 %v810
    %2769 = vmatpush1.msra.mxu0 %v809
    %2770 = vmatprep.subr.mxu0 %v813
    %2771 = vmatpush1.msra.mxu0 %v812
    %2772 = vmatprep.subr.mxu0 %v816
    %2773 = vmatpush1.msra.mxu0 %v815
    %2774 = vmatprep.subr.mxu0 %v819
    %2775 = vmatpush1.msra.mxu0 %v818
    %2776 = vmatprep.subr.mxu0 %v822
    %2777 = vmatpush1.msra.mxu0 %v821
    %2778 = vmatprep.subr.mxu0 %v825
    %2779 = vmatpush1.msra.mxu0 %v824
    %2780 = vmatprep.subr.mxu0 %v828
    %2781 = vmatpush1.msra.mxu0 %v827
    %2782 = vmatprep.subr.mxu0 %v831
    %2783 = vmatpush1.msra.mxu0 %v830
    %2784 = vmatprep.subr.mxu0 %v834
    %2785 = vmatpush1.msra.mxu0 %v833
    %2786 = vmatprep.subr.mxu0 %v837
    %2787 = vmatpush1.msra.mxu0 %v836
    %2788 = vmatprep.subr.mxu0 %v840
    %2789 = vmatpush1.msra.mxu0 %v839
    %2790 = vmatprep.subr.mxu0 %v843
    %2791 = vmatpush1.msra.mxu0 %v842
    %2792 = vmatprep.subr.mxu0 %v846
    %2793 = vmatpush1.msra.mxu0 %v845
    %2794 = vmatprep.subr.mxu0 %v849
    %2795 = vmatpush1.msra.mxu0 %v848
    %2796 = vmatprep.subr.mxu0 %v852
    %2797 = vmatpush1.msra.mxu0 %v851
    %2798 = vmatprep.subr.mxu0 0.0
    %2799 = vmatpush1.msra.mxu0 0.0
    %2800 = vmatprep.subr.mxu0 0.0
    %2801 = vmatpush1.msra.mxu0 0.0
    %2802 = vmatprep.subr.mxu0 0.0
    %2803 = vmatpush1.msra.mxu0 0.0
    %2804 = vmatprep.subr.mxu0 0.0
    %2805 = vmatpush1.msra.mxu0 0.0
    %2806 = vmatprep.subr.mxu0 0.0
    %2807 = vmatpush1.msra.mxu0 0.0
    %2808 = vmatprep.subr.mxu0 0.0
    %2809 = vmatpush1.msra.mxu0 0.0
    %2810 = vmatprep.subr.mxu0 0.0
    %2811 = vmatpush1.msra.mxu0 0.0
    %2812 = vmatprep.subr.mxu0 0.0
    %2813 = vmatpush1.msra.mxu0 0.0
    %2814 = vmatprep.subr.mxu0 0.0
    %2815 = vmatpush1.msra.mxu0 0.0
    %2816 = vmatprep.subr.mxu0 0.0
    %2817 = vmatpush1.msra.mxu0 0.0
    %2818 = vmatprep.subr.mxu0 0.0
    %2819 = vmatpush1.msra.mxu0 0.0
    %2820 = vmatprep.subr.mxu0 0.0
    %2821 = vmatpush1.msra.mxu0 0.0
    %2822 = vmatprep.subr.mxu0 0.0
    %2823 = vmatpush1.msra.mxu0 0.0
    %2824 = vmatprep.subr.mxu0 0.0
    %2825 = vmatpush1.msra.mxu0 0.0
    %2826 = vmatprep.subr.mxu0 0.0
    %2827 = vmatpush1.msra.mxu0 0.0
    %2828 = vmatprep.subr.mxu0 0.0
    %2829 = vmatpush1.msra.mxu0 0.0
    %2830 = vmatprep.mubr.f32.mxu0 0.0
    %2831 = vmatmul.mubr.f32.gmra.mrb[0].mxu0 %v2299
    %v2832 = vpop.f32.mrb[0].mxu0
    %v2833 = vadd.f32 %v408, %v2832
    %v2834 = vpop.f32.mrb[0].mxu0
    %v2835 = vadd.f32 %v412, %v2834
    %2836 = vdwg.mxu0
    %2837 = vmatprep.subr.mxu0 0.0
    %2838 = vmatpush1.msra.mxu0 %v808
    %2839 = vmatprep.subr.mxu0 0.0
    %2840 = vmatpush1.msra.mxu0 %v811
    %2841 = vmatprep.subr.mxu0 0.0
    %2842 = vmatpush1.msra.mxu0 %v814
    %2843 = vmatprep.subr.mxu0 0.0
    %2844 = vmatpush1.msra.mxu0 %v817
    %2845 = vmatprep.subr.mxu0 0.0
    %2846 = vmatpush1.msra.mxu0 %v820
    %2847 = vmatprep.subr.mxu0 0.0
    %2848 = vmatpush1.msra.mxu0 %v823
    %2849 = vmatprep.subr.mxu0 0.0
    %2850 = vmatpush1.msra.mxu0 %v826
    %2851 = vmatprep.subr.mxu0 0.0
    %2852 = vmatpush1.msra.mxu0 %v829
    %2853 = vmatprep.subr.mxu0 0.0
    %2854 = vmatpush1.msra.mxu0 %v832
    %2855 = vmatprep.subr.mxu0 0.0
    %2856 = vmatpush1.msra.mxu0 %v835
    %2857 = vmatprep.subr.mxu0 0.0
    %2858 = vmatpush1.msra.mxu0 %v838
    %2859 = vmatprep.subr.mxu0 0.0
    %2860 = vmatpush1.msra.mxu0 %v841
    %2861 = vmatprep.subr.mxu0 0.0
    %2862 = vmatpush1.msra.mxu0 %v844
    %2863 = vmatprep.subr.mxu0 0.0
    %2864 = vmatpush1.msra.mxu0 %v847
    %2865 = vmatprep.subr.mxu0 0.0
    %2866 = vmatpush1.msra.mxu0 %v850
    %2867 = vmatprep.subr.mxu0 0.0
    %2868 = vmatpush1.msra.mxu0 %v853
    %2869 = vmatprep.subr.mxu0 0.0
    %2870 = vmatpush1.msra.mxu0 0.0
    %2871 = vmatprep.subr.mxu0 0.0
    %2872 = vmatpush1.msra.mxu0 0.0
    %2873 = vmatprep.subr.mxu0 0.0
    %2874 = vmatpush1.msra.mxu0 0.0
    %2875 = vmatprep.subr.mxu0 0.0
    %2876 = vmatpush1.msra.mxu0 0.0
    %2877 = vmatprep.subr.mxu0 0.0
    %2878 = vmatpush1.msra.mxu0 0.0
    %2879 = vmatprep.subr.mxu0 0.0
    %2880 = vmatpush1.msra.mxu0 0.0
    %2881 = vmatprep.subr.mxu0 0.0
    %2882 = vmatpush1.msra.mxu0 0.0
    %2883 = vmatprep.subr.mxu0 0.0
    %2884 = vmatpush1.msra.mxu0 0.0
    %2885 = vmatprep.subr.mxu0 0.0
    %2886 = vmatpush1.msra.mxu0 0.0
    %2887 = vmatprep.subr.mxu0 0.0
    %2888 = vmatpush1.msra.mxu0 0.0
    %2889 = vmatprep.subr.mxu0 0.0
    %2890 = vmatpush1.msra.mxu0 0.0
    %2891 = vmatprep.subr.mxu0 0.0
    %2892 = vmatpush1.msra.mxu0 0.0
    %2893 = vmatprep.subr.mxu0 0.0
    %2894 = vmatpush1.msra.mxu0 0.0
    %2895 = vmatprep.subr.mxu0 0.0
    %2896 = vmatpush1.msra.mxu0 0.0
    %2897 = vmatprep.subr.mxu0 0.0
    %2898 = vmatpush1.msra.mxu0 0.0
    %2899 = vmatprep.subr.mxu0 0.0
    %2900 = vmatpush1.msra.mxu0 0.0
    %2901 = vmatprep.mubr.f32.mxu0 0.0
    %2902 = vmatmul.mubr.f32.gmra.mrb[0].mxu0 %v2299
    %v2903 = vpop.f32.mrb[0].mxu0
    %v2904 = vadd.f32 %v416, %v2903
    %v2905 = vpop.f32.mrb[0].mxu0
    %2906 = vdwg.mxu0
    %2907 = vmatprep.subr.mxu0 %v996
    %2908 = vmatpush1.msra.mxu0 %v995
    %2909 = vmatprep.subr.mxu0 %v998
    %2910 = vmatpush1.msra.mxu0 %v997
    %2911 = vmatprep.subr.mxu0 %v1000
    %2912 = vmatpush1.msra.mxu0 %v999
    %2913 = vmatprep.subr.mxu0 %v1002
    %2914 = vmatpush1.msra.mxu0 %v1001
    %2915 = vmatprep.subr.mxu0 %v1004
    %2916 = vmatpush1.msra.mxu0 %v1003
    %2917 = vmatprep.subr.mxu0 %v1006
    %2918 = vmatpush1.msra.mxu0 %v1005
    %2919 = vmatprep.subr.mxu0 %v1008
    %2920 = vmatpush1.msra.mxu0 %v1007
    %2921 = vmatprep.subr.mxu0 %v1010
    %2922 = vmatpush1.msra.mxu0 %v1009
    %2923 = vmatprep.subr.mxu0 %v1012
    %2924 = vmatpush1.msra.mxu0 %v1011
    %2925 = vmatprep.subr.mxu0 %v1014
    %2926 = vmatpush1.msra.mxu0 %v1013
    %2927 = vmatprep.subr.mxu0 %v1016
    %2928 = vmatpush1.msra.mxu0 %v1015
    %2929 = vmatprep.subr.mxu0 %v1018
    %2930 = vmatpush1.msra.mxu0 %v1017
    %2931 = vmatprep.subr.mxu0 %v1020
    %2932 = vmatpush1.msra.mxu0 %v1019
    %2933 = vmatprep.subr.mxu0 %v1022
    %2934 = vmatpush1.msra.mxu0 %v1021
    %2935 = vmatprep.subr.mxu0 %v1024
    %2936 = vmatpush1.msra.mxu0 %v1023
    %2937 = vmatprep.subr.mxu0 %v1026
    %2938 = vmatpush1.msra.mxu0 %v1025
    %2939 = vmatprep.subr.mxu0 0.0
    %2940 = vmatpush1.msra.mxu0 0.0
    %2941 = vmatprep.subr.mxu0 0.0
    %2942 = vmatpush1.msra.mxu0 0.0
    %2943 = vmatprep.subr.mxu0 0.0
    %2944 = vmatpush1.msra.mxu0 0.0
    %2945 = vmatprep.subr.mxu0 0.0
    %2946 = vmatpush1.msra.mxu0 0.0
    %2947 = vmatprep.subr.mxu0 0.0
    %2948 = vmatpush1.msra.mxu0 0.0
    %2949 = vmatprep.subr.mxu0 0.0
    %2950 = vmatpush1.msra.mxu0 0.0
    %2951 = vmatprep.subr.mxu0 0.0
    %2952 = vmatpush1.msra.mxu0 0.0
    %2953 = vmatprep.subr.mxu0 0.0
    %2954 = vmatpush1.msra.mxu0 0.0
    %2955 = vmatprep.subr.mxu0 0.0
    %2956 = vmatpush1.msra.mxu0 0.0
    %2957 = vmatprep.subr.mxu0 0.0
    %2958 = vmatpush1.msra.mxu0 0.0
    %2959 = vmatprep.subr.mxu0 0.0
    %2960 = vmatpush1.msra.mxu0 0.0
    %2961 = vmatprep.subr.mxu0 0.0
    %2962 = vmatpush1.msra.mxu0 0.0
    %2963 = vmatprep.subr.mxu0 0.0
    %2964 = vmatpush1.msra.mxu0 0.0
    %2965 = vmatprep.subr.mxu0 0.0
    %2966 = vmatpush1.msra.mxu0 0.0
    %2967 = vmatprep.subr.mxu0 0.0
    %2968 = vmatpush1.msra.mxu0 0.0
    %2969 = vmatprep.subr.mxu0 0.0
    %2970 = vmatpush1.msra.mxu0 0.0
    %2971 = vmatprep.mubr.f32.mxu0 0.0
    %2972 = vmatmul.mubr.f32.gmra.mrb[0].mxu0 %v2601
    %v2973 = vpop.f32.mrb[0].mxu0
    %v2974 = vadd.f32 0.0, %v2973
    %v2975 = vpop.f32.mrb[0].mxu0
    %v2976 = vadd.f32 0.0, %v2975
    %2977 = vdwg.mxu0
    %v2978 = vadd.f32 %v2833, %v2974
    %v2979 = vxor.u32 %v2978, 2147483648
    %v2980 = vmul.f32 %v2979, 1.442695
    %v2981 = vpow.pop %v2980
    %v2982 = vadd.f32 %v2981, 1.0
    %v2983 = vrcp.pop %v2982
    %v2984 = vmul.f32 1.0, %v2983
    %v2985 = vadd.f32 %v2835, %v2976
    %v2986 = vxor.u32 %v2985, 2147483648
    %v2987 = vmul.f32 %v2986, 1.442695
    %v2988 = vpow.pop %v2987
    %v2989 = vadd.f32 %v2988, 1.0
    %v2990 = vrcp.pop %v2989
    %v2991 = vmul.f32 1.0, %v2990
    %2992 = vmatprep.subr.mxu0 0.0
    %2993 = vmatpush1.msra.mxu0 %v1098
    %2994 = vmatprep.subr.mxu0 0.0
    %2995 = vmatpush1.msra.mxu0 %v1099
    %2996 = vmatprep.subr.mxu0 0.0
    %2997 = vmatpush1.msra.mxu0 %v1100
    %2998 = vmatprep.subr.mxu0 0.0
    %2999 = vmatpush1.msra.mxu0 %v1101
    %3000 = vmatprep.subr.mxu0 0.0
    %3001 = vmatpush1.msra.mxu0 %v1102
    %3002 = vmatprep.subr.mxu0 0.0
    %3003 = vmatpush1.msra.mxu0 %v1103
    %3004 = vmatprep.subr.mxu0 0.0
    %3005 = vmatpush1.msra.mxu0 %v1104
    %3006 = vmatprep.subr.mxu0 0.0
    %3007 = vmatpush1.msra.mxu0 %v1105
    %3008 = vmatprep.subr.mxu0 0.0
    %3009 = vmatpush1.msra.mxu0 %v1106
    %3010 = vmatprep.subr.mxu0 0.0
    %3011 = vmatpush1.msra.mxu0 %v1107
    %3012 = vmatprep.subr.mxu0 0.0
    %3013 = vmatpush1.msra.mxu0 %v1108
    %3014 = vmatprep.subr.mxu0 0.0
    %3015 = vmatpush1.msra.mxu0 %v1109
    %3016 = vmatprep.subr.mxu0 0.0
    %3017 = vmatpush1.msra.mxu0 %v1110
    %3018 = vmatprep.subr.mxu0 0.0
    %3019 = vmatpush1.msra.mxu0 %v1111
    %3020 = vmatprep.subr.mxu0 0.0
    %3021 = vmatpush1.msra.mxu0 %v1112
    %3022 = vmatprep.subr.mxu0 0.0
    %3023 = vmatpush1.msra.mxu0 %v1113
    %3024 = vmatprep.subr.mxu0 0.0
    %3025 = vmatpush1.msra.mxu0 0.0
    %3026 = vmatprep.subr.mxu0 0.0
    %3027 = vmatpush1.msra.mxu0 0.0
    %3028 = vmatprep.subr.mxu0 0.0
    %3029 = vmatpush1.msra.mxu0 0.0
    %3030 = vmatprep.subr.mxu0 0.0
    %3031 = vmatpush1.msra.mxu0 0.0
    %3032 = vmatprep.subr.mxu0 0.0
    %3033 = vmatpush1.msra.mxu0 0.0
    %3034 = vmatprep.subr.mxu0 0.0
    %3035 = vmatpush1.msra.mxu0 0.0
    %3036 = vmatprep.subr.mxu0 0.0
    %3037 = vmatpush1.msra.mxu0 0.0
    %3038 = vmatprep.subr.mxu0 0.0
    %3039 = vmatpush1.msra.mxu0 0.0
    %3040 = vmatprep.subr.mxu0 0.0
    %3041 = vmatpush1.msra.mxu0 0.0
    %3042 = vmatprep.subr.mxu0 0.0
    %3043 = vmatpush1.msra.mxu0 0.0
    %3044 = vmatprep.subr.mxu0 0.0
    %3045 = vmatpush1.msra.mxu0 0.0
    %3046 = vmatprep.subr.mxu0 0.0
    %3047 = vmatpush1.msra.mxu0 0.0
    %3048 = vmatprep.subr.mxu0 0.0
    %3049 = vmatpush1.msra.mxu0 0.0
    %3050 = vmatprep.subr.mxu0 0.0
    %3051 = vmatpush1.msra.mxu0 0.0
    %3052 = vmatprep.subr.mxu0 0.0
    %3053 = vmatpush1.msra.mxu0 0.0
    %3054 = vmatprep.subr.mxu0 0.0
    %3055 = vmatpush1.msra.mxu0 0.0
    %3056 = vmatprep.mubr.f32.mxu0 0.0
    %3057 = vmatmul.mubr.f32.gmra.mrb[0].mxu0 %v2601
    %v3058 = vpop.f32.mrb[0].mxu0
    %v3059 = vadd.f32 %v425, %v3058
    %v3060 = vpop.f32.mrb[0].mxu0
    %3061 = vdwg.mxu0
    %v3062 = vmul.f32 %v2984, %v3059
    %v3063 = vadd.f32 %v2904, %v3062
    %v3064 = vtanh.pop %v3063
    %v3065 = vsub.f32 %v2601, %v3064
    %v3066 = vmul.f32 %v2991, %v3065
    %v3067 = vadd.f32 %v3064, %v3066
    %3068 = vmatprep.subr.mxu0 %v807
    %3069 = vmatpush1.msra.mxu0 %v806
    %3070 = vmatprep.subr.mxu0 %v810
    %3071 = vmatpush1.msra.mxu0 %v809
    %3072 = vmatprep.subr.mxu0 %v813
    %3073 = vmatpush1.msra.mxu0 %v812
    %3074 = vmatprep.subr.mxu0 %v816
    %3075 = vmatpush1.msra.mxu0 %v815
    %3076 = vmatprep.subr.mxu0 %v819
    %3077 = vmatpush1.msra.mxu0 %v818
    %3078 = vmatprep.subr.mxu0 %v822
    %3079 = vmatpush1.msra.mxu0 %v821
    %3080 = vmatprep.subr.mxu0 %v825
    %3081 = vmatpush1.msra.mxu0 %v824
    %3082 = vmatprep.subr.mxu0 %v828
    %3083 = vmatpush1.msra.mxu0 %v827
    %3084 = vmatprep.subr.mxu0 %v831
    %3085 = vmatpush1.msra.mxu0 %v830
    %3086 = vmatprep.subr.mxu0 %v834
    %3087 = vmatpush1.msra.mxu0 %v833
    %3088 = vmatprep.subr.mxu0 %v837
    %3089 = vmatpush1.msra.mxu0 %v836
    %3090 = vmatprep.subr.mxu0 %v840
    %3091 = vmatpush1.msra.mxu0 %v839
    %3092 = vmatprep.subr.mxu0 %v843
    %3093 = vmatpush1.msra.mxu0 %v842
    %3094 = vmatprep.subr.mxu0 %v846
    %3095 = vmatpush1.msra.mxu0 %v845
    %3096 = vmatprep.subr.mxu0 %v849
    %3097 = vmatpush1.msra.mxu0 %v848
    %3098 = vmatprep.subr.mxu0 %v852
    %3099 = vmatpush1.msra.mxu0 %v851
    %3100 = vmatprep.subr.mxu0 0.0
    %3101 = vmatpush1.msra.mxu0 0.0
    %3102 = vmatprep.subr.mxu0 0.0
    %3103 = vmatpush1.msra.mxu0 0.0
    %3104 = vmatprep.subr.mxu0 0.0
    %3105 = vmatpush1.msra.mxu0 0.0
    %3106 = vmatprep.subr.mxu0 0.0
    %3107 = vmatpush1.msra.mxu0 0.0
    %3108 = vmatprep.subr.mxu0 0.0
    %3109 = vmatpush1.msra.mxu0 0.0
    %3110 = vmatprep.subr.mxu0 0.0
    %3111 = vmatpush1.msra.mxu0 0.0
    %3112 = vmatprep.subr.mxu0 0.0
    %3113 = vmatpush1.msra.mxu0 0.0
    %3114 = vmatprep.subr.mxu0 0.0
    %3115 = vmatpush1.msra.mxu0 0.0
    %3116 = vmatprep.subr.mxu0 0.0
    %3117 = vmatpush1.msra.mxu0 0.0
    %3118 = vmatprep.subr.mxu0 0.0
    %3119 = vmatpush1.msra.mxu0 0.0
    %3120 = vmatprep.subr.mxu0 0.0
    %3121 = vmatpush1.msra.mxu0 0.0
    %3122 = vmatprep.subr.mxu0 0.0
    %3123 = vmatpush1.msra.mxu0 0.0
    %3124 = vmatprep.subr.mxu0 0.0
    %3125 = vmatpush1.msra.mxu0 0.0
    %3126 = vmatprep.subr.mxu0 0.0
    %3127 = vmatpush1.msra.mxu0 0.0
    %3128 = vmatprep.subr.mxu0 0.0
    %3129 = vmatpush1.msra.mxu0 0.0
    %3130 = vmatprep.subr.mxu0 0.0
    %3131 = vmatpush1.msra.mxu0 0.0
    %3132 = vmatprep.mubr.f32.mxu0 0.0
    %3133 = vmatmul.mubr.f32.gmra.mrb[0].mxu0 %v2765
    %v3134 = vpop.f32.mrb[0].mxu0
    %v3135 = vadd.f32 %v408, %v3134
    %v3136 = vpop.f32.mrb[0].mxu0
    %v3137 = vadd.f32 %v412, %v3136
    %3138 = vdwg.mxu0
    %3139 = vmatprep.subr.mxu0 0.0
    %3140 = vmatpush1.msra.mxu0 %v808
    %3141 = vmatprep.subr.mxu0 0.0
    %3142 = vmatpush1.msra.mxu0 %v811
    %3143 = vmatprep.subr.mxu0 0.0
    %3144 = vmatpush1.msra.mxu0 %v814
    %3145 = vmatprep.subr.mxu0 0.0
    %3146 = vmatpush1.msra.mxu0 %v817
    %3147 = vmatprep.subr.mxu0 0.0
    %3148 = vmatpush1.msra.mxu0 %v820
    %3149 = vmatprep.subr.mxu0 0.0
    %3150 = vmatpush1.msra.mxu0 %v823
    %3151 = vmatprep.subr.mxu0 0.0
    %3152 = vmatpush1.msra.mxu0 %v826
    %3153 = vmatprep.subr.mxu0 0.0
    %3154 = vmatpush1.msra.mxu0 %v829
    %3155 = vmatprep.subr.mxu0 0.0
    %3156 = vmatpush1.msra.mxu0 %v832
    %3157 = vmatprep.subr.mxu0 0.0
    %3158 = vmatpush1.msra.mxu0 %v835
    %3159 = vmatprep.subr.mxu0 0.0
    %3160 = vmatpush1.msra.mxu0 %v838
    %3161 = vmatprep.subr.mxu0 0.0
    %3162 = vmatpush1.msra.mxu0 %v841
    %3163 = vmatprep.subr.mxu0 0.0
    %3164 = vmatpush1.msra.mxu0 %v844
    %3165 = vmatprep.subr.mxu0 0.0
    %3166 = vmatpush1.msra.mxu0 %v847
    %3167 = vmatprep.subr.mxu0 0.0
    %3168 = vmatpush1.msra.mxu0 %v850
    %3169 = vmatprep.subr.mxu0 0.0
    %3170 = vmatpush1.msra.mxu0 %v853
    %3171 = vmatprep.subr.mxu0 0.0
    %3172 = vmatpush1.msra.mxu0 0.0
    %3173 = vmatprep.subr.mxu0 0.0
    %3174 = vmatpush1.msra.mxu0 0.0
    %3175 = vmatprep.subr.mxu0 0.0
    %3176 = vmatpush1.msra.mxu0 0.0
    %3177 = vmatprep.subr.mxu0 0.0
    %3178 = vmatpush1.msra.mxu0 0.0
    %3179 = vmatprep.subr.mxu0 0.0
    %3180 = vmatpush1.msra.mxu0 0.0
    %3181 = vmatprep.subr.mxu0 0.0
    %3182 = vmatpush1.msra.mxu0 0.0
    %3183 = vmatprep.subr.mxu0 0.0
    %3184 = vmatpush1.msra.mxu0 0.0
    %3185 = vmatprep.subr.mxu0 0.0
    %3186 = vmatpush1.msra.mxu0 0.0
    %3187 = vmatprep.subr.mxu0 0.0
    %3188 = vmatpush1.msra.mxu0 0.0
    %3189 = vmatprep.subr.mxu0 0.0
    %3190 = vmatpush1.msra.mxu0 0.0
    %3191 = vmatprep.subr.mxu0 0.0
    %3192 = vmatpush1.msra.mxu0 0.0
    %3193 = vmatprep.subr.mxu0 0.0
    %3194 = vmatpush1.msra.mxu0 0.0
    %3195 = vmatprep.subr.mxu0 0.0
    %3196 = vmatpush1.msra.mxu0 0.0
    %3197 = vmatprep.subr.mxu0 0.0
    %3198 = vmatpush1.msra.mxu0 0.0
    %3199 = vmatprep.subr.mxu0 0.0
    %3200 = vmatpush1.msra.mxu0 0.0
    %3201 = vmatprep.subr.mxu0 0.0
    %3202 = vmatpush1.msra.mxu0 0.0
    %3203 = vmatprep.mubr.f32.mxu0 0.0
    %3204 = vmatmul.mubr.f32.gmra.mrb[0].mxu0 %v2765
    %v3205 = vpop.f32.mrb[0].mxu0
    %v3206 = vadd.f32 %v416, %v3205
    %v3207 = vpop.f32.mrb[0].mxu0
    %3208 = vdwg.mxu0
    %3209 = vmatprep.subr.mxu0 %v996
    %3210 = vmatpush1.msra.mxu0 %v995
    %3211 = vmatprep.subr.mxu0 %v998
    %3212 = vmatpush1.msra.mxu0 %v997
    %3213 = vmatprep.subr.mxu0 %v1000
    %3214 = vmatpush1.msra.mxu0 %v999
    %3215 = vmatprep.subr.mxu0 %v1002
    %3216 = vmatpush1.msra.mxu0 %v1001
    %3217 = vmatprep.subr.mxu0 %v1004
    %3218 = vmatpush1.msra.mxu0 %v1003
    %3219 = vmatprep.subr.mxu0 %v1006
    %3220 = vmatpush1.msra.mxu0 %v1005
    %3221 = vmatprep.subr.mxu0 %v1008
    %3222 = vmatpush1.msra.mxu0 %v1007
    %3223 = vmatprep.subr.mxu0 %v1010
    %3224 = vmatpush1.msra.mxu0 %v1009
    %3225 = vmatprep.subr.mxu0 %v1012
    %3226 = vmatpush1.msra.mxu0 %v1011
    %3227 = vmatprep.subr.mxu0 %v1014
    %3228 = vmatpush1.msra.mxu0 %v1013
    %3229 = vmatprep.subr.mxu0 %v1016
    %3230 = vmatpush1.msra.mxu0 %v1015
    %3231 = vmatprep.subr.mxu0 %v1018
    %3232 = vmatpush1.msra.mxu0 %v1017
    %3233 = vmatprep.subr.mxu0 %v1020
    %3234 = vmatpush1.msra.mxu0 %v1019
    %3235 = vmatprep.subr.mxu0 %v1022
    %3236 = vmatpush1.msra.mxu0 %v1021
    %3237 = vmatprep.subr.mxu0 %v1024
    %3238 = vmatpush1.msra.mxu0 %v1023
    %3239 = vmatprep.subr.mxu0 %v1026
    %3240 = vmatpush1.msra.mxu0 %v1025
    %3241 = vmatprep.subr.mxu0 0.0
    %3242 = vmatpush1.msra.mxu0 0.0
    %3243 = vmatprep.subr.mxu0 0.0
    %3244 = vmatpush1.msra.mxu0 0.0
    %3245 = vmatprep.subr.mxu0 0.0
    %3246 = vmatpush1.msra.mxu0 0.0
    %3247 = vmatprep.subr.mxu0 0.0
    %3248 = vmatpush1.msra.mxu0 0.0
    %3249 = vmatprep.subr.mxu0 0.0
    %3250 = vmatpush1.msra.mxu0 0.0
    %3251 = vmatprep.subr.mxu0 0.0
    %3252 = vmatpush1.msra.mxu0 0.0
    %3253 = vmatprep.subr.mxu0 0.0
    %3254 = vmatpush1.msra.mxu0 0.0
    %3255 = vmatprep.subr.mxu0 0.0
    %3256 = vmatpush1.msra.mxu0 0.0
    %3257 = vmatprep.subr.mxu0 0.0
    %3258 = vmatpush1.msra.mxu0 0.0
    %3259 = vmatprep.subr.mxu0 0.0
    %3260 = vmatpush1.msra.mxu0 0.0
    %3261 = vmatprep.subr.mxu0 0.0
    %3262 = vmatpush1.msra.mxu0 0.0
    %3263 = vmatprep.subr.mxu0 0.0
    %3264 = vmatpush1.msra.mxu0 0.0
    %3265 = vmatprep.subr.mxu0 0.0
    %3266 = vmatpush1.msra.mxu0 0.0
    %3267 = vmatprep.subr.mxu0 0.0
    %3268 = vmatpush1.msra.mxu0 0.0
    %3269 = vmatprep.subr.mxu0 0.0
    %3270 = vmatpush1.msra.mxu0 0.0
    %3271 = vmatprep.subr.mxu0 0.0
    %3272 = vmatpush1.msra.mxu0 0.0
    %3273 = vmatprep.mubr.f32.mxu0 0.0
    %3274 = vmatmul.mubr.f32.gmra.mrb[0].mxu0 %v3067
    %v3275 = vpop.f32.mrb[0].mxu0
    %v3276 = vadd.f32 0.0, %v3275
    %v3277 = vpop.f32.mrb[0].mxu0
    %v3278 = vadd.f32 0.0, %v3277
    %3279 = vdwg.mxu0
    %v3280 = vadd.f32 %v3135, %v3276
    %v3281 = vxor.u32 %v3280, 2147483648
    %v3282 = vmul.f32 %v3281, 1.442695
    %v3283 = vpow.pop %v3282
    %v3284 = vadd.f32 %v3283, 1.0
    %v3285 = vrcp.pop %v3284
    %v3286 = vmul.f32 1.0, %v3285
    %v3287 = vadd.f32 %v3137, %v3278
    %v3288 = vxor.u32 %v3287, 2147483648
    %v3289 = vmul.f32 %v3288, 1.442695
    %v3290 = vpow.pop %v3289
    %v3291 = vadd.f32 %v3290, 1.0
    %v3292 = vrcp.pop %v3291
    %v3293 = vmul.f32 1.0, %v3292
    %3294 = vmatprep.subr.mxu0 0.0
    %3295 = vmatpush1.msra.mxu0 %v1098
    %3296 = vmatprep.subr.mxu0 0.0
    %3297 = vmatpush1.msra.mxu0 %v1099
    %3298 = vmatprep.subr.mxu0 0.0
    %3299 = vmatpush1.msra.mxu0 %v1100
    %3300 = vmatprep.subr.mxu0 0.0
    %3301 = vmatpush1.msra.mxu0 %v1101
    %3302 = vmatprep.subr.mxu0 0.0
    %3303 = vmatpush1.msra.mxu0 %v1102
    %3304 = vmatprep.subr.mxu0 0.0
    %3305 = vmatpush1.msra.mxu0 %v1103
    %3306 = vmatprep.subr.mxu0 0.0
    %3307 = vmatpush1.msra.mxu0 %v1104
    %3308 = vmatprep.subr.mxu0 0.0
    %3309 = vmatpush1.msra.mxu0 %v1105
    %3310 = vmatprep.subr.mxu0 0.0
    %3311 = vmatpush1.msra.mxu0 %v1106
    %3312 = vmatprep.subr.mxu0 0.0
    %3313 = vmatpush1.msra.mxu0 %v1107
    %3314 = vmatprep.subr.mxu0 0.0
    %3315 = vmatpush1.msra.mxu0 %v1108
    %3316 = vmatprep.subr.mxu0 0.0
    %3317 = vmatpush1.msra.mxu0 %v1109
    %3318 = vmatprep.subr.mxu0 0.0
    %3319 = vmatpush1.msra.mxu0 %v1110
    %3320 = vmatprep.subr.mxu0 0.0
    %3321 = vmatpush1.msra.mxu0 %v1111
    %3322 = vmatprep.subr.mxu0 0.0
    %3323 = vmatpush1.msra.mxu0 %v1112
    %3324 = vmatprep.subr.mxu0 0.0
    %3325 = vmatpush1.msra.mxu0 %v1113
    %3326 = vmatprep.subr.mxu0 0.0
    %3327 = vmatpush1.msra.mxu0 0.0
    %3328 = vmatprep.subr.mxu0 0.0
    %3329 = vmatpush1.msra.mxu0 0.0
    %3330 = vmatprep.subr.mxu0 0.0
    %3331 = vmatpush1.msra.mxu0 0.0
    %3332 = vmatprep.subr.mxu0 0.0
    %3333 = vmatpush1.msra.mxu0 0.0
    %3334 = vmatprep.subr.mxu0 0.0
    %3335 = vmatpush1.msra.mxu0 0.0
    %3336 = vmatprep.subr.mxu0 0.0
    %3337 = vmatpush1.msra.mxu0 0.0
    %3338 = vmatprep.subr.mxu0 0.0
    %3339 = vmatpush1.msra.mxu0 0.0
    %3340 = vmatprep.subr.mxu0 0.0
    %3341 = vmatpush1.msra.mxu0 0.0
    %3342 = vmatprep.subr.mxu0 0.0
    %3343 = vmatpush1.msra.mxu0 0.0
    %3344 = vmatprep.subr.mxu0 0.0
    %3345 = vmatpush1.msra.mxu0 0.0
    %3346 = vmatprep.subr.mxu0 0.0
    %3347 = vmatpush1.msra.mxu0 0.0
    %3348 = vmatprep.subr.mxu0 0.0
    %3349 = vmatpush1.msra.mxu0 0.0
    %3350 = vmatprep.subr.mxu0 0.0
    %3351 = vmatpush1.msra.mxu0 0.0
    %3352 = vmatprep.subr.mxu0 0.0
    %3353 = vmatpush1.msra.mxu0 0.0
    %3354 = vmatprep.subr.mxu0 0.0
    %3355 = vmatpush1.msra.mxu0 0.0
    %3356 = vmatprep.subr.mxu0 0.0
    %3357 = vmatpush1.msra.mxu0 0.0
    %3358 = vmatprep.mubr.f32.mxu0 0.0
    %3359 = vmatmul.mubr.f32.gmra.mrb[0].mxu0 %v3067
    %v3360 = vpop.f32.mrb[0].mxu0
    %v3361 = vadd.f32 %v425, %v3360
    %v3362 = vpop.f32.mrb[0].mxu0
    %3363 = vdwg.mxu0
    %v3364 = vmul.f32 %v3286, %v3361
    %v3365 = vadd.f32 %v3206, %v3364
    %v3366 = vtanh.pop %v3365
    %v3367 = vsub.f32 %v3067, %v3366
    %v3368 = vmul.f32 %v3293, %v3367
    %v3369 = vadd.f32 %v3366, %v3368
    %3370 = vst [vmem:[#allocation15] sm:$0xff] %v2765
    %s3371 = scalar_lea.vmem [#allocation15], 8
    %3372 = vst [vmem:[%s3371] sm:$0xff] %v3369
    %v3373 = vld [vmem:[#allocation12] sm:$0xff]
    %v3374 = vld [vmem:[#allocation12 + $0x8] sm:$0xff]
    %v3375 = vld [vmem:[#allocation12 + $0x10] sm:$0xff]
    %v3376 = vld [vmem:[#allocation12 + $0x18] sm:$0xff]
    %v3377 = vld [vmem:[#allocation12 + $0x20] sm:$0xff]
    %v3378 = vld [vmem:[#allocation12 + $0x28] sm:$0xff]
    %v3379 = vld [vmem:[#allocation12 + $0x30] sm:$0xff]
    %v3380 = vld [vmem:[#allocation12 + $0x38] sm:$0xff]
    %v3381 = vld [vmem:[#allocation12 + $0x40] sm:$0xff]
    %v3382 = vld [vmem:[#allocation12 + $0x48] sm:$0xff]
    %v3383 = vld [vmem:[#allocation12 + $0x50] sm:$0xff]
    %v3384 = vld [vmem:[#allocation12 + $0x58] sm:$0xff]
    %v3385 = vld [vmem:[#allocation12 + $0x60] sm:$0xff]
    %v3386 = vld [vmem:[#allocation12 + $0x68] sm:$0xff]
    %v3387 = vld [vmem:[#allocation12 + $0x70] sm:$0xff]
    %v3388 = vld [vmem:[#allocation12 + $0x78] sm:$0xff]
    %v3389 = vld [vmem:[%s13] sm:$0x1]
    %v3391 = vlaneseq
    %v3392 = vshrl.u32 %v3391, 7
    %v3393 = vsub.s32 0, %v3392
    %v3394 = vrot.slane %v3389, %v3393
    %3396 = vmatprep.subr.mxu0 0.0
    %3397 = vmatpush1.msra.mxu0 %v3373
    %3398 = vmatprep.subr.mxu0 0.0
    %3399 = vmatpush1.msra.mxu0 %v3374
    %3400 = vmatprep.subr.mxu0 0.0
    %3401 = vmatpush1.msra.mxu0 %v3375
    %3402 = vmatprep.subr.mxu0 0.0
    %3403 = vmatpush1.msra.mxu0 %v3376
    %3404 = vmatprep.subr.mxu0 0.0
    %3405 = vmatpush1.msra.mxu0 %v3377
    %3406 = vmatprep.subr.mxu0 0.0
    %3407 = vmatpush1.msra.mxu0 %v3378
    %3408 = vmatprep.subr.mxu0 0.0
    %3409 = vmatpush1.msra.mxu0 %v3379
    %3410 = vmatprep.subr.mxu0 0.0
    %3411 = vmatpush1.msra.mxu0 %v3380
    %3412 = vmatprep.subr.mxu0 0.0
    %3413 = vmatpush1.msra.mxu0 %v3381
    %3414 = vmatprep.subr.mxu0 0.0
    %3415 = vmatpush1.msra.mxu0 %v3382
    %3416 = vmatprep.subr.mxu0 0.0
    %3417 = vmatpush1.msra.mxu0 %v3383
    %3418 = vmatprep.subr.mxu0 0.0
    %3419 = vmatpush1.msra.mxu0 %v3384
    %3420 = vmatprep.subr.mxu0 0.0
    %3421 = vmatpush1.msra.mxu0 %v3385
    %3422 = vmatprep.subr.mxu0 0.0
    %3423 = vmatpush1.msra.mxu0 %v3386
    %3424 = vmatprep.subr.mxu0 0.0
    %3425 = vmatpush1.msra.mxu0 %v3387
    %3426 = vmatprep.subr.mxu0 0.0
    %3427 = vmatpush1.msra.mxu0 %v3388
    %3428 = vmatprep.subr.mxu0 0.0
    %3429 = vmatpush1.msra.mxu0 0.0
    %3430 = vmatprep.subr.mxu0 0.0
    %3431 = vmatpush1.msra.mxu0 0.0
    %3432 = vmatprep.subr.mxu0 0.0
    %3433 = vmatpush1.msra.mxu0 0.0
    %3434 = vmatprep.subr.mxu0 0.0
    %3435 = vmatpush1.msra.mxu0 0.0
    %3436 = vmatprep.subr.mxu0 0.0
    %3437 = vmatpush1.msra.mxu0 0.0
    %3438 = vmatprep.subr.mxu0 0.0
    %3439 = vmatpush1.msra.mxu0 0.0
    %3440 = vmatprep.subr.mxu0 0.0
    %3441 = vmatpush1.msra.mxu0 0.0
    %3442 = vmatprep.subr.mxu0 0.0
    %3443 = vmatpush1.msra.mxu0 0.0
    %3444 = vmatprep.subr.mxu0 0.0
    %3445 = vmatpush1.msra.mxu0 0.0
    %3446 = vmatprep.subr.mxu0 0.0
    %3447 = vmatpush1.msra.mxu0 0.0
    %3448 = vmatprep.subr.mxu0 0.0
    %3449 = vmatpush1.msra.mxu0 0.0
    %3450 = vmatprep.subr.mxu0 0.0
    %3451 = vmatpush1.msra.mxu0 0.0
    %3452 = vmatprep.subr.mxu0 0.0
    %3453 = vmatpush1.msra.mxu0 0.0
    %3454 = vmatprep.subr.mxu0 0.0
    %3455 = vmatpush1.msra.mxu0 0.0
    %3456 = vmatprep.subr.mxu0 0.0
    %3457 = vmatpush1.msra.mxu0 0.0
    %3458 = vmatprep.subr.mxu0 0.0
    %3459 = vmatpush1.msra.mxu0 0.0
    %3460 = vmatprep.mubr.f32.mxu0 0.0
    %3461 = vmatmul.mubr.f32.gmra.mrb[0].mxu0 %v1203
    %v3462 = vpop.f32.mrb[0].mxu0
    %v3463 = vadd.f32 %v3394, %v3462
    %v3464 = vpop.f32.mrb[0].mxu0
    %3465 = vmatprep.mubr.f32.mxu0 0.0
    %3466 = vmatmul.mubr.f32.gmra.mrb[0].mxu0 %v1669
    %v3467 = vpop.f32.mrb[0].mxu0
    %v3468 = vadd.f32 %v3394, %v3467
    %v3469 = vpop.f32.mrb[0].mxu0
    %3470 = vmatprep.mubr.f32.mxu0 0.0
    %3471 = vmatmul.mubr.f32.gmra.mrb[0].mxu0 %v2135
    %v3472 = vpop.f32.mrb[0].mxu0
    %v3473 = vadd.f32 %v3394, %v3472
    %v3474 = vpop.f32.mrb[0].mxu0
    %3475 = vmatprep.mubr.f32.mxu0 0.0
    %3476 = vmatmul.mubr.f32.gmra.mrb[0].mxu0 %v2601
    %v3477 = vpop.f32.mrb[0].mxu0
    %v3478 = vadd.f32 %v3394, %v3477
    %v3479 = vpop.f32.mrb[0].mxu0
    %3480 = vmatprep.mubr.f32.mxu0 0.0
    %3481 = vmatmul.mubr.f32.gmra.mrb[0].mxu0 %v3067
    %v3482 = vpop.f32.mrb[0].mxu0
    %v3483 = vadd.f32 %v3394, %v3482
    %v3484 = vpop.f32.mrb[0].mxu0
    %3485 = vmatprep.mubr.f32.mxu0 0.0
    %3486 = vmatmul.mubr.f32.gmra.mrb[0].mxu0 %v3369
    %v3487 = vpop.f32.mrb[0].mxu0
    %v3488 = vadd.f32 %v3394, %v3487
    %v3489 = vpop.f32.mrb[0].mxu0
    %3490 = vdwg.mxu0
    %3491 = vst [vmem:[#allocation14] sm:$0xff] %v3463
    %3492 = vst [vmem:[#allocation14 + $0x8] sm:$0xff] %v3468
    %3493 = vst [vmem:[#allocation14 + $0x10] sm:$0xff] %v3473
    %3494 = vst [vmem:[#allocation14 + $0x18] sm:$0xff] %v3478
    %3495 = vst [vmem:[#allocation14 + $0x20] sm:$0xff] %v3483
    %3496 = vst [vmem:[#allocation14 + $0x28] sm:$0xff] %v3488
    %3497 = vmax.xlane.f32.xlu0 %v3463
    %v3498 = vpop.xlane.xlu0 %3497
    %3499 = vmax.xlane.f32.xlu0 %v3468
    %v3500 = vpop.xlane.xlu0 %3499
    %3501 = vmax.xlane.f32.xlu0 %v3473
    %v3502 = vpop.xlane.xlu0 %3501
    %3503 = vmax.xlane.f32.xlu0 %v3478
    %v3504 = vpop.xlane.xlu0 %3503
    %3505 = vmax.xlane.f32.xlu0 %v3483
    %v3506 = vpop.xlane.xlu0 %3505
    %3507 = vmax.xlane.f32.xlu0 %v3488
    %v3508 = vpop.xlane.xlu0 %3507
    %v3509 = vsub.f32 %v3463, %v3498
    %v3510 = vsub.f32 %v3468, %v3500
    %v3511 = vsub.f32 %v3473, %v3502
    %v3512 = vsub.f32 %v3478, %v3504
    %v3513 = vsub.f32 %v3483, %v3506
    %v3514 = vsub.f32 %v3488, %v3508
    %v3515 = vmul.f32 %v3509, 1.442695
    %v3516 = vpow.pop %v3515
    %v3517 = vmul.f32 %v3510, 1.442695
    %v3518 = vpow.pop %v3517
    %v3519 = vmul.f32 %v3511, 1.442695
    %v3520 = vpow.pop %v3519
    %v3521 = vmul.f32 %v3512, 1.442695
    %v3522 = vpow.pop %v3521
    %v3523 = vmul.f32 %v3513, 1.442695
    %v3524 = vpow.pop %v3523
    %v3525 = vmul.f32 %v3514, 1.442695
    %v3526 = vpow.pop %v3525
    %3527 = vadd.xlane.f32.xlu0 %v3516
    %v3528 = vpop.xlane.xlu0 %3527
    %3529 = vadd.xlane.f32.xlu0 %v3518
    %v3530 = vpop.xlane.xlu0 %3529
    %3531 = vadd.xlane.f32.xlu0 %v3520
    %v3532 = vpop.xlane.xlu0 %3531
    %3533 = vadd.xlane.f32.xlu0 %v3522
    %v3534 = vpop.xlane.xlu0 %3533
    %3535 = vadd.xlane.f32.xlu0 %v3524
    %v3536 = vpop.xlane.xlu0 %3535
    %3537 = vadd.xlane.f32.xlu0 %v3526
    %v3538 = vpop.xlane.xlu0 %3537
    %v3539 = vrcp.pop %v3528
    %v3540 = vrcp.pop %v3530
    %v3541 = vrcp.pop %v3532
    %v3542 = vrcp.pop %v3534
    %v3543 = vrcp.pop %v3536
    %v3544 = vrcp.pop %v3538
    %v3545 = vmul.f32 %v3516, %v3539
    %v3546 = vmul.f32 %v3518, %v3540
    %v3547 = vmul.f32 %v3520, %v3541
    %v3548 = vmul.f32 %v3522, %v3542
    %v3549 = vmul.f32 %v3524, %v3543
    %v3550 = vmul.f32 %v3526, %v3544
    %3551 = vst [vmem:[#allocation17] sm:$0xff] %v3545
    %3552 = vst [vmem:[#allocation17 + $0x8] sm:$0xff] %v3546
    %3553 = vst [vmem:[#allocation17 + $0x10] sm:$0xff] %v3547
    %3554 = vst [vmem:[#allocation17 + $0x18] sm:$0xff] %v3548
    %3555 = vst [vmem:[#allocation17 + $0x20] sm:$0xff] %v3549
    %3556 = vst [vmem:[#allocation17 + $0x28] sm:$0xff] %v3550
    // Predicated region
    $region82: #{tpu_custom_call.1} parent=1 // pred_check
      _
    $region83: #{tpu_custom_call.1} parent=1 // pred_check_branch
      %3558 = sbr.rel (0) target = $region85
    $region84: #{tpu_custom_call.1} parent=1 // pred_region
      %s3560 = ssub.s32 768, 768
      %3561 = vsyncadd [#allocation5], %s3560
      %s3562 = sshll.u32 [#allocation14], 4
      %s3563 = int_to_ptr.vmem [resolvable:$true] %s3562
      %3568 = dma.vmem_to_hbm [thread:$0]  %s3563, 768, %s14, [#allocation5], 128, 128, 8
    $region85: #{tpu_custom_call.1} parent=1 // pred_fallthru
      _
    // Predicated region
    $region86: #{tpu_custom_call.1} parent=1 // pred_check
      _
    $region87: #{tpu_custom_call.1} parent=1 // pred_check_branch
      %3570 = sbr.rel (0) target = $region89
    $region88: #{tpu_custom_call.1} parent=1 // pred_region
      %s3572 = ssub.s32 256, 256
      %3573 = vsyncadd [#allocation16], %s3572
      %s3574 = sshll.u32 [#allocation15], 4
      %s3575 = int_to_ptr.vmem [resolvable:$true] %s3574
      %3580 = dma.vmem_to_hbm [thread:$0]  %s3575, 256, %s15, [#allocation16], 128, 128, 8
    $region89: #{tpu_custom_call.1} parent=1 // pred_fallthru
      _
    // Predicated region
    $region90: #{tpu_custom_call.1} parent=1 // pred_check
      _
    $region91: #{tpu_custom_call.1} parent=1 // pred_check_branch
      %3582 = sbr.rel (0) target = $region93
    $region92: #{tpu_custom_call.1} parent=1 // pred_region
      %s3584 = ssub.s32 768, 768
      %3585 = vsyncadd [#allocation16], %s3584
      %s3586 = sshll.u32 [#allocation17], 4
      %s3587 = int_to_ptr.vmem [resolvable:$true] %s3586
      %3592 = dma.vmem_to_hbm [thread:$0]  %s3587, 768, %s16, [#allocation16], 128, 128, 8
    $region93: #{tpu_custom_call.1} parent=1 // pred_fallthru
      _
    // Predicated region
    $region94: #{tpu_custom_call.1} parent=1 // pred_check
      _
    $region95: #{tpu_custom_call.1} parent=1 // pred_check_branch
      %3594 = sbr.rel (0) target = $region97
    $region96: #{tpu_custom_call.1} parent=1 // pred_region
      %3595 = dma.done [#allocation5], 768
    $region97: #{tpu_custom_call.1} parent=1 // pred_fallthru
      _
    // Predicated region
    $region98: #{tpu_custom_call.1} parent=1 // pred_check
      _
    $region99: #{tpu_custom_call.1} parent=1 // pred_check_branch
      %3597 = sbr.rel (0) target = $region101
    $region100: #{tpu_custom_call.1} parent=1 // pred_region
      %3598 = dma.done [#allocation16], 256
    $region101: #{tpu_custom_call.1} parent=1 // pred_fallthru
      _
    // Predicated region
    $region102: #{tpu_custom_call.1} parent=1 // pred_check
      _
    $region103: #{tpu_custom_call.1} parent=1 // pred_check_branch
      %3600 = sbr.rel (0) target = $region105
    $region104: #{tpu_custom_call.1} parent=1 // pred_region
      %3601 = dma.done [#allocation16], 768
    $region105: #{tpu_custom_call.1} parent=1 // pred_fallthru
      _
    %3602 = vsyncpa [#allocation4], 1
    %3603 = vsyncpa [#allocation7], 1
    %3604 = vsyncpa [#allocation10], 1
    %3605 = vsyncpa [#allocation13], 1
    %3606 = vsyncpa [#allocation5], 1
    %3607 = vsyncpa [#allocation16], 1

</llo_original>
